<compile_context>
chip_gen: v7x
topology: tpu7x:2x2x1
jax: 0.10.0
libtpu: 0.0.40
codegen_flags: <defaults>
</compile_context>

<pallas_src>
import functools
import math

import jax
import jax.numpy as jnp
from jax.experimental import pallas as pl
from jax.experimental.pallas import tpu as pltpu

_LOG2E = math.log2(math.e)


def _sdpa_flash_kernel(q_ref, k_ref, v_ref, mask_ref, o_ref,
                       q_scr, m_scr, acc_scr, *, scale, num_heads, head_dim):
    # q_ref:   (1, H, tq, D)    f32   (kv-invariant block)
    # k_ref:   (1, H, tk, D)    bf16
    # v_ref:   (1, H, tk, D+1)  bf16  (last column == 1.0 -> row-sum on the MXU)
    # mask_ref:(1, tq, tk)      f32   (broadcast over heads)
    # o_ref:   (1, tq, H*D)     lane-dense output slab
    # q_scr:   (H, tq, D)       bf16  scaled Q, hoisted out of the kv loop
    # m_scr:   (H, tq, 1)       f32   running max (log2 domain)
    # acc_scr: (H, tq, D+1)     f32   output accumulator; last column = denom
    H, D = num_heads, head_dim
    kv = pl.program_id(2)

    @pl.when(kv == 0)
    def _init():
        # Fold 1/sqrt(D) and log2(e) into Q once per (batch, q-tile).
        q_scr[...] = (q_ref[0].astype(jnp.float32)
                      * (scale * _LOG2E)).astype(jnp.bfloat16)
        m_scr[...] = jnp.full_like(m_scr, -jnp.inf)
        acc_scr[...] = jnp.zeros_like(acc_scr)

    q = q_scr[...]                        # (H, tq, D)   bf16
    k = k_ref[0]                          # (H, tk, D)   bf16
    v = v_ref[0]                          # (H, tk, D+1) bf16
    m = mask_ref[0].astype(jnp.float32)   # (tq, tk)

    # s[h,q,k] = (Q K^T) * log2e / sqrt(D) + mask * log2e   (log2 domain)
    s = jnp.einsum("hqd,hkd->hqk", q, k, preferred_element_type=jnp.float32)
    s = s + (m * _LOG2E)[None, :, :]

    m_prev = m_scr[...]                                       # (H, tq, 1)
    m_new = jnp.maximum(m_prev, jnp.max(s, axis=-1, keepdims=True))
    alpha = jnp.exp2(m_prev - m_new)
    p = jnp.exp2(s - m_new).astype(jnp.bfloat16)              # (H, tq, tk)

    # Augmented PV matmul: column D of v is all ones, so acc[..., D] carries the
    # running softmax denominator on the MXU instead of an XLU row-sum.
    pv = jnp.einsum("hqk,hke->hqe", p, v, preferred_element_type=jnp.float32)
    acc_scr[...] = alpha * acc_scr[...] + pv
    m_scr[...] = m_new

    @pl.when(kv == pl.num_programs(2) - 1)
    def _finalize():
        acc = acc_scr[...]                        # (H, tq, D+1)
        l = acc[:, :, D:D + 1]                    # (H, tq, 1) denominator
        inv = pl.reciprocal(l, approx=True)       # EUP slot (off the VALU path)
        inv = inv * (2.0 - l * inv)               # one Newton step -> ~f32 exact
        res = acc[:, :, :D] * inv                 # (H, tq, D)
        # Lane-dense (tq, H*D) slab: concat heads along the lane axis, one store.
        slab = jnp.concatenate(
            [res[h].astype(o_ref.dtype) for h in range(H)], axis=-1)
        o_ref[0] = slab


def _pick_tile(S, target, align):
    """Largest multiple of `align` that divides S and is <= target; else full S."""
    if S % align != 0:
        return S
    t = min(target, S)
    t -= t % align
    while t >= align:
        if S % t == 0:
            return t
        t -= align
    return S


def sdpa_pallas(q, k, v, mask, *, block_q=None, block_kv=None):
    """q, k, v: (B, H, S, D) f32; mask: (B, S, S) additive mask (broadcast over H)."""
    B, H, S, D = q.shape
    assert k.shape == (B, H, S, D) and v.shape == (B, H, S, D)
    assert mask.shape == (B, S, S)
    scale = 1.0 / math.sqrt(D)

    # bf16 MXU operands (f32 accumulation in-kernel); the ones column folds the
    # softmax row-sum into the PV matmul.
    k_b = k.astype(jnp.bfloat16)
    v_aug = jnp.concatenate(
        [v, jnp.ones((B, H, S, 1), dtype=v.dtype)], axis=-1).astype(jnp.bfloat16)
    Dv = D + 1

    # ---- generation-aware VMEM budget ---------------------------------------
    try:
        vmem_cap = int(pltpu.get_tpu_info().vmem_capacity_bytes)
    except Exception:
        vmem_cap = 64 * 1024 * 1024                      # conservative (v7x)
    budget = min(int(vmem_cap * 0.45), 56 * 1024 * 1024)      # working-set target
    limit_cap = min(int(vmem_cap * 0.75), 96 * 1024 * 1024)   # scoped-vmem ceiling

    tq = block_q if block_q is not None else _pick_tile(S, 256, 8)
    tk = block_kv if block_kv is not None else _pick_tile(S, 512, 128)
    assert S % tq == 0 and (tq % 8 == 0 or tq == S)
    assert S % tk == 0 and (tk % 128 == 0 or tk == S)

    def pad_lane(n):
        return ((n + 127) // 128) * 128

    def vmem_estimate(tq_, tk_):
        # double-buffered pipeline blocks
        blocks = (H * tq_ * D * 4            # Q tile (f32)
                  + H * tk_ * D * 2          # K tile (bf16)
                  + H * tk_ * Dv * 2         # V tile (bf16, +ones column)
                  + tq_ * tk_ * 4            # mask tile (f32)
                  + tq_ * H * D * 4)         # output tile (f32)
        scratch = (H * tq_ * D * 2                      # staged bf16 Q
                   + H * tq_ * pad_lane(1) * 4          # running max
                   + H * tq_ * pad_lane(Dv) * 4)        # accumulator (+denom)
        temps = 3 * H * tq_ * tk_ * 4 + H * tq_ * tk_ * 2   # s / p intermediates
        return 2 * blocks + scratch + temps

    # Shrink tiles until the working set fits the per-generation budget.
    while vmem_estimate(tq, tk) > budget:
        if tk >= 256 and S % (tk // 2) == 0 and (tk // 2) % 128 == 0:
            tk //= 2
        elif tq >= 16 and S % (tq // 2) == 0 and (tq // 2) % 8 == 0:
            tq //= 2
        else:
            break

    grid = (B, S // tq, S // tk)
    kernel = functools.partial(_sdpa_flash_kernel, scale=scale,
                               num_heads=H, head_dim=D)

    n_restream = S // tq   # K/V tiles are re-fetched once per q tile
    cost = pl.CostEstimate(
        flops=4 * B * H * S * S * D,                         # QK^T and PV matmuls
        transcendentals=B * H * S * S,                       # exp in softmax
        bytes_accessed=(4 * B * H * S * D                    # Q (f32, read once)
                        + 2 * n_restream * B * H * S * (D + Dv)   # K/V re-streams
                        + 4 * B * S * S                      # mask (f32, once)
                        + 4 * B * S * H * D),                # output (f32)
    )
    vmem_limit = int(min(max(2 * vmem_estimate(tq, tk), 32 * 1024 * 1024),
                         limit_cap))

    out = pl.pallas_call(
        kernel,
        out_shape=jax.ShapeDtypeStruct((B, S, H * D), q.dtype),
        grid_spec=pltpu.PrefetchScalarGridSpec(
            num_scalar_prefetch=0,
            grid=grid,
            in_specs=[
                pl.BlockSpec((1, H, tq, D), lambda b, qi, ki: (b, 0, qi, 0)),   # Q
                pl.BlockSpec((1, H, tk, D), lambda b, qi, ki: (b, 0, ki, 0)),   # K
                pl.BlockSpec((1, H, tk, Dv), lambda b, qi, ki: (b, 0, ki, 0)),  # V+1
                pl.BlockSpec((1, tq, tk), lambda b, qi, ki: (b, qi, ki)),       # mask
            ],
            out_specs=pl.BlockSpec((1, tq, H * D), lambda b, qi, ki: (b, qi, 0)),
            scratch_shapes=[
                pltpu.VMEM((H, tq, D), jnp.bfloat16),   # staged, scaled Q
                pltpu.VMEM((H, tq, 1), jnp.float32),    # running max (log2 domain)
                pltpu.VMEM((H, tq, Dv), jnp.float32),   # output acc + softmax denom
            ],
        ),
        compiler_params=pltpu.CompilerParams(
            dimension_semantics=("parallel", "parallel", "arbitrary"),
            vmem_limit_bytes=vmem_limit,
        ),
        cost_estimate=cost,
    )(q, k_b, v_aug, mask)

    # (B, S, H*D) lane-dense slab -> (B, H, S, D)
    return out.reshape(B, S, H, D).transpose(0, 2, 1, 3)


def sdpa_reference(q, k, v, mask):
    scale = 1.0 / math.sqrt(q.shape[-1])
    qk = jnp.einsum("bhqd,bhkd->bhqk", q, k) * scale
    qk = qk + mask[:, None, :, :]
    w = jax.nn.softmax(qk, axis=-1)
    return jnp.einsum("bhqk,bhkd->bhqd", w, v)


if __name__ == "__main__":
    # Small shapes consistent with the module's (B, H, S, D) attention pattern,
    # sized so the flash tiling exercises multiple Q and KV tiles (grid 2x2x2).
    B, H, S, D = 2, 4, 256, 32

    key = jax.random.PRNGKey(0)
    kq, kk, kvk, km = jax.random.split(key, 4)

    Q3 = jax.random.normal(kq, (B, H, S, D), dtype=jnp.float32)
    K = jax.random.normal(kk, (B, H, S, D), dtype=jnp.float32)
    V = jax.random.normal(kvk, (B, H, S, D), dtype=jnp.float32)
    # Additive mask, analogous to the module's global `mask` tensor (B, S, S).
    mask = jnp.where(jax.random.uniform(km, (B, S, S)) > 0.7, -1e9, 0.0
                     ).astype(jnp.float32)

    out = sdpa_pallas(Q3, K, V, mask, block_q=128, block_kv=128)
    jax.block_until_ready(out)

    ref = sdpa_reference(Q3, K, V, mask)
    # bf16 MXU operands -> relaxed tolerance vs the f32 reference.
    assert jnp.allclose(out, ref, atol=5e-2, rtol=5e-2), "mismatch vs reference"

    print("KERNEL_OK")
</pallas_src>

<mosaic_0001>
module attributes {stable_mosaic.version = 11 : i64} {
  func.func @_sdpa_flash_kernel(%arg0: i32, %arg1: i32, %arg2: i32, %arg3: memref<1x4x128x32xf32, #tpu.memory_space<vmem>>, %arg4: memref<1x4x128x32xbf16, #tpu.memory_space<vmem>>, %arg5: memref<1x4x128x33xbf16, #tpu.memory_space<vmem>>, %arg6: memref<1x128x128xf32, #tpu.memory_space<vmem>>, %arg7: memref<1x128x128xf32, #tpu.memory_space<vmem>>, %arg8: memref<4x128x32xbf16, #tpu.memory_space<vmem>>, %arg9: memref<4x128x1xf32, #tpu.memory_space<vmem>>, %arg10: memref<4x128x33xf32, #tpu.memory_space<vmem>>) attributes {dimension_semantics = [#tpu.dimension_semantics<parallel>, #tpu.dimension_semantics<parallel>, #tpu.dimension_semantics<arbitrary>], iteration_bounds = array<i64: 2, 2, 2>, scalar_prefetch = 0 : i64, scratch_operands = 3 : i64, tpu.core_type = #tpu.core_type<tc>, window_params = [{transform_indices = @transform_0, window_bounds = array<i64: 1, 4, 128, 32>}, {transform_indices = @transform_1, window_bounds = array<i64: 1, 4, 128, 32>}, {transform_indices = @transform_2, window_bounds = array<i64: 1, 4, 128, 33>}, {transform_indices = @transform_3, window_bounds = array<i64: 1, 128, 128>}, {transform_indices = @transform_4, window_bounds = array<i64: 1, 128, 128>}]} {
    %c0_i32 = arith.constant 0 : i32
    %0 = arith.cmpi eq, %arg2, %c0_i32 : i32
    %1 = arith.extui %0 : i1 to i32
    %c0_i32_0 = arith.constant 0 : i32
    %2 = arith.cmpi ne, %1, %c0_i32_0 : i32
    scf.if %2 {
      %c0_30 = arith.constant 0 : index
      %c0_31 = arith.constant 0 : index
      %c0_32 = arith.constant 0 : index
      %c0_33 = arith.constant 0 : index
      %36 = vector.load %arg3[%c0_30, %c0_31, %c0_32, %c0_33] : memref<1x4x128x32xf32, #tpu.memory_space<vmem>>, vector<1x4x128x32xf32>
      %37 = vector.shape_cast %36 : vector<1x4x128x32xf32> to vector<4x128x32xf32>
      %cst_34 = arith.constant 0.255034864 : f32
      %38 = vector.broadcast %cst_34 : f32 to vector<4x128x32xf32>
      %39 = arith.mulf %37, %38 : vector<4x128x32xf32>
      %40 = arith.truncf %39 : vector<4x128x32xf32> to vector<4x128x32xbf16>
      %c0_35 = arith.constant 0 : index
      %c0_36 = arith.constant 0 : index
      %c0_37 = arith.constant 0 : index
      %41 = vector.load %arg8[%c0_35, %c0_36, %c0_37] : memref<4x128x32xbf16, #tpu.memory_space<vmem>>, vector<4x128x32xbf16>
      tpu.vector_store %arg8[%c0_35, %c0_36, %c0_37], %40 {strides = array<i32>} : memref<4x128x32xbf16, #tpu.memory_space<vmem>>, vector<4x128x32xbf16>,
      %cst_38 = arith.constant 0xFF800000 : f32
      %42 = vector.broadcast %cst_38 : f32 to vector<4x128x1xf32>
      %c0_39 = arith.constant 0 : index
      %c0_40 = arith.constant 0 : index
      %c0_41 = arith.constant 0 : index
      %43 = vector.load %arg9[%c0_39, %c0_40, %c0_41] : memref<4x128x1xf32, #tpu.memory_space<vmem>>, vector<4x128x1xf32>
      tpu.vector_store %arg9[%c0_39, %c0_40, %c0_41], %42 {strides = array<i32>} : memref<4x128x1xf32, #tpu.memory_space<vmem>>, vector<4x128x1xf32>,
      %cst_42 = arith.constant 0.000000e+00 : f32
      %44 = vector.broadcast %cst_42 : f32 to vector<4x128x33xf32>
      %c0_43 = arith.constant 0 : index
      %c0_44 = arith.constant 0 : index
      %c0_45 = arith.constant 0 : index
      %45 = vector.load %arg10[%c0_43, %c0_44, %c0_45] : memref<4x128x33xf32, #tpu.memory_space<vmem>>, vector<4x128x33xf32>
      tpu.vector_store %arg10[%c0_43, %c0_44, %c0_45], %44 {strides = array<i32>} : memref<4x128x33xf32, #tpu.memory_space<vmem>>, vector<4x128x33xf32>,
    } else {
    }
    %c0 = arith.constant 0 : index
    %c0_1 = arith.constant 0 : index
    %c0_2 = arith.constant 0 : index
    %3 = vector.load %arg8[%c0, %c0_1, %c0_2] : memref<4x128x32xbf16, #tpu.memory_space<vmem>>, vector<4x128x32xbf16>
    %c0_3 = arith.constant 0 : index
    %c0_4 = arith.constant 0 : index
    %c0_5 = arith.constant 0 : index
    %c0_6 = arith.constant 0 : index
    %4 = vector.load %arg4[%c0_3, %c0_4, %c0_5, %c0_6] : memref<1x4x128x32xbf16, #tpu.memory_space<vmem>>, vector<1x4x128x32xbf16>
    %5 = vector.shape_cast %4 : vector<1x4x128x32xbf16> to vector<4x128x32xbf16>
    %c0_7 = arith.constant 0 : index
    %c0_8 = arith.constant 0 : index
    %c0_9 = arith.constant 0 : index
    %c0_10 = arith.constant 0 : index
    %6 = vector.load %arg5[%c0_7, %c0_8, %c0_9, %c0_10] : memref<1x4x128x33xbf16, #tpu.memory_space<vmem>>, vector<1x4x128x33xbf16>
    %7 = vector.shape_cast %6 : vector<1x4x128x33xbf16> to vector<4x128x33xbf16>
    %c0_11 = arith.constant 0 : index
    %c0_12 = arith.constant 0 : index
    %c0_13 = arith.constant 0 : index
    %8 = vector.load %arg6[%c0_11, %c0_12, %c0_13] : memref<1x128x128xf32, #tpu.memory_space<vmem>>, vector<1x128x128xf32>
    %9 = vector.shape_cast %8 : vector<1x128x128xf32> to vector<128x128xf32>
    "tpu.trace_start"() <{level = 10 : i32, message = "hqd,hkd->hqk"}> : () -> ()
    %cst = arith.constant dense<0.000000e+00> : vector<4x128x128xf32>
    %10 = tpu.matmul %3, %5, %cst {dimension_numbers = #tpu.dot_dimension_numbers<[2], [2], [1], [1], [0, 0, 0, 1, 1, 1], [0], [0]>} : vector<4x128x32xbf16>, vector<4x128x32xbf16>, vector<4x128x128xf32> -> vector<4x128x128xf32>
    "tpu.trace_stop"() : () -> ()
    %cst_14 = arith.constant 1.44269502 : f32
    %11 = vector.broadcast %cst_14 : f32 to vector<128x128xf32>
    %12 = arith.mulf %9, %11 : vector<128x128xf32>
    %13 = vector.shape_cast %12 : vector<128x128xf32> to vector<1x128x128xf32>
    %14 = vector.broadcast %13 : vector<1x128x128xf32> to vector<4x128x128xf32>
    %15 = arith.addf %10, %14 : vector<4x128x128xf32>
    %c0_15 = arith.constant 0 : index
    %c0_16 = arith.constant 0 : index
    %c0_17 = arith.constant 0 : index
    %16 = vector.load %arg9[%c0_15, %c0_16, %c0_17] : memref<4x128x1xf32, #tpu.memory_space<vmem>>, vector<4x128x1xf32>
    %cst_18 = arith.constant dense<0xFF800000> : vector<4x128xf32>
    %17 = vector.multi_reduction <maximumf>, %15, %cst_18 [2] : vector<4x128x128xf32> to vector<4x128xf32>
    %18 = vector.shape_cast %17 : vector<4x128xf32> to vector<4x128x1xf32>
    %19 = arith.maximumf %16, %18 : vector<4x128x1xf32>
    %20 = arith.subf %16, %19 : vector<4x128x1xf32>
    %21 = math.exp2 %20 : vector<4x128x1xf32>
    %22 = vector.broadcast %19 : vector<4x128x1xf32> to vector<4x128x128xf32>
    %23 = arith.subf %15, %22 : vector<4x128x128xf32>
    %24 = math.exp2 %23 : vector<4x128x128xf32>
    %25 = arith.truncf %24 : vector<4x128x128xf32> to vector<4x128x128xbf16>
    "tpu.trace_start"() <{level = 10 : i32, message = "hqk,hke->hqe"}> : () -> ()
    %cst_19 = arith.constant dense<0.000000e+00> : vector<4x128x33xf32>
    %26 = tpu.matmul %25, %7, %cst_19 {dimension_numbers = #tpu.dot_dimension_numbers<[2], [1], [1], [2], [0, 0, 0, 1, 1, 2], [0], [0]>} : vector<4x128x128xbf16>, vector<4x128x33xbf16>, vector<4x128x33xf32> -> vector<4x128x33xf32>
    "tpu.trace_stop"() : () -> ()
    %c0_20 = arith.constant 0 : index
    %c0_21 = arith.constant 0 : index
    %c0_22 = arith.constant 0 : index
    %27 = vector.load %arg10[%c0_20, %c0_21, %c0_22] : memref<4x128x33xf32, #tpu.memory_space<vmem>>, vector<4x128x33xf32>
    %28 = vector.broadcast %21 : vector<4x128x1xf32> to vector<4x128x33xf32>
    %29 = arith.mulf %28, %27 : vector<4x128x33xf32>
    %30 = arith.addf %29, %26 : vector<4x128x33xf32>
    %c0_23 = arith.constant 0 : index
    %c0_24 = arith.constant 0 : index
    %c0_25 = arith.constant 0 : index
    %31 = vector.load %arg10[%c0_23, %c0_24, %c0_25] : memref<4x128x33xf32, #tpu.memory_space<vmem>>, vector<4x128x33xf32>
    tpu.vector_store %arg10[%c0_23, %c0_24, %c0_25], %30 {strides = array<i32>} : memref<4x128x33xf32, #tpu.memory_space<vmem>>, vector<4x128x33xf32>,
    %c0_26 = arith.constant 0 : index
    %c0_27 = arith.constant 0 : index
    %c0_28 = arith.constant 0 : index
    %32 = vector.load %arg9[%c0_26, %c0_27, %c0_28] : memref<4x128x1xf32, #tpu.memory_space<vmem>>, vector<4x128x1xf32>
    tpu.vector_store %arg9[%c0_26, %c0_27, %c0_28], %19 {strides = array<i32>} : memref<4x128x1xf32, #tpu.memory_space<vmem>>, vector<4x128x1xf32>,
    %c1_i32 = arith.constant 1 : i32
    %33 = arith.cmpi eq, %arg2, %c1_i32 : i32
    %34 = arith.extui %33 : i1 to i32
    %c0_i32_29 = arith.constant 0 : i32
    %35 = arith.cmpi ne, %34, %c0_i32_29 : i32
    scf.if %35 {
      %c0_30 = arith.constant 0 : index
      %c0_31 = arith.constant 0 : index
      %c0_32 = arith.constant 0 : index
      %36 = vector.load %arg10[%c0_30, %c0_31, %c0_32] : memref<4x128x33xf32, #tpu.memory_space<vmem>>, vector<4x128x33xf32>
      %37 = vector.extract_strided_slice %36 {offsets = [0, 0, 32], sizes = [4, 128, 1], strides = [1, 1, 1]} : vector<4x128x33xf32> to vector<4x128x1xf32>
      %38 = tpu.reciprocal %37 {approx = true} : vector<4x128x1xf32> -> vector<4x128x1xf32>
      %39 = arith.mulf %37, %38 : vector<4x128x1xf32>
      %cst_33 = arith.constant 2.000000e+00 : f32
      %40 = vector.broadcast %cst_33 : f32 to vector<4x128x1xf32>
      %41 = arith.subf %40, %39 : vector<4x128x1xf32>
      %42 = arith.mulf %38, %41 : vector<4x128x1xf32>
      %43 = vector.extract_strided_slice %36 {offsets = [0, 0, 0], sizes = [4, 128, 32], strides = [1, 1, 1]} : vector<4x128x33xf32> to vector<4x128x32xf32>
      %44 = vector.broadcast %42 : vector<4x128x1xf32> to vector<4x128x32xf32>
      %45 = arith.mulf %43, %44 : vector<4x128x32xf32>
      %46 = vector.extract_strided_slice %45 {offsets = [0, 0, 0], sizes = [1, 128, 32], strides = [1, 1, 1]} : vector<4x128x32xf32> to vector<1x128x32xf32>
      %47 = vector.shape_cast %46 : vector<1x128x32xf32> to vector<128x32xf32>
      %48 = vector.extract_strided_slice %45 {offsets = [1, 0, 0], sizes = [1, 128, 32], strides = [1, 1, 1]} : vector<4x128x32xf32> to vector<1x128x32xf32>
      %49 = vector.shape_cast %48 : vector<1x128x32xf32> to vector<128x32xf32>
      %50 = vector.extract_strided_slice %45 {offsets = [2, 0, 0], sizes = [1, 128, 32], strides = [1, 1, 1]} : vector<4x128x32xf32> to vector<1x128x32xf32>
      %51 = vector.shape_cast %50 : vector<1x128x32xf32> to vector<128x32xf32>
      %52 = vector.extract_strided_slice %45 {offsets = [3, 0, 0], sizes = [1, 128, 32], strides = [1, 1, 1]} : vector<4x128x32xf32> to vector<1x128x32xf32>
      %53 = vector.shape_cast %52 : vector<1x128x32xf32> to vector<128x32xf32>
      %54 = tpu.concatenate %47, %49, %51, %53 in 1 : vector<128x32xf32>, vector<128x32xf32>, vector<128x32xf32>, vector<128x32xf32> -> vector<128x128xf32>
      %c0_34 = arith.constant 0 : index
      %c0_35 = arith.constant 0 : index
      %c0_36 = arith.constant 0 : index
      %55 = vector.load %arg7[%c0_34, %c0_35, %c0_36] : memref<1x128x128xf32, #tpu.memory_space<vmem>>, vector<1x128x128xf32>
      %56 = vector.shape_cast %55 : vector<1x128x128xf32> to vector<128x128xf32>
      %57 = vector.shape_cast %54 : vector<128x128xf32> to vector<1x128x128xf32>
      tpu.vector_store %arg7[%c0_34, %c0_35, %c0_36], %57 {strides = array<i32>} : memref<1x128x128xf32, #tpu.memory_space<vmem>>, vector<1x128x128xf32>,
    } else {
    }
    return
  }
  func.func @transform_0(%arg0: i32, %arg1: i32, %arg2: i32) -> (i32, i32, i32, i32) {
    %c0_i32 = arith.constant 0 : i32
    %c0_i32_0 = arith.constant 0 : i32
    %c0_i32_1 = arith.constant 0 : i32
    return %arg0, %c0_i32, %arg1, %c0_i32_0 : i32, i32, i32, i32
  }
  func.func @transform_1(%arg0: i32, %arg1: i32, %arg2: i32) -> (i32, i32, i32, i32) {
    %c0_i32 = arith.constant 0 : i32
    %c0_i32_0 = arith.constant 0 : i32
    %c0_i32_1 = arith.constant 0 : i32
    return %arg0, %c0_i32, %arg2, %c0_i32_0 : i32, i32, i32, i32
  }
  func.func @transform_2(%arg0: i32, %arg1: i32, %arg2: i32) -> (i32, i32, i32, i32) {
    %c0_i32 = arith.constant 0 : i32
    %c0_i32_0 = arith.constant 0 : i32
    %c0_i32_1 = arith.constant 0 : i32
    return %arg0, %c0_i32, %arg2, %c0_i32_0 : i32, i32, i32, i32
  }
  func.func @transform_3(%arg0: i32, %arg1: i32, %arg2: i32) -> (i32, i32, i32) {
    %c0_i32 = arith.constant 0 : i32
    return %arg0, %arg1, %arg2 : i32, i32, i32
  }
  func.func @transform_4(%arg0: i32, %arg1: i32, %arg2: i32) -> (i32, i32, i32) {
    %c0_i32 = arith.constant 0 : i32
    %c0_i32_0 = arith.constant 0 : i32
    return %arg0, %arg1, %c0_i32 : i32, i32, i32
  }
}

</mosaic_0001>

<llo_original>
// kernel: tpu_custom_call.1
$region0: #{tpu_custom_call.1}
  #allocation0 [shape = 'u32[]', space=smem, size = 0x4, offset = 0x4, fixed_abs, tag = 'smem constant byte address 0x4 - core index']
  #allocation1 [shape = 'u32[144,128]{1,0:T(1,128)}', space=vmem, size = 0x12000, scoped, tag = 'internal scratch']
  #allocation2 [shape = 'bf16[4,128,32]{2,1,0:T(16,128)(2,1)}', space=vmem, size = 0x20000, scoped, tag = 'scratch operand']
  #allocation3 [shape = 'f32[4,128,1]{2,1,0:T(8,128)}', space=vmem, size = 0x40000, scoped, tag = 'scratch operand']
  #allocation4 [shape = 'f32[4,128,33]{2,1,0:T(8,128)}', space=vmem, size = 0x40000, scoped, tag = 'scratch operand']
  %s0 = inlined_call_operand.vmem [shape: f32[2,4,256,32], index: 0, kind: input, shape index: {}]
  %s1 = inlined_call_operand.vmem [shape: bf16[2,4,256,32], index: 1, kind: input, shape index: {}]
  %s2 = inlined_call_operand.vmem [shape: bf16[2,4,256,33], index: 2, kind: input, shape index: {}]
  %s3 = inlined_call_operand.vmem [shape: f32[2,256,256], index: 3, kind: input, shape index: {}]
  %s4 = inlined_call_operand.hbm [shape: f32[2,256,128], index: 4, kind: output, shape index: {}]
  %s5 = sld [smem:[#allocation0]]
  $region215: #{tpu_custom_call.1} parent=0
    _
  %s7 = ssub.s32 1, %s5
  %s8 = scalar_select 0, %s7, %s5
  $region1: #{tpu_custom_call.1} parent=0
    #allocation5 [shape = 'u8[524288]{0}', space=vmem, size = 0x80000, scoped, tag = 'input window, operand 0']
    #allocation6 [shape = 'u8[262144]{0}', space=vmem, size = 0x40000, scoped, tag = 'input window, operand 1']
    #allocation7 [shape = 'u8[262144]{0}', space=vmem, size = 0x40000, scoped, tag = 'input window, operand 2']
    #allocation8 [shape = 'u8[131072]{0}', space=vmem, size = 0x20000, scoped, tag = 'input window, operand 3']
    #allocation9 [shape = 'u8[131072]{0}', space=vmem, size = 0x20000, scoped, tag = 'output window, operand 0']
    #allocation10 [shape = 's32[2]{0}', space=sflag, size = 0x8, scoped, tag = 'scoped memory for tpu_custom_call.1']
    %9 = vsyncpa [#allocation10], 0
    %s10 = scalar_lea.sflag [#allocation10], 1
    %11 = vsyncpa %s10, 0
    loop: start=0, step=1, limit=10
    $region2: #{tpu_custom_call.1} parent=1 // loop_pre_header
      _
    $region3: #{tpu_custom_call.1} parent=1 // loop_header
      %s13 = sphi 0, %s17
      %p14 = scmp.ge.s32.totalorder %s13, 10
      %s20 = sphi 0, %s39
      %s21 = sphi 0, %s35
      %s22 = sphi 0, %s31
      %s23 = sphi 0, %s20
      %s24 = sphi 0, %s21
      %s25 = sphi 0, %s22
      %s26 = sphi 0, %s23
      %s27 = sphi 0, %s24
      %s28 = sphi 0, %s25
      %s44 = sphi 0, %s46
      %s47 = sphi 0, %s44
      %s48 = sphi 0, %s47
      %s64 = sphi 0, %s48
      %s72 = sphi 0, %s74
      %s75 = sphi 0, %s72
      %s76 = sphi 0, %s75
      %s92 = sphi 0, %s76
      %s100 = sphi 0, %s102
      %s103 = sphi 0, %s100
      %s104 = sphi 0, %s103
      %s120 = sphi 0, %s104
      %s130 = sphi 0, %s132
      %s133 = sphi 0, %s130
      %s134 = sphi 0, %s133
      %s150 = sphi 0, %s134
      %s158 = sphi 0, %s160
      %s161 = sphi 0, %s158
      %s162 = sphi 0, %s161
      %s178 = sphi 0, %s162
    $region4: #{tpu_custom_call.1} parent=1 // loop_header_branch
      %16 = sbr.rel (%p14) target = $region8
    $region5: #{tpu_custom_call.1} parent=1 // loop_body
      %s18 = ssub.s32 %s13, 1
      %s19 = ssub.s32 %s13, 2
      %s29 = sadd.s32 1, %s22
      %p30 = scmp.ge.s32.totalorder %s29, 2
      %s31 = scalar_select %p30, 0, %s29
      %s32 = sadd.s32 1, %s21
      %s33 = scalar_select %p30, %s32, %s21
      %p34 = scmp.ge.s32.totalorder %s33, 2
      %s35 = scalar_select %p34, 0, %s33
      %s36 = sadd.s32 1, %s20
      %s37 = scalar_select %p34, %s36, %s20
      %p38 = scmp.ge.s32.totalorder %s37, 2
      %s39 = scalar_select %p38, 0, %s37
      %s40 = ssub.s32 %s20, %s39
      %s41 = ssub.s32 %s21, %s35
      %s42 = sor.u32 %s40, %s41
      %p43 = scmp.eq.s32.totalorder %s42, 0
      %s45 = sadd.s32 %s44, 1
      %s46 = scalar_select %p43, %s44, %s45
      %p49 = pneg %p43
      %p50 = scmp.eq.s32.totalorder %s13, 7
      %p51 = por %p49, %p50
      %p52 = scmp.ne.s32.totalorder %s44, %s47
      %p53 = scmp.eq.s32.totalorder %s13, 0
      %p54 = por %p52, %p53
      %p55 = scmp.ne.s32.totalorder %s44, %s47
      %p56 = scmp.eq.s32.totalorder %s18, 7
      %p57 = por %p55, %p56
      %p58 = scmp.ne.s32.totalorder %s47, %s48
      %p59 = scmp.eq.s32.totalorder %s18, 0
      %p60 = por %p58, %p59
      %p61 = scmp.ne.s32.totalorder %s47, %s48
      %p62 = scmp.eq.s32.totalorder %s19, 7
      %p63 = por %p61, %p62
      %p65 = scmp.ne.s32.totalorder %s48, %s64
      %p66 = scmp.eq.s32.totalorder %s19, 0
      %p67 = por %p65, %p66
      %s68 = ssub.s32 %s20, %s39
      %s69 = ssub.s32 %s22, %s31
      %s70 = sor.u32 %s68, %s69
      %p71 = scmp.eq.s32.totalorder %s70, 0
      %s73 = sadd.s32 %s72, 1
      %s74 = scalar_select %p71, %s72, %s73
      %p77 = pneg %p71
      %p78 = scmp.eq.s32.totalorder %s13, 7
      %p79 = por %p77, %p78
      %p80 = scmp.ne.s32.totalorder %s72, %s75
      %p81 = scmp.eq.s32.totalorder %s13, 0
      %p82 = por %p80, %p81
      %p83 = scmp.ne.s32.totalorder %s72, %s75
      %p84 = scmp.eq.s32.totalorder %s18, 7
      %p85 = por %p83, %p84
      %p86 = scmp.ne.s32.totalorder %s75, %s76
      %p87 = scmp.eq.s32.totalorder %s18, 0
      %p88 = por %p86, %p87
      %p89 = scmp.ne.s32.totalorder %s75, %s76
      %p90 = scmp.eq.s32.totalorder %s19, 7
      %p91 = por %p89, %p90
      %p93 = scmp.ne.s32.totalorder %s76, %s92
      %p94 = scmp.eq.s32.totalorder %s19, 0
      %p95 = por %p93, %p94
      %s96 = ssub.s32 %s20, %s39
      %s97 = ssub.s32 %s22, %s31
      %s98 = sor.u32 %s96, %s97
      %p99 = scmp.eq.s32.totalorder %s98, 0
      %s101 = sadd.s32 %s100, 1
      %s102 = scalar_select %p99, %s100, %s101
      %p105 = pneg %p99
      %p106 = scmp.eq.s32.totalorder %s13, 7
      %p107 = por %p105, %p106
      %p108 = scmp.ne.s32.totalorder %s100, %s103
      %p109 = scmp.eq.s32.totalorder %s13, 0
      %p110 = por %p108, %p109
      %p111 = scmp.ne.s32.totalorder %s100, %s103
      %p112 = scmp.eq.s32.totalorder %s18, 7
      %p113 = por %p111, %p112
      %p114 = scmp.ne.s32.totalorder %s103, %s104
      %p115 = scmp.eq.s32.totalorder %s18, 0
      %p116 = por %p114, %p115
      %p117 = scmp.ne.s32.totalorder %s103, %s104
      %p118 = scmp.eq.s32.totalorder %s19, 7
      %p119 = por %p117, %p118
      %p121 = scmp.ne.s32.totalorder %s104, %s120
      %p122 = scmp.eq.s32.totalorder %s19, 0
      %p123 = por %p121, %p122
      %s124 = ssub.s32 %s20, %s39
      %s125 = ssub.s32 %s21, %s35
      %s126 = sor.u32 %s124, %s125
      %s127 = ssub.s32 %s22, %s31
      %s128 = sor.u32 %s126, %s127
      %p129 = scmp.eq.s32.totalorder %s128, 0
      %s131 = sadd.s32 %s130, 1
      %s132 = scalar_select %p129, %s130, %s131
      %p135 = pneg %p129
      %p136 = scmp.eq.s32.totalorder %s13, 7
      %p137 = por %p135, %p136
      %p138 = scmp.ne.s32.totalorder %s130, %s133
      %p139 = scmp.eq.s32.totalorder %s13, 0
      %p140 = por %p138, %p139
      %p141 = scmp.ne.s32.totalorder %s130, %s133
      %p142 = scmp.eq.s32.totalorder %s18, 7
      %p143 = por %p141, %p142
      %p144 = scmp.ne.s32.totalorder %s133, %s134
      %p145 = scmp.eq.s32.totalorder %s18, 0
      %p146 = por %p144, %p145
      %p147 = scmp.ne.s32.totalorder %s133, %s134
      %p148 = scmp.eq.s32.totalorder %s19, 7
      %p149 = por %p147, %p148
      %p151 = scmp.ne.s32.totalorder %s134, %s150
      %p152 = scmp.eq.s32.totalorder %s19, 0
      %p153 = por %p151, %p152
      %s154 = ssub.s32 %s20, %s39
      %s155 = ssub.s32 %s21, %s35
      %s156 = sor.u32 %s154, %s155
      %p157 = scmp.eq.s32.totalorder %s156, 0
      %s159 = sadd.s32 %s158, 1
      %s160 = scalar_select %p157, %s158, %s159
      %p163 = pneg %p157
      %p164 = scmp.eq.s32.totalorder %s13, 7
      %p165 = por %p163, %p164
      %p166 = scmp.ne.s32.totalorder %s158, %s161
      %p167 = scmp.eq.s32.totalorder %s13, 0
      %p168 = por %p166, %p167
      %p169 = scmp.ne.s32.totalorder %s158, %s161
      %p170 = scmp.eq.s32.totalorder %s18, 7
      %p171 = por %p169, %p170
      %p172 = scmp.ne.s32.totalorder %s161, %s162
      %p173 = scmp.eq.s32.totalorder %s18, 0
      %p174 = por %p172, %p173
      %p175 = scmp.ne.s32.totalorder %s161, %s162
      %p176 = scmp.eq.s32.totalorder %s19, 7
      %p177 = por %p175, %p176
      %p179 = scmp.ne.s32.totalorder %s162, %s178
      %p180 = scmp.eq.s32.totalorder %s19, 0
      %p181 = por %p179, %p180
      %p182 = scmp.le.s32.totalorder 1, %s13
      %p183 = scmp.lt.s32.totalorder %s13, 9
      %p184 = pnand %p182, %p183
      %p185 = pneg %p184
      // Predicated region
      $region9: #{tpu_custom_call.1} parent=5 // pred_check
        _
      $region10: #{tpu_custom_call.1} parent=5 // pred_check_branch
        %187 = sbr.rel (%p184) target = $region12
      $region11: #{tpu_custom_call.1} parent=5 // pred_region
        %s188 = ssub.s32 %s13, 1
      $region12: #{tpu_custom_call.1} parent=5 // pred_fallthru
        _
      %p189 = scmp.lt.s32.totalorder %s13, 8
      // Predicated region
      $region13: #{tpu_custom_call.1} parent=5 // pred_check
        %p190 = pneg %p189
      $region14: #{tpu_custom_call.1} parent=5 // pred_check_branch
        %192 = sbr.rel (%p190) target = $region16
      $region15: #{tpu_custom_call.1} parent=5 // pred_region
        // Predicated region
        $region17: #{tpu_custom_call.1} parent=15 // pred_check
          %p193 = pneg %p54
        $region18: #{tpu_custom_call.1} parent=15 // pred_check_branch
          %195 = sbr.rel (%p193) target = $region20
        $region19: #{tpu_custom_call.1} parent=15 // pred_region
          %s196 = sand.u32 %s44, 1
          %s197 = sand.u32 %s44, 1
          %s198 = smul.addr %s197, 512
          %s199 = scalar_lea.vmem [#allocation5], %s198
          %s200 = smul.u32 16, %s21
          %s201 = smul.addr %s20, 128
          %s202 = sadd.s32 %s200, %s201
          %s203 = smul.addr %s202, 8
          %s204 = scalar_lea.vmem %s0, %s203
          // Predicated region
          $region21: #{tpu_custom_call.1} parent=19 // pred_check
            _
          $region22: #{tpu_custom_call.1} parent=19 // pred_check_branch
            %206 = sbr.rel (0) target = $region24
          $region23: #{tpu_custom_call.1} parent=19 // pred_region
            // Predicated region
            $region25: #{tpu_custom_call.1} parent=23 // pred_check
              _
            $region26: #{tpu_custom_call.1} parent=23 // pred_check_branch
              %208 = sbr.rel (0) target = $region28
            $region27: #{tpu_custom_call.1} parent=23 // pred_region
              // Predicated region
              $region40: #{tpu_custom_call.1} parent=27 // pred_check
                _
              $region41: #{tpu_custom_call.1} parent=27 // pred_check_branch
                %349 = sbr.rel (0) target = $region43
              $region42: #{tpu_custom_call.1} parent=27 // pred_region
                loop: start=0, step=1, limit=1
                $region44: #{tpu_custom_call.1} parent=42 // loop_pre_header
                  _
                $region45: #{tpu_custom_call.1} parent=42 // loop_header
                  %s351 = sphi 0, %s355
                  %p352 = scmp.ge.s32.totalorder %s351, 1
                  %s356 = sphi %s204, %s204
                  %s357 = sphi %s199, %s199
                $region46: #{tpu_custom_call.1} parent=42 // loop_header_branch
                  %354 = sbr.rel (%p352) target = $region50
                $region47: #{tpu_custom_call.1} parent=42 // loop_body
                  %v358 = vld [vmem:[%s356] sm:$0xff]
                  %359 = vst [vmem:[%s357] sm:$0xff] %v358
                  %v360 = vld [vmem:[%s356 + $0x8] sm:$0xff]
                  %361 = vst [vmem:[%s357 + $0x8] sm:$0xff] %v360
                  %v362 = vld [vmem:[%s356 + $0x10] sm:$0xff]
                  %363 = vst [vmem:[%s357 + $0x10] sm:$0xff] %v362
                  %v364 = vld [vmem:[%s356 + $0x18] sm:$0xff]
                  %365 = vst [vmem:[%s357 + $0x18] sm:$0xff] %v364
                  %v366 = vld [vmem:[%s356 + $0x20] sm:$0xff]
                  %367 = vst [vmem:[%s357 + $0x20] sm:$0xff] %v366
                  %v368 = vld [vmem:[%s356 + $0x28] sm:$0xff]
                  %369 = vst [vmem:[%s357 + $0x28] sm:$0xff] %v368
                  %v370 = vld [vmem:[%s356 + $0x30] sm:$0xff]
                  %371 = vst [vmem:[%s357 + $0x30] sm:$0xff] %v370
                  %v372 = vld [vmem:[%s356 + $0x38] sm:$0xff]
                  %373 = vst [vmem:[%s357 + $0x38] sm:$0xff] %v372
                  %v374 = vld [vmem:[%s356 + $0x40] sm:$0xff]
                  %375 = vst [vmem:[%s357 + $0x40] sm:$0xff] %v374
                  %v376 = vld [vmem:[%s356 + $0x48] sm:$0xff]
                  %377 = vst [vmem:[%s357 + $0x48] sm:$0xff] %v376
                  %v378 = vld [vmem:[%s356 + $0x50] sm:$0xff]
                  %379 = vst [vmem:[%s357 + $0x50] sm:$0xff] %v378
                  %v380 = vld [vmem:[%s356 + $0x58] sm:$0xff]
                  %381 = vst [vmem:[%s357 + $0x58] sm:$0xff] %v380
                  %v382 = vld [vmem:[%s356 + $0x60] sm:$0xff]
                  %383 = vst [vmem:[%s357 + $0x60] sm:$0xff] %v382
                  %v384 = vld [vmem:[%s356 + $0x68] sm:$0xff]
                  %385 = vst [vmem:[%s357 + $0x68] sm:$0xff] %v384
                  %v386 = vld [vmem:[%s356 + $0x70] sm:$0xff]
                  %387 = vst [vmem:[%s357 + $0x70] sm:$0xff] %v386
                  %v388 = vld [vmem:[%s356 + $0x78] sm:$0xff]
                  %389 = vst [vmem:[%s357 + $0x78] sm:$0xff] %v388
                  %v390 = vld [vmem:[%s356 + $0x100] sm:$0xff]
                  %391 = vst [vmem:[%s357 + $0x80] sm:$0xff] %v390
                  %v392 = vld [vmem:[%s356 + $0x108] sm:$0xff]
                  %393 = vst [vmem:[%s357 + $0x88] sm:$0xff] %v392
                  %v394 = vld [vmem:[%s356 + $0x110] sm:$0xff]
                  %395 = vst [vmem:[%s357 + $0x90] sm:$0xff] %v394
                  %v396 = vld [vmem:[%s356 + $0x118] sm:$0xff]
                  %397 = vst [vmem:[%s357 + $0x98] sm:$0xff] %v396
                  %v398 = vld [vmem:[%s356 + $0x120] sm:$0xff]
                  %399 = vst [vmem:[%s357 + $0xa0] sm:$0xff] %v398
                  %v400 = vld [vmem:[%s356 + $0x128] sm:$0xff]
                  %401 = vst [vmem:[%s357 + $0xa8] sm:$0xff] %v400
                  %v402 = vld [vmem:[%s356 + $0x130] sm:$0xff]
                  %403 = vst [vmem:[%s357 + $0xb0] sm:$0xff] %v402
                  %v404 = vld [vmem:[%s356 + $0x138] sm:$0xff]
                  %405 = vst [vmem:[%s357 + $0xb8] sm:$0xff] %v404
                  %v406 = vld [vmem:[%s356 + $0x140] sm:$0xff]
                  %407 = vst [vmem:[%s357 + $0xc0] sm:$0xff] %v406
                  %v408 = vld [vmem:[%s356 + $0x148] sm:$0xff]
                  %409 = vst [vmem:[%s357 + $0xc8] sm:$0xff] %v408
                  %v410 = vld [vmem:[%s356 + $0x150] sm:$0xff]
                  %411 = vst [vmem:[%s357 + $0xd0] sm:$0xff] %v410
                  %v412 = vld [vmem:[%s356 + $0x158] sm:$0xff]
                  %413 = vst [vmem:[%s357 + $0xd8] sm:$0xff] %v412
                  %v414 = vld [vmem:[%s356 + $0x160] sm:$0xff]
                  %415 = vst [vmem:[%s357 + $0xe0] sm:$0xff] %v414
                  %v416 = vld [vmem:[%s356 + $0x168] sm:$0xff]
                  %417 = vst [vmem:[%s357 + $0xe8] sm:$0xff] %v416
                  %v418 = vld [vmem:[%s356 + $0x170] sm:$0xff]
                  %419 = vst [vmem:[%s357 + $0xf0] sm:$0xff] %v418
                  %v420 = vld [vmem:[%s356 + $0x178] sm:$0xff]
                  %421 = vst [vmem:[%s357 + $0xf8] sm:$0xff] %v420
                  %v422 = vld [vmem:[%s356 + $0x200] sm:$0xff]
                  %423 = vst [vmem:[%s357 + $0x100] sm:$0xff] %v422
                  %v424 = vld [vmem:[%s356 + $0x208] sm:$0xff]
                  %425 = vst [vmem:[%s357 + $0x108] sm:$0xff] %v424
                  %v426 = vld [vmem:[%s356 + $0x210] sm:$0xff]
                  %427 = vst [vmem:[%s357 + $0x110] sm:$0xff] %v426
                  %v428 = vld [vmem:[%s356 + $0x218] sm:$0xff]
                  %429 = vst [vmem:[%s357 + $0x118] sm:$0xff] %v428
                  %v430 = vld [vmem:[%s356 + $0x220] sm:$0xff]
                  %431 = vst [vmem:[%s357 + $0x120] sm:$0xff] %v430
                  %v432 = vld [vmem:[%s356 + $0x228] sm:$0xff]
                  %433 = vst [vmem:[%s357 + $0x128] sm:$0xff] %v432
                  %v434 = vld [vmem:[%s356 + $0x230] sm:$0xff]
                  %435 = vst [vmem:[%s357 + $0x130] sm:$0xff] %v434
                  %v436 = vld [vmem:[%s356 + $0x238] sm:$0xff]
                  %437 = vst [vmem:[%s357 + $0x138] sm:$0xff] %v436
                  %v438 = vld [vmem:[%s356 + $0x240] sm:$0xff]
                  %439 = vst [vmem:[%s357 + $0x140] sm:$0xff] %v438
                  %v440 = vld [vmem:[%s356 + $0x248] sm:$0xff]
                  %441 = vst [vmem:[%s357 + $0x148] sm:$0xff] %v440
                  %v442 = vld [vmem:[%s356 + $0x250] sm:$0xff]
                  %443 = vst [vmem:[%s357 + $0x150] sm:$0xff] %v442
                  %v444 = vld [vmem:[%s356 + $0x258] sm:$0xff]
                  %445 = vst [vmem:[%s357 + $0x158] sm:$0xff] %v444
                  %v446 = vld [vmem:[%s356 + $0x260] sm:$0xff]
                  %447 = vst [vmem:[%s357 + $0x160] sm:$0xff] %v446
                  %v448 = vld [vmem:[%s356 + $0x268] sm:$0xff]
                  %449 = vst [vmem:[%s357 + $0x168] sm:$0xff] %v448
                  %v450 = vld [vmem:[%s356 + $0x270] sm:$0xff]
                  %451 = vst [vmem:[%s357 + $0x170] sm:$0xff] %v450
                  %v452 = vld [vmem:[%s356 + $0x278] sm:$0xff]
                  %453 = vst [vmem:[%s357 + $0x178] sm:$0xff] %v452
                  %v454 = vld [vmem:[%s356 + $0x300] sm:$0xff]
                  %455 = vst [vmem:[%s357 + $0x180] sm:$0xff] %v454
                  %v456 = vld [vmem:[%s356 + $0x308] sm:$0xff]
                  %457 = vst [vmem:[%s357 + $0x188] sm:$0xff] %v456
                  %v458 = vld [vmem:[%s356 + $0x310] sm:$0xff]
                  %459 = vst [vmem:[%s357 + $0x190] sm:$0xff] %v458
                  %v460 = vld [vmem:[%s356 + $0x318] sm:$0xff]
                  %461 = vst [vmem:[%s357 + $0x198] sm:$0xff] %v460
                  %v462 = vld [vmem:[%s356 + $0x320] sm:$0xff]
                  %463 = vst [vmem:[%s357 + $0x1a0] sm:$0xff] %v462
                  %v464 = vld [vmem:[%s356 + $0x328] sm:$0xff]
                  %465 = vst [vmem:[%s357 + $0x1a8] sm:$0xff] %v464
                  %v466 = vld [vmem:[%s356 + $0x330] sm:$0xff]
                  %467 = vst [vmem:[%s357 + $0x1b0] sm:$0xff] %v466
                  %v468 = vld [vmem:[%s356 + $0x338] sm:$0xff]
                  %469 = vst [vmem:[%s357 + $0x1b8] sm:$0xff] %v468
                  %v470 = vld [vmem:[%s356 + $0x340] sm:$0xff]
                  %471 = vst [vmem:[%s357 + $0x1c0] sm:$0xff] %v470
                  %v472 = vld [vmem:[%s356 + $0x348] sm:$0xff]
                  %473 = vst [vmem:[%s357 + $0x1c8] sm:$0xff] %v472
                  %v474 = vld [vmem:[%s356 + $0x350] sm:$0xff]
                  %475 = vst [vmem:[%s357 + $0x1d0] sm:$0xff] %v474
                  %v476 = vld [vmem:[%s356 + $0x358] sm:$0xff]
                  %477 = vst [vmem:[%s357 + $0x1d8] sm:$0xff] %v476
                  %v478 = vld [vmem:[%s356 + $0x360] sm:$0xff]
                  %479 = vst [vmem:[%s357 + $0x1e0] sm:$0xff] %v478
                  %v480 = vld [vmem:[%s356 + $0x368] sm:$0xff]
                  %481 = vst [vmem:[%s357 + $0x1e8] sm:$0xff] %v480
                  %v482 = vld [vmem:[%s356 + $0x370] sm:$0xff]
                  %483 = vst [vmem:[%s357 + $0x1f0] sm:$0xff] %v482
                  %v484 = vld [vmem:[%s356 + $0x378] sm:$0xff]
                  %485 = vst [vmem:[%s357 + $0x1f8] sm:$0xff] %v484
                $region48: #{tpu_custom_call.1} parent=42 // loop_footer
                  %s355 = sadd.s32 1, %s351
                $region49: #{tpu_custom_call.1} parent=42 // loop_footer_branch
                  %350 = sbr.rel target = $region45
                $region50: #{tpu_custom_call.1} parent=42 // loop_exit
                  _
              $region43: #{tpu_custom_call.1} parent=27 // pred_fallthru
                _
              // Predicated region
              $region51: #{tpu_custom_call.1} parent=27 // pred_check
                _
              $region52: #{tpu_custom_call.1} parent=27 // pred_check_branch
                %487 = sbr.rel target = $region54
              $region53: #{tpu_custom_call.1} parent=27 // pred_region
                _
              $region54: #{tpu_custom_call.1} parent=27 // pred_fallthru
                _
            $region28: #{tpu_custom_call.1} parent=23 // pred_fallthru
              _
            // Predicated region
            $region29: #{tpu_custom_call.1} parent=23 // pred_check
              _
            $region30: #{tpu_custom_call.1} parent=23 // pred_check_branch
              %210 = sbr.rel target = $region32
            $region31: #{tpu_custom_call.1} parent=23 // pred_region
              loop: start=0, step=1, limit=1
              $region33: #{tpu_custom_call.1} parent=31 // loop_pre_header
                _
              $region34: #{tpu_custom_call.1} parent=31 // loop_header
                %s213 = sphi 0, %s217
                %p214 = scmp.ge.s32.totalorder %s213, 1
                %s218 = sphi %s204, %s204
                %s219 = sphi %s199, %s199
              $region35: #{tpu_custom_call.1} parent=31 // loop_header_branch
                %216 = sbr.rel (%p214) target = $region39
              $region36: #{tpu_custom_call.1} parent=31 // loop_body
                %v220 = vld [vmem:[%s218] sm:$0xff]
                %221 = vst [vmem:[%s219] sm:$0xff] %v220
                %v222 = vld [vmem:[%s218 + $0x8] sm:$0xff]
                %223 = vst [vmem:[%s219 + $0x8] sm:$0xff] %v222
                %v224 = vld [vmem:[%s218 + $0x10] sm:$0xff]
                %225 = vst [vmem:[%s219 + $0x10] sm:$0xff] %v224
                %v226 = vld [vmem:[%s218 + $0x18] sm:$0xff]
                %227 = vst [vmem:[%s219 + $0x18] sm:$0xff] %v226
                %v228 = vld [vmem:[%s218 + $0x20] sm:$0xff]
                %229 = vst [vmem:[%s219 + $0x20] sm:$0xff] %v228
                %v230 = vld [vmem:[%s218 + $0x28] sm:$0xff]
                %231 = vst [vmem:[%s219 + $0x28] sm:$0xff] %v230
                %v232 = vld [vmem:[%s218 + $0x30] sm:$0xff]
                %233 = vst [vmem:[%s219 + $0x30] sm:$0xff] %v232
                %v234 = vld [vmem:[%s218 + $0x38] sm:$0xff]
                %235 = vst [vmem:[%s219 + $0x38] sm:$0xff] %v234
                %v236 = vld [vmem:[%s218 + $0x40] sm:$0xff]
                %237 = vst [vmem:[%s219 + $0x40] sm:$0xff] %v236
                %v238 = vld [vmem:[%s218 + $0x48] sm:$0xff]
                %239 = vst [vmem:[%s219 + $0x48] sm:$0xff] %v238
                %v240 = vld [vmem:[%s218 + $0x50] sm:$0xff]
                %241 = vst [vmem:[%s219 + $0x50] sm:$0xff] %v240
                %v242 = vld [vmem:[%s218 + $0x58] sm:$0xff]
                %243 = vst [vmem:[%s219 + $0x58] sm:$0xff] %v242
                %v244 = vld [vmem:[%s218 + $0x60] sm:$0xff]
                %245 = vst [vmem:[%s219 + $0x60] sm:$0xff] %v244
                %v246 = vld [vmem:[%s218 + $0x68] sm:$0xff]
                %247 = vst [vmem:[%s219 + $0x68] sm:$0xff] %v246
                %v248 = vld [vmem:[%s218 + $0x70] sm:$0xff]
                %249 = vst [vmem:[%s219 + $0x70] sm:$0xff] %v248
                %v250 = vld [vmem:[%s218 + $0x78] sm:$0xff]
                %251 = vst [vmem:[%s219 + $0x78] sm:$0xff] %v250
                %v252 = vld [vmem:[%s218 + $0x100] sm:$0xff]
                %253 = vst [vmem:[%s219 + $0x80] sm:$0xff] %v252
                %v254 = vld [vmem:[%s218 + $0x108] sm:$0xff]
                %255 = vst [vmem:[%s219 + $0x88] sm:$0xff] %v254
                %v256 = vld [vmem:[%s218 + $0x110] sm:$0xff]
                %257 = vst [vmem:[%s219 + $0x90] sm:$0xff] %v256
                %v258 = vld [vmem:[%s218 + $0x118] sm:$0xff]
                %259 = vst [vmem:[%s219 + $0x98] sm:$0xff] %v258
                %v260 = vld [vmem:[%s218 + $0x120] sm:$0xff]
                %261 = vst [vmem:[%s219 + $0xa0] sm:$0xff] %v260
                %v262 = vld [vmem:[%s218 + $0x128] sm:$0xff]
                %263 = vst [vmem:[%s219 + $0xa8] sm:$0xff] %v262
                %v264 = vld [vmem:[%s218 + $0x130] sm:$0xff]
                %265 = vst [vmem:[%s219 + $0xb0] sm:$0xff] %v264
                %v266 = vld [vmem:[%s218 + $0x138] sm:$0xff]
                %267 = vst [vmem:[%s219 + $0xb8] sm:$0xff] %v266
                %v268 = vld [vmem:[%s218 + $0x140] sm:$0xff]
                %269 = vst [vmem:[%s219 + $0xc0] sm:$0xff] %v268
                %v270 = vld [vmem:[%s218 + $0x148] sm:$0xff]
                %271 = vst [vmem:[%s219 + $0xc8] sm:$0xff] %v270
                %v272 = vld [vmem:[%s218 + $0x150] sm:$0xff]
                %273 = vst [vmem:[%s219 + $0xd0] sm:$0xff] %v272
                %v274 = vld [vmem:[%s218 + $0x158] sm:$0xff]
                %275 = vst [vmem:[%s219 + $0xd8] sm:$0xff] %v274
                %v276 = vld [vmem:[%s218 + $0x160] sm:$0xff]
                %277 = vst [vmem:[%s219 + $0xe0] sm:$0xff] %v276
                %v278 = vld [vmem:[%s218 + $0x168] sm:$0xff]
                %279 = vst [vmem:[%s219 + $0xe8] sm:$0xff] %v278
                %v280 = vld [vmem:[%s218 + $0x170] sm:$0xff]
                %281 = vst [vmem:[%s219 + $0xf0] sm:$0xff] %v280
                %v282 = vld [vmem:[%s218 + $0x178] sm:$0xff]
                %283 = vst [vmem:[%s219 + $0xf8] sm:$0xff] %v282
                %v284 = vld [vmem:[%s218 + $0x200] sm:$0xff]
                %285 = vst [vmem:[%s219 + $0x100] sm:$0xff] %v284
                %v286 = vld [vmem:[%s218 + $0x208] sm:$0xff]
                %287 = vst [vmem:[%s219 + $0x108] sm:$0xff] %v286
                %v288 = vld [vmem:[%s218 + $0x210] sm:$0xff]
                %289 = vst [vmem:[%s219 + $0x110] sm:$0xff] %v288
                %v290 = vld [vmem:[%s218 + $0x218] sm:$0xff]
                %291 = vst [vmem:[%s219 + $0x118] sm:$0xff] %v290
                %v292 = vld [vmem:[%s218 + $0x220] sm:$0xff]
                %293 = vst [vmem:[%s219 + $0x120] sm:$0xff] %v292
                %v294 = vld [vmem:[%s218 + $0x228] sm:$0xff]
                %295 = vst [vmem:[%s219 + $0x128] sm:$0xff] %v294
                %v296 = vld [vmem:[%s218 + $0x230] sm:$0xff]
                %297 = vst [vmem:[%s219 + $0x130] sm:$0xff] %v296
                %v298 = vld [vmem:[%s218 + $0x238] sm:$0xff]
                %299 = vst [vmem:[%s219 + $0x138] sm:$0xff] %v298
                %v300 = vld [vmem:[%s218 + $0x240] sm:$0xff]
                %301 = vst [vmem:[%s219 + $0x140] sm:$0xff] %v300
                %v302 = vld [vmem:[%s218 + $0x248] sm:$0xff]
                %303 = vst [vmem:[%s219 + $0x148] sm:$0xff] %v302
                %v304 = vld [vmem:[%s218 + $0x250] sm:$0xff]
                %305 = vst [vmem:[%s219 + $0x150] sm:$0xff] %v304
                %v306 = vld [vmem:[%s218 + $0x258] sm:$0xff]
                %307 = vst [vmem:[%s219 + $0x158] sm:$0xff] %v306
                %v308 = vld [vmem:[%s218 + $0x260] sm:$0xff]
                %309 = vst [vmem:[%s219 + $0x160] sm:$0xff] %v308
                %v310 = vld [vmem:[%s218 + $0x268] sm:$0xff]
                %311 = vst [vmem:[%s219 + $0x168] sm:$0xff] %v310
                %v312 = vld [vmem:[%s218 + $0x270] sm:$0xff]
                %313 = vst [vmem:[%s219 + $0x170] sm:$0xff] %v312
                %v314 = vld [vmem:[%s218 + $0x278] sm:$0xff]
                %315 = vst [vmem:[%s219 + $0x178] sm:$0xff] %v314
                %v316 = vld [vmem:[%s218 + $0x300] sm:$0xff]
                %317 = vst [vmem:[%s219 + $0x180] sm:$0xff] %v316
                %v318 = vld [vmem:[%s218 + $0x308] sm:$0xff]
                %319 = vst [vmem:[%s219 + $0x188] sm:$0xff] %v318
                %v320 = vld [vmem:[%s218 + $0x310] sm:$0xff]
                %321 = vst [vmem:[%s219 + $0x190] sm:$0xff] %v320
                %v322 = vld [vmem:[%s218 + $0x318] sm:$0xff]
                %323 = vst [vmem:[%s219 + $0x198] sm:$0xff] %v322
                %v324 = vld [vmem:[%s218 + $0x320] sm:$0xff]
                %325 = vst [vmem:[%s219 + $0x1a0] sm:$0xff] %v324
                %v326 = vld [vmem:[%s218 + $0x328] sm:$0xff]
                %327 = vst [vmem:[%s219 + $0x1a8] sm:$0xff] %v326
                %v328 = vld [vmem:[%s218 + $0x330] sm:$0xff]
                %329 = vst [vmem:[%s219 + $0x1b0] sm:$0xff] %v328
                %v330 = vld [vmem:[%s218 + $0x338] sm:$0xff]
                %331 = vst [vmem:[%s219 + $0x1b8] sm:$0xff] %v330
                %v332 = vld [vmem:[%s218 + $0x340] sm:$0xff]
                %333 = vst [vmem:[%s219 + $0x1c0] sm:$0xff] %v332
                %v334 = vld [vmem:[%s218 + $0x348] sm:$0xff]
                %335 = vst [vmem:[%s219 + $0x1c8] sm:$0xff] %v334
                %v336 = vld [vmem:[%s218 + $0x350] sm:$0xff]
                %337 = vst [vmem:[%s219 + $0x1d0] sm:$0xff] %v336
                %v338 = vld [vmem:[%s218 + $0x358] sm:$0xff]
                %339 = vst [vmem:[%s219 + $0x1d8] sm:$0xff] %v338
                %v340 = vld [vmem:[%s218 + $0x360] sm:$0xff]
                %341 = vst [vmem:[%s219 + $0x1e0] sm:$0xff] %v340
                %v342 = vld [vmem:[%s218 + $0x368] sm:$0xff]
                %343 = vst [vmem:[%s219 + $0x1e8] sm:$0xff] %v342
                %v344 = vld [vmem:[%s218 + $0x370] sm:$0xff]
                %345 = vst [vmem:[%s219 + $0x1f0] sm:$0xff] %v344
                %v346 = vld [vmem:[%s218 + $0x378] sm:$0xff]
                %347 = vst [vmem:[%s219 + $0x1f8] sm:$0xff] %v346
              $region37: #{tpu_custom_call.1} parent=31 // loop_footer
                %s217 = sadd.s32 1, %s213
              $region38: #{tpu_custom_call.1} parent=31 // loop_footer_branch
                %212 = sbr.rel target = $region34
              $region39: #{tpu_custom_call.1} parent=31 // loop_exit
                _
            $region32: #{tpu_custom_call.1} parent=23 // pred_fallthru
              _
          $region24: #{tpu_custom_call.1} parent=19 // pred_fallthru
            _
          %488 = vnop
        $region20: #{tpu_custom_call.1} parent=15 // pred_fallthru
          _
        // Predicated region
        $region55: #{tpu_custom_call.1} parent=15 // pred_check
          %p489 = pneg %p82
        $region56: #{tpu_custom_call.1} parent=15 // pred_check_branch
          %491 = sbr.rel (%p489) target = $region58
        $region57: #{tpu_custom_call.1} parent=15 // pred_region
          %s492 = sand.u32 %s72, 1
          %s493 = sand.u32 %s72, 1
          %s494 = smul.addr %s493, 256
          %s495 = scalar_lea.vmem [#allocation6], %s494
          %s496 = smul.u32 16, %s22
          %s497 = smul.addr %s20, 128
          %s498 = sadd.s32 %s496, %s497
          %s499 = smul.addr %s498, 4
          %s500 = scalar_lea.vmem %s1, %s499
          // Predicated region
          $region59: #{tpu_custom_call.1} parent=57 // pred_check
            _
          $region60: #{tpu_custom_call.1} parent=57 // pred_check_branch
            %502 = sbr.rel (0) target = $region62
          $region61: #{tpu_custom_call.1} parent=57 // pred_region
            // Predicated region
            $region63: #{tpu_custom_call.1} parent=61 // pred_check
              _
            $region64: #{tpu_custom_call.1} parent=61 // pred_check_branch
              %504 = sbr.rel target = $region66
            $region65: #{tpu_custom_call.1} parent=61 // pred_region
              // Predicated region
              $region78: #{tpu_custom_call.1} parent=65 // pred_check
                _
              $region79: #{tpu_custom_call.1} parent=65 // pred_check_branch
                %645 = sbr.rel (0) target = $region81
              $region80: #{tpu_custom_call.1} parent=65 // pred_region
                loop: start=0, step=1, limit=1
                $region82: #{tpu_custom_call.1} parent=80 // loop_pre_header
                  _
                $region83: #{tpu_custom_call.1} parent=80 // loop_header
                  %s647 = sphi 0, %s651
                  %p648 = scmp.ge.s32.totalorder %s647, 1
                  %s652 = sphi %s500, %s500
                  %s653 = sphi %s495, %s495
                $region84: #{tpu_custom_call.1} parent=80 // loop_header_branch
                  %650 = sbr.rel (%p648) target = $region88
                $region85: #{tpu_custom_call.1} parent=80 // loop_body
                  _
                $region86: #{tpu_custom_call.1} parent=80 // loop_footer
                  %s651 = sadd.s32 1, %s647
                $region87: #{tpu_custom_call.1} parent=80 // loop_footer_branch
                  %646 = sbr.rel target = $region83
                $region88: #{tpu_custom_call.1} parent=80 // loop_exit
                  _
                loop: start=0, step=1, limit=1
                $region89: #{tpu_custom_call.1} parent=80 // loop_pre_header
                  _
                $region90: #{tpu_custom_call.1} parent=80 // loop_header
                  %s656 = sphi 0, %s660
                  %p657 = scmp.ge.s32.totalorder %s656, 1
                  %s661 = sphi %s500, %s500
                  %s662 = sphi %s495, %s495
                $region91: #{tpu_custom_call.1} parent=80 // loop_header_branch
                  %659 = sbr.rel (%p657) target = $region95
                $region92: #{tpu_custom_call.1} parent=80 // loop_body
                  %v663 = vld [vmem:[%s661] sm:$0xf]
                  %664 = vst [vmem:[%s662] sm:$0xf] %v663
                  %v665 = vld [vmem:[%s661 + $0x4] sm:$0xf]
                  %666 = vst [vmem:[%s662 + $0x4] sm:$0xf] %v665
                  %v667 = vld [vmem:[%s661 + $0x8] sm:$0xf]
                  %668 = vst [vmem:[%s662 + $0x8] sm:$0xf] %v667
                  %v669 = vld [vmem:[%s661 + $0xc] sm:$0xf]
                  %670 = vst [vmem:[%s662 + $0xc] sm:$0xf] %v669
                  %v671 = vld [vmem:[%s661 + $0x10] sm:$0xf]
                  %672 = vst [vmem:[%s662 + $0x10] sm:$0xf] %v671
                  %v673 = vld [vmem:[%s661 + $0x14] sm:$0xf]
                  %674 = vst [vmem:[%s662 + $0x14] sm:$0xf] %v673
                  %v675 = vld [vmem:[%s661 + $0x18] sm:$0xf]
                  %676 = vst [vmem:[%s662 + $0x18] sm:$0xf] %v675
                  %v677 = vld [vmem:[%s661 + $0x1c] sm:$0xf]
                  %678 = vst [vmem:[%s662 + $0x1c] sm:$0xf] %v677
                  %v679 = vld [vmem:[%s661 + $0x20] sm:$0xf]
                  %680 = vst [vmem:[%s662 + $0x20] sm:$0xf] %v679
                  %v681 = vld [vmem:[%s661 + $0x24] sm:$0xf]
                  %682 = vst [vmem:[%s662 + $0x24] sm:$0xf] %v681
                  %v683 = vld [vmem:[%s661 + $0x28] sm:$0xf]
                  %684 = vst [vmem:[%s662 + $0x28] sm:$0xf] %v683
                  %v685 = vld [vmem:[%s661 + $0x2c] sm:$0xf]
                  %686 = vst [vmem:[%s662 + $0x2c] sm:$0xf] %v685
                  %v687 = vld [vmem:[%s661 + $0x30] sm:$0xf]
                  %688 = vst [vmem:[%s662 + $0x30] sm:$0xf] %v687
                  %v689 = vld [vmem:[%s661 + $0x34] sm:$0xf]
                  %690 = vst [vmem:[%s662 + $0x34] sm:$0xf] %v689
                  %v691 = vld [vmem:[%s661 + $0x38] sm:$0xf]
                  %692 = vst [vmem:[%s662 + $0x38] sm:$0xf] %v691
                  %v693 = vld [vmem:[%s661 + $0x3c] sm:$0xf]
                  %694 = vst [vmem:[%s662 + $0x3c] sm:$0xf] %v693
                  %v695 = vld [vmem:[%s661 + $0x80] sm:$0xf]
                  %696 = vst [vmem:[%s662 + $0x40] sm:$0xf] %v695
                  %v697 = vld [vmem:[%s661 + $0x84] sm:$0xf]
                  %698 = vst [vmem:[%s662 + $0x44] sm:$0xf] %v697
                  %v699 = vld [vmem:[%s661 + $0x88] sm:$0xf]
                  %700 = vst [vmem:[%s662 + $0x48] sm:$0xf] %v699
                  %v701 = vld [vmem:[%s661 + $0x8c] sm:$0xf]
                  %702 = vst [vmem:[%s662 + $0x4c] sm:$0xf] %v701
                  %v703 = vld [vmem:[%s661 + $0x90] sm:$0xf]
                  %704 = vst [vmem:[%s662 + $0x50] sm:$0xf] %v703
                  %v705 = vld [vmem:[%s661 + $0x94] sm:$0xf]
                  %706 = vst [vmem:[%s662 + $0x54] sm:$0xf] %v705
                  %v707 = vld [vmem:[%s661 + $0x98] sm:$0xf]
                  %708 = vst [vmem:[%s662 + $0x58] sm:$0xf] %v707
                  %v709 = vld [vmem:[%s661 + $0x9c] sm:$0xf]
                  %710 = vst [vmem:[%s662 + $0x5c] sm:$0xf] %v709
                  %v711 = vld [vmem:[%s661 + $0xa0] sm:$0xf]
                  %712 = vst [vmem:[%s662 + $0x60] sm:$0xf] %v711
                  %v713 = vld [vmem:[%s661 + $0xa4] sm:$0xf]
                  %714 = vst [vmem:[%s662 + $0x64] sm:$0xf] %v713
                  %v715 = vld [vmem:[%s661 + $0xa8] sm:$0xf]
                  %716 = vst [vmem:[%s662 + $0x68] sm:$0xf] %v715
                  %v717 = vld [vmem:[%s661 + $0xac] sm:$0xf]
                  %718 = vst [vmem:[%s662 + $0x6c] sm:$0xf] %v717
                  %v719 = vld [vmem:[%s661 + $0xb0] sm:$0xf]
                  %720 = vst [vmem:[%s662 + $0x70] sm:$0xf] %v719
                  %v721 = vld [vmem:[%s661 + $0xb4] sm:$0xf]
                  %722 = vst [vmem:[%s662 + $0x74] sm:$0xf] %v721
                  %v723 = vld [vmem:[%s661 + $0xb8] sm:$0xf]
                  %724 = vst [vmem:[%s662 + $0x78] sm:$0xf] %v723
                  %v725 = vld [vmem:[%s661 + $0xbc] sm:$0xf]
                  %726 = vst [vmem:[%s662 + $0x7c] sm:$0xf] %v725
                  %v727 = vld [vmem:[%s661 + $0x100] sm:$0xf]
                  %728 = vst [vmem:[%s662 + $0x80] sm:$0xf] %v727
                  %v729 = vld [vmem:[%s661 + $0x104] sm:$0xf]
                  %730 = vst [vmem:[%s662 + $0x84] sm:$0xf] %v729
                  %v731 = vld [vmem:[%s661 + $0x108] sm:$0xf]
                  %732 = vst [vmem:[%s662 + $0x88] sm:$0xf] %v731
                  %v733 = vld [vmem:[%s661 + $0x10c] sm:$0xf]
                  %734 = vst [vmem:[%s662 + $0x8c] sm:$0xf] %v733
                  %v735 = vld [vmem:[%s661 + $0x110] sm:$0xf]
                  %736 = vst [vmem:[%s662 + $0x90] sm:$0xf] %v735
                  %v737 = vld [vmem:[%s661 + $0x114] sm:$0xf]
                  %738 = vst [vmem:[%s662 + $0x94] sm:$0xf] %v737
                  %v739 = vld [vmem:[%s661 + $0x118] sm:$0xf]
                  %740 = vst [vmem:[%s662 + $0x98] sm:$0xf] %v739
                  %v741 = vld [vmem:[%s661 + $0x11c] sm:$0xf]
                  %742 = vst [vmem:[%s662 + $0x9c] sm:$0xf] %v741
                  %v743 = vld [vmem:[%s661 + $0x120] sm:$0xf]
                  %744 = vst [vmem:[%s662 + $0xa0] sm:$0xf] %v743
                  %v745 = vld [vmem:[%s661 + $0x124] sm:$0xf]
                  %746 = vst [vmem:[%s662 + $0xa4] sm:$0xf] %v745
                  %v747 = vld [vmem:[%s661 + $0x128] sm:$0xf]
                  %748 = vst [vmem:[%s662 + $0xa8] sm:$0xf] %v747
                  %v749 = vld [vmem:[%s661 + $0x12c] sm:$0xf]
                  %750 = vst [vmem:[%s662 + $0xac] sm:$0xf] %v749
                  %v751 = vld [vmem:[%s661 + $0x130] sm:$0xf]
                  %752 = vst [vmem:[%s662 + $0xb0] sm:$0xf] %v751
                  %v753 = vld [vmem:[%s661 + $0x134] sm:$0xf]
                  %754 = vst [vmem:[%s662 + $0xb4] sm:$0xf] %v753
                  %v755 = vld [vmem:[%s661 + $0x138] sm:$0xf]
                  %756 = vst [vmem:[%s662 + $0xb8] sm:$0xf] %v755
                  %v757 = vld [vmem:[%s661 + $0x13c] sm:$0xf]
                  %758 = vst [vmem:[%s662 + $0xbc] sm:$0xf] %v757
                  %v759 = vld [vmem:[%s661 + $0x180] sm:$0xf]
                  %760 = vst [vmem:[%s662 + $0xc0] sm:$0xf] %v759
                  %v761 = vld [vmem:[%s661 + $0x184] sm:$0xf]
                  %762 = vst [vmem:[%s662 + $0xc4] sm:$0xf] %v761
                  %v763 = vld [vmem:[%s661 + $0x188] sm:$0xf]
                  %764 = vst [vmem:[%s662 + $0xc8] sm:$0xf] %v763
                  %v765 = vld [vmem:[%s661 + $0x18c] sm:$0xf]
                  %766 = vst [vmem:[%s662 + $0xcc] sm:$0xf] %v765
                  %v767 = vld [vmem:[%s661 + $0x190] sm:$0xf]
                  %768 = vst [vmem:[%s662 + $0xd0] sm:$0xf] %v767
                  %v769 = vld [vmem:[%s661 + $0x194] sm:$0xf]
                  %770 = vst [vmem:[%s662 + $0xd4] sm:$0xf] %v769
                  %v771 = vld [vmem:[%s661 + $0x198] sm:$0xf]
                  %772 = vst [vmem:[%s662 + $0xd8] sm:$0xf] %v771
                  %v773 = vld [vmem:[%s661 + $0x19c] sm:$0xf]
                  %774 = vst [vmem:[%s662 + $0xdc] sm:$0xf] %v773
                  %v775 = vld [vmem:[%s661 + $0x1a0] sm:$0xf]
                  %776 = vst [vmem:[%s662 + $0xe0] sm:$0xf] %v775
                  %v777 = vld [vmem:[%s661 + $0x1a4] sm:$0xf]
                  %778 = vst [vmem:[%s662 + $0xe4] sm:$0xf] %v777
                  %v779 = vld [vmem:[%s661 + $0x1a8] sm:$0xf]
                  %780 = vst [vmem:[%s662 + $0xe8] sm:$0xf] %v779
                  %v781 = vld [vmem:[%s661 + $0x1ac] sm:$0xf]
                  %782 = vst [vmem:[%s662 + $0xec] sm:$0xf] %v781
                  %v783 = vld [vmem:[%s661 + $0x1b0] sm:$0xf]
                  %784 = vst [vmem:[%s662 + $0xf0] sm:$0xf] %v783
                  %v785 = vld [vmem:[%s661 + $0x1b4] sm:$0xf]
                  %786 = vst [vmem:[%s662 + $0xf4] sm:$0xf] %v785
                  %v787 = vld [vmem:[%s661 + $0x1b8] sm:$0xf]
                  %788 = vst [vmem:[%s662 + $0xf8] sm:$0xf] %v787
                  %v789 = vld [vmem:[%s661 + $0x1bc] sm:$0xf]
                  %790 = vst [vmem:[%s662 + $0xfc] sm:$0xf] %v789
                $region93: #{tpu_custom_call.1} parent=80 // loop_footer
                  %s660 = sadd.s32 1, %s656
                $region94: #{tpu_custom_call.1} parent=80 // loop_footer_branch
                  %655 = sbr.rel target = $region90
                $region95: #{tpu_custom_call.1} parent=80 // loop_exit
                  _
              $region81: #{tpu_custom_call.1} parent=65 // pred_fallthru
                _
            $region66: #{tpu_custom_call.1} parent=61 // pred_fallthru
              _
            // Predicated region
            $region67: #{tpu_custom_call.1} parent=61 // pred_check
              _
            $region68: #{tpu_custom_call.1} parent=61 // pred_check_branch
              %506 = sbr.rel (0) target = $region70
            $region69: #{tpu_custom_call.1} parent=61 // pred_region
              loop: start=0, step=1, limit=1
              $region71: #{tpu_custom_call.1} parent=69 // loop_pre_header
                _
              $region72: #{tpu_custom_call.1} parent=69 // loop_header
                %s509 = sphi 0, %s513
                %p510 = scmp.ge.s32.totalorder %s509, 1
                %s514 = sphi %s500, %s500
                %s515 = sphi %s495, %s495
              $region73: #{tpu_custom_call.1} parent=69 // loop_header_branch
                %512 = sbr.rel (%p510) target = $region77
              $region74: #{tpu_custom_call.1} parent=69 // loop_body
                %v516 = vld [vmem:[%s514] sm:$0xf]
                %517 = vst [vmem:[%s515] sm:$0xf] %v516
                %v518 = vld [vmem:[%s514 + $0x4] sm:$0xf]
                %519 = vst [vmem:[%s515 + $0x4] sm:$0xf] %v518
                %v520 = vld [vmem:[%s514 + $0x8] sm:$0xf]
                %521 = vst [vmem:[%s515 + $0x8] sm:$0xf] %v520
                %v522 = vld [vmem:[%s514 + $0xc] sm:$0xf]
                %523 = vst [vmem:[%s515 + $0xc] sm:$0xf] %v522
                %v524 = vld [vmem:[%s514 + $0x10] sm:$0xf]
                %525 = vst [vmem:[%s515 + $0x10] sm:$0xf] %v524
                %v526 = vld [vmem:[%s514 + $0x14] sm:$0xf]
                %527 = vst [vmem:[%s515 + $0x14] sm:$0xf] %v526
                %v528 = vld [vmem:[%s514 + $0x18] sm:$0xf]
                %529 = vst [vmem:[%s515 + $0x18] sm:$0xf] %v528
                %v530 = vld [vmem:[%s514 + $0x1c] sm:$0xf]
                %531 = vst [vmem:[%s515 + $0x1c] sm:$0xf] %v530
                %v532 = vld [vmem:[%s514 + $0x20] sm:$0xf]
                %533 = vst [vmem:[%s515 + $0x20] sm:$0xf] %v532
                %v534 = vld [vmem:[%s514 + $0x24] sm:$0xf]
                %535 = vst [vmem:[%s515 + $0x24] sm:$0xf] %v534
                %v536 = vld [vmem:[%s514 + $0x28] sm:$0xf]
                %537 = vst [vmem:[%s515 + $0x28] sm:$0xf] %v536
                %v538 = vld [vmem:[%s514 + $0x2c] sm:$0xf]
                %539 = vst [vmem:[%s515 + $0x2c] sm:$0xf] %v538
                %v540 = vld [vmem:[%s514 + $0x30] sm:$0xf]
                %541 = vst [vmem:[%s515 + $0x30] sm:$0xf] %v540
                %v542 = vld [vmem:[%s514 + $0x34] sm:$0xf]
                %543 = vst [vmem:[%s515 + $0x34] sm:$0xf] %v542
                %v544 = vld [vmem:[%s514 + $0x38] sm:$0xf]
                %545 = vst [vmem:[%s515 + $0x38] sm:$0xf] %v544
                %v546 = vld [vmem:[%s514 + $0x3c] sm:$0xf]
                %547 = vst [vmem:[%s515 + $0x3c] sm:$0xf] %v546
                %v548 = vld [vmem:[%s514 + $0x80] sm:$0xf]
                %549 = vst [vmem:[%s515 + $0x40] sm:$0xf] %v548
                %v550 = vld [vmem:[%s514 + $0x84] sm:$0xf]
                %551 = vst [vmem:[%s515 + $0x44] sm:$0xf] %v550
                %v552 = vld [vmem:[%s514 + $0x88] sm:$0xf]
                %553 = vst [vmem:[%s515 + $0x48] sm:$0xf] %v552
                %v554 = vld [vmem:[%s514 + $0x8c] sm:$0xf]
                %555 = vst [vmem:[%s515 + $0x4c] sm:$0xf] %v554
                %v556 = vld [vmem:[%s514 + $0x90] sm:$0xf]
                %557 = vst [vmem:[%s515 + $0x50] sm:$0xf] %v556
                %v558 = vld [vmem:[%s514 + $0x94] sm:$0xf]
                %559 = vst [vmem:[%s515 + $0x54] sm:$0xf] %v558
                %v560 = vld [vmem:[%s514 + $0x98] sm:$0xf]
                %561 = vst [vmem:[%s515 + $0x58] sm:$0xf] %v560
                %v562 = vld [vmem:[%s514 + $0x9c] sm:$0xf]
                %563 = vst [vmem:[%s515 + $0x5c] sm:$0xf] %v562
                %v564 = vld [vmem:[%s514 + $0xa0] sm:$0xf]
                %565 = vst [vmem:[%s515 + $0x60] sm:$0xf] %v564
                %v566 = vld [vmem:[%s514 + $0xa4] sm:$0xf]
                %567 = vst [vmem:[%s515 + $0x64] sm:$0xf] %v566
                %v568 = vld [vmem:[%s514 + $0xa8] sm:$0xf]
                %569 = vst [vmem:[%s515 + $0x68] sm:$0xf] %v568
                %v570 = vld [vmem:[%s514 + $0xac] sm:$0xf]
                %571 = vst [vmem:[%s515 + $0x6c] sm:$0xf] %v570
                %v572 = vld [vmem:[%s514 + $0xb0] sm:$0xf]
                %573 = vst [vmem:[%s515 + $0x70] sm:$0xf] %v572
                %v574 = vld [vmem:[%s514 + $0xb4] sm:$0xf]
                %575 = vst [vmem:[%s515 + $0x74] sm:$0xf] %v574
                %v576 = vld [vmem:[%s514 + $0xb8] sm:$0xf]
                %577 = vst [vmem:[%s515 + $0x78] sm:$0xf] %v576
                %v578 = vld [vmem:[%s514 + $0xbc] sm:$0xf]
                %579 = vst [vmem:[%s515 + $0x7c] sm:$0xf] %v578
                %v580 = vld [vmem:[%s514 + $0x100] sm:$0xf]
                %581 = vst [vmem:[%s515 + $0x80] sm:$0xf] %v580
                %v582 = vld [vmem:[%s514 + $0x104] sm:$0xf]
                %583 = vst [vmem:[%s515 + $0x84] sm:$0xf] %v582
                %v584 = vld [vmem:[%s514 + $0x108] sm:$0xf]
                %585 = vst [vmem:[%s515 + $0x88] sm:$0xf] %v584
                %v586 = vld [vmem:[%s514 + $0x10c] sm:$0xf]
                %587 = vst [vmem:[%s515 + $0x8c] sm:$0xf] %v586
                %v588 = vld [vmem:[%s514 + $0x110] sm:$0xf]
                %589 = vst [vmem:[%s515 + $0x90] sm:$0xf] %v588
                %v590 = vld [vmem:[%s514 + $0x114] sm:$0xf]
                %591 = vst [vmem:[%s515 + $0x94] sm:$0xf] %v590
                %v592 = vld [vmem:[%s514 + $0x118] sm:$0xf]
                %593 = vst [vmem:[%s515 + $0x98] sm:$0xf] %v592
                %v594 = vld [vmem:[%s514 + $0x11c] sm:$0xf]
                %595 = vst [vmem:[%s515 + $0x9c] sm:$0xf] %v594
                %v596 = vld [vmem:[%s514 + $0x120] sm:$0xf]
                %597 = vst [vmem:[%s515 + $0xa0] sm:$0xf] %v596
                %v598 = vld [vmem:[%s514 + $0x124] sm:$0xf]
                %599 = vst [vmem:[%s515 + $0xa4] sm:$0xf] %v598
                %v600 = vld [vmem:[%s514 + $0x128] sm:$0xf]
                %601 = vst [vmem:[%s515 + $0xa8] sm:$0xf] %v600
                %v602 = vld [vmem:[%s514 + $0x12c] sm:$0xf]
                %603 = vst [vmem:[%s515 + $0xac] sm:$0xf] %v602
                %v604 = vld [vmem:[%s514 + $0x130] sm:$0xf]
                %605 = vst [vmem:[%s515 + $0xb0] sm:$0xf] %v604
                %v606 = vld [vmem:[%s514 + $0x134] sm:$0xf]
                %607 = vst [vmem:[%s515 + $0xb4] sm:$0xf] %v606
                %v608 = vld [vmem:[%s514 + $0x138] sm:$0xf]
                %609 = vst [vmem:[%s515 + $0xb8] sm:$0xf] %v608
                %v610 = vld [vmem:[%s514 + $0x13c] sm:$0xf]
                %611 = vst [vmem:[%s515 + $0xbc] sm:$0xf] %v610
                %v612 = vld [vmem:[%s514 + $0x180] sm:$0xf]
                %613 = vst [vmem:[%s515 + $0xc0] sm:$0xf] %v612
                %v614 = vld [vmem:[%s514 + $0x184] sm:$0xf]
                %615 = vst [vmem:[%s515 + $0xc4] sm:$0xf] %v614
                %v616 = vld [vmem:[%s514 + $0x188] sm:$0xf]
                %617 = vst [vmem:[%s515 + $0xc8] sm:$0xf] %v616
                %v618 = vld [vmem:[%s514 + $0x18c] sm:$0xf]
                %619 = vst [vmem:[%s515 + $0xcc] sm:$0xf] %v618
                %v620 = vld [vmem:[%s514 + $0x190] sm:$0xf]
                %621 = vst [vmem:[%s515 + $0xd0] sm:$0xf] %v620
                %v622 = vld [vmem:[%s514 + $0x194] sm:$0xf]
                %623 = vst [vmem:[%s515 + $0xd4] sm:$0xf] %v622
                %v624 = vld [vmem:[%s514 + $0x198] sm:$0xf]
                %625 = vst [vmem:[%s515 + $0xd8] sm:$0xf] %v624
                %v626 = vld [vmem:[%s514 + $0x19c] sm:$0xf]
                %627 = vst [vmem:[%s515 + $0xdc] sm:$0xf] %v626
                %v628 = vld [vmem:[%s514 + $0x1a0] sm:$0xf]
                %629 = vst [vmem:[%s515 + $0xe0] sm:$0xf] %v628
                %v630 = vld [vmem:[%s514 + $0x1a4] sm:$0xf]
                %631 = vst [vmem:[%s515 + $0xe4] sm:$0xf] %v630
                %v632 = vld [vmem:[%s514 + $0x1a8] sm:$0xf]
                %633 = vst [vmem:[%s515 + $0xe8] sm:$0xf] %v632
                %v634 = vld [vmem:[%s514 + $0x1ac] sm:$0xf]
                %635 = vst [vmem:[%s515 + $0xec] sm:$0xf] %v634
                %v636 = vld [vmem:[%s514 + $0x1b0] sm:$0xf]
                %637 = vst [vmem:[%s515 + $0xf0] sm:$0xf] %v636
                %v638 = vld [vmem:[%s514 + $0x1b4] sm:$0xf]
                %639 = vst [vmem:[%s515 + $0xf4] sm:$0xf] %v638
                %v640 = vld [vmem:[%s514 + $0x1b8] sm:$0xf]
                %641 = vst [vmem:[%s515 + $0xf8] sm:$0xf] %v640
                %v642 = vld [vmem:[%s514 + $0x1bc] sm:$0xf]
                %643 = vst [vmem:[%s515 + $0xfc] sm:$0xf] %v642
              $region75: #{tpu_custom_call.1} parent=69 // loop_footer
                %s513 = sadd.s32 1, %s509
              $region76: #{tpu_custom_call.1} parent=69 // loop_footer_branch
                %508 = sbr.rel target = $region72
              $region77: #{tpu_custom_call.1} parent=69 // loop_exit
                _
            $region70: #{tpu_custom_call.1} parent=61 // pred_fallthru
              _
          $region62: #{tpu_custom_call.1} parent=57 // pred_fallthru
            _
          %791 = vnop
        $region58: #{tpu_custom_call.1} parent=15 // pred_fallthru
          _
        // Predicated region
        $region96: #{tpu_custom_call.1} parent=15 // pred_check
          %p792 = pneg %p110
        $region97: #{tpu_custom_call.1} parent=15 // pred_check_branch
          %794 = sbr.rel (%p792) target = $region99
        $region98: #{tpu_custom_call.1} parent=15 // pred_region
          %s795 = sand.u32 %s100, 1
          %s796 = sand.u32 %s100, 1
          %s797 = smul.addr %s796, 256
          %s798 = scalar_lea.vmem [#allocation7], %s797
          %s799 = smul.u32 16, %s22
          %s800 = smul.addr %s20, 128
          %s801 = sadd.s32 %s799, %s800
          %s802 = smul.addr %s801, 4
          %s803 = scalar_lea.vmem %s2, %s802
          // Predicated region
          $region100: #{tpu_custom_call.1} parent=98 // pred_check
            _
          $region101: #{tpu_custom_call.1} parent=98 // pred_check_branch
            %805 = sbr.rel (0) target = $region103
          $region102: #{tpu_custom_call.1} parent=98 // pred_region
            // Predicated region
            $region104: #{tpu_custom_call.1} parent=102 // pred_check
              _
            $region105: #{tpu_custom_call.1} parent=102 // pred_check_branch
              %807 = sbr.rel target = $region107
            $region106: #{tpu_custom_call.1} parent=102 // pred_region
              // Predicated region
              $region119: #{tpu_custom_call.1} parent=106 // pred_check
                _
              $region120: #{tpu_custom_call.1} parent=106 // pred_check_branch
                %948 = sbr.rel (0) target = $region122
              $region121: #{tpu_custom_call.1} parent=106 // pred_region
                loop: start=0, step=1, limit=1
                $region123: #{tpu_custom_call.1} parent=121 // loop_pre_header
                  _
                $region124: #{tpu_custom_call.1} parent=121 // loop_header
                  %s950 = sphi 0, %s954
                  %p951 = scmp.ge.s32.totalorder %s950, 1
                  %s955 = sphi %s803, %s803
                  %s956 = sphi %s798, %s798
                $region125: #{tpu_custom_call.1} parent=121 // loop_header_branch
                  %953 = sbr.rel (%p951) target = $region129
                $region126: #{tpu_custom_call.1} parent=121 // loop_body
                  _
                $region127: #{tpu_custom_call.1} parent=121 // loop_footer
                  %s954 = sadd.s32 1, %s950
                $region128: #{tpu_custom_call.1} parent=121 // loop_footer_branch
                  %949 = sbr.rel target = $region124
                $region129: #{tpu_custom_call.1} parent=121 // loop_exit
                  _
                loop: start=0, step=1, limit=1
                $region130: #{tpu_custom_call.1} parent=121 // loop_pre_header
                  _
                $region131: #{tpu_custom_call.1} parent=121 // loop_header
                  %s959 = sphi 0, %s963
                  %p960 = scmp.ge.s32.totalorder %s959, 1
                  %s964 = sphi %s803, %s803
                  %s965 = sphi %s798, %s798
                $region132: #{tpu_custom_call.1} parent=121 // loop_header_branch
                  %962 = sbr.rel (%p960) target = $region136
                $region133: #{tpu_custom_call.1} parent=121 // loop_body
                  %v966 = vld [vmem:[%s964] sm:$0xf]
                  %967 = vst [vmem:[%s965] sm:$0xf] %v966
                  %v968 = vld [vmem:[%s964 + $0x4] sm:$0xf]
                  %969 = vst [vmem:[%s965 + $0x4] sm:$0xf] %v968
                  %v970 = vld [vmem:[%s964 + $0x8] sm:$0xf]
                  %971 = vst [vmem:[%s965 + $0x8] sm:$0xf] %v970
                  %v972 = vld [vmem:[%s964 + $0xc] sm:$0xf]
                  %973 = vst [vmem:[%s965 + $0xc] sm:$0xf] %v972
                  %v974 = vld [vmem:[%s964 + $0x10] sm:$0xf]
                  %975 = vst [vmem:[%s965 + $0x10] sm:$0xf] %v974
                  %v976 = vld [vmem:[%s964 + $0x14] sm:$0xf]
                  %977 = vst [vmem:[%s965 + $0x14] sm:$0xf] %v976
                  %v978 = vld [vmem:[%s964 + $0x18] sm:$0xf]
                  %979 = vst [vmem:[%s965 + $0x18] sm:$0xf] %v978
                  %v980 = vld [vmem:[%s964 + $0x1c] sm:$0xf]
                  %981 = vst [vmem:[%s965 + $0x1c] sm:$0xf] %v980
                  %v982 = vld [vmem:[%s964 + $0x20] sm:$0xf]
                  %983 = vst [vmem:[%s965 + $0x20] sm:$0xf] %v982
                  %v984 = vld [vmem:[%s964 + $0x24] sm:$0xf]
                  %985 = vst [vmem:[%s965 + $0x24] sm:$0xf] %v984
                  %v986 = vld [vmem:[%s964 + $0x28] sm:$0xf]
                  %987 = vst [vmem:[%s965 + $0x28] sm:$0xf] %v986
                  %v988 = vld [vmem:[%s964 + $0x2c] sm:$0xf]
                  %989 = vst [vmem:[%s965 + $0x2c] sm:$0xf] %v988
                  %v990 = vld [vmem:[%s964 + $0x30] sm:$0xf]
                  %991 = vst [vmem:[%s965 + $0x30] sm:$0xf] %v990
                  %v992 = vld [vmem:[%s964 + $0x34] sm:$0xf]
                  %993 = vst [vmem:[%s965 + $0x34] sm:$0xf] %v992
                  %v994 = vld [vmem:[%s964 + $0x38] sm:$0xf]
                  %995 = vst [vmem:[%s965 + $0x38] sm:$0xf] %v994
                  %v996 = vld [vmem:[%s964 + $0x3c] sm:$0xf]
                  %997 = vst [vmem:[%s965 + $0x3c] sm:$0xf] %v996
                  %v998 = vld [vmem:[%s964 + $0x80] sm:$0xf]
                  %999 = vst [vmem:[%s965 + $0x40] sm:$0xf] %v998
                  %v1000 = vld [vmem:[%s964 + $0x84] sm:$0xf]
                  %1001 = vst [vmem:[%s965 + $0x44] sm:$0xf] %v1000
                  %v1002 = vld [vmem:[%s964 + $0x88] sm:$0xf]
                  %1003 = vst [vmem:[%s965 + $0x48] sm:$0xf] %v1002
                  %v1004 = vld [vmem:[%s964 + $0x8c] sm:$0xf]
                  %1005 = vst [vmem:[%s965 + $0x4c] sm:$0xf] %v1004
                  %v1006 = vld [vmem:[%s964 + $0x90] sm:$0xf]
                  %1007 = vst [vmem:[%s965 + $0x50] sm:$0xf] %v1006
                  %v1008 = vld [vmem:[%s964 + $0x94] sm:$0xf]
                  %1009 = vst [vmem:[%s965 + $0x54] sm:$0xf] %v1008
                  %v1010 = vld [vmem:[%s964 + $0x98] sm:$0xf]
                  %1011 = vst [vmem:[%s965 + $0x58] sm:$0xf] %v1010
                  %v1012 = vld [vmem:[%s964 + $0x9c] sm:$0xf]
                  %1013 = vst [vmem:[%s965 + $0x5c] sm:$0xf] %v1012
                  %v1014 = vld [vmem:[%s964 + $0xa0] sm:$0xf]
                  %1015 = vst [vmem:[%s965 + $0x60] sm:$0xf] %v1014
                  %v1016 = vld [vmem:[%s964 + $0xa4] sm:$0xf]
                  %1017 = vst [vmem:[%s965 + $0x64] sm:$0xf] %v1016
                  %v1018 = vld [vmem:[%s964 + $0xa8] sm:$0xf]
                  %1019 = vst [vmem:[%s965 + $0x68] sm:$0xf] %v1018
                  %v1020 = vld [vmem:[%s964 + $0xac] sm:$0xf]
                  %1021 = vst [vmem:[%s965 + $0x6c] sm:$0xf] %v1020
                  %v1022 = vld [vmem:[%s964 + $0xb0] sm:$0xf]
                  %1023 = vst [vmem:[%s965 + $0x70] sm:$0xf] %v1022
                  %v1024 = vld [vmem:[%s964 + $0xb4] sm:$0xf]
                  %1025 = vst [vmem:[%s965 + $0x74] sm:$0xf] %v1024
                  %v1026 = vld [vmem:[%s964 + $0xb8] sm:$0xf]
                  %1027 = vst [vmem:[%s965 + $0x78] sm:$0xf] %v1026
                  %v1028 = vld [vmem:[%s964 + $0xbc] sm:$0xf]
                  %1029 = vst [vmem:[%s965 + $0x7c] sm:$0xf] %v1028
                  %v1030 = vld [vmem:[%s964 + $0x100] sm:$0xf]
                  %1031 = vst [vmem:[%s965 + $0x80] sm:$0xf] %v1030
                  %v1032 = vld [vmem:[%s964 + $0x104] sm:$0xf]
                  %1033 = vst [vmem:[%s965 + $0x84] sm:$0xf] %v1032
                  %v1034 = vld [vmem:[%s964 + $0x108] sm:$0xf]
                  %1035 = vst [vmem:[%s965 + $0x88] sm:$0xf] %v1034
                  %v1036 = vld [vmem:[%s964 + $0x10c] sm:$0xf]
                  %1037 = vst [vmem:[%s965 + $0x8c] sm:$0xf] %v1036
                  %v1038 = vld [vmem:[%s964 + $0x110] sm:$0xf]
                  %1039 = vst [vmem:[%s965 + $0x90] sm:$0xf] %v1038
                  %v1040 = vld [vmem:[%s964 + $0x114] sm:$0xf]
                  %1041 = vst [vmem:[%s965 + $0x94] sm:$0xf] %v1040
                  %v1042 = vld [vmem:[%s964 + $0x118] sm:$0xf]
                  %1043 = vst [vmem:[%s965 + $0x98] sm:$0xf] %v1042
                  %v1044 = vld [vmem:[%s964 + $0x11c] sm:$0xf]
                  %1045 = vst [vmem:[%s965 + $0x9c] sm:$0xf] %v1044
                  %v1046 = vld [vmem:[%s964 + $0x120] sm:$0xf]
                  %1047 = vst [vmem:[%s965 + $0xa0] sm:$0xf] %v1046
                  %v1048 = vld [vmem:[%s964 + $0x124] sm:$0xf]
                  %1049 = vst [vmem:[%s965 + $0xa4] sm:$0xf] %v1048
                  %v1050 = vld [vmem:[%s964 + $0x128] sm:$0xf]
                  %1051 = vst [vmem:[%s965 + $0xa8] sm:$0xf] %v1050
                  %v1052 = vld [vmem:[%s964 + $0x12c] sm:$0xf]
                  %1053 = vst [vmem:[%s965 + $0xac] sm:$0xf] %v1052
                  %v1054 = vld [vmem:[%s964 + $0x130] sm:$0xf]
                  %1055 = vst [vmem:[%s965 + $0xb0] sm:$0xf] %v1054
                  %v1056 = vld [vmem:[%s964 + $0x134] sm:$0xf]
                  %1057 = vst [vmem:[%s965 + $0xb4] sm:$0xf] %v1056
                  %v1058 = vld [vmem:[%s964 + $0x138] sm:$0xf]
                  %1059 = vst [vmem:[%s965 + $0xb8] sm:$0xf] %v1058
                  %v1060 = vld [vmem:[%s964 + $0x13c] sm:$0xf]
                  %1061 = vst [vmem:[%s965 + $0xbc] sm:$0xf] %v1060
                  %v1062 = vld [vmem:[%s964 + $0x180] sm:$0xf]
                  %1063 = vst [vmem:[%s965 + $0xc0] sm:$0xf] %v1062
                  %v1064 = vld [vmem:[%s964 + $0x184] sm:$0xf]
                  %1065 = vst [vmem:[%s965 + $0xc4] sm:$0xf] %v1064
                  %v1066 = vld [vmem:[%s964 + $0x188] sm:$0xf]
                  %1067 = vst [vmem:[%s965 + $0xc8] sm:$0xf] %v1066
                  %v1068 = vld [vmem:[%s964 + $0x18c] sm:$0xf]
                  %1069 = vst [vmem:[%s965 + $0xcc] sm:$0xf] %v1068
                  %v1070 = vld [vmem:[%s964 + $0x190] sm:$0xf]
                  %1071 = vst [vmem:[%s965 + $0xd0] sm:$0xf] %v1070
                  %v1072 = vld [vmem:[%s964 + $0x194] sm:$0xf]
                  %1073 = vst [vmem:[%s965 + $0xd4] sm:$0xf] %v1072
                  %v1074 = vld [vmem:[%s964 + $0x198] sm:$0xf]
                  %1075 = vst [vmem:[%s965 + $0xd8] sm:$0xf] %v1074
                  %v1076 = vld [vmem:[%s964 + $0x19c] sm:$0xf]
                  %1077 = vst [vmem:[%s965 + $0xdc] sm:$0xf] %v1076
                  %v1078 = vld [vmem:[%s964 + $0x1a0] sm:$0xf]
                  %1079 = vst [vmem:[%s965 + $0xe0] sm:$0xf] %v1078
                  %v1080 = vld [vmem:[%s964 + $0x1a4] sm:$0xf]
                  %1081 = vst [vmem:[%s965 + $0xe4] sm:$0xf] %v1080
                  %v1082 = vld [vmem:[%s964 + $0x1a8] sm:$0xf]
                  %1083 = vst [vmem:[%s965 + $0xe8] sm:$0xf] %v1082
                  %v1084 = vld [vmem:[%s964 + $0x1ac] sm:$0xf]
                  %1085 = vst [vmem:[%s965 + $0xec] sm:$0xf] %v1084
                  %v1086 = vld [vmem:[%s964 + $0x1b0] sm:$0xf]
                  %1087 = vst [vmem:[%s965 + $0xf0] sm:$0xf] %v1086
                  %v1088 = vld [vmem:[%s964 + $0x1b4] sm:$0xf]
                  %1089 = vst [vmem:[%s965 + $0xf4] sm:$0xf] %v1088
                  %v1090 = vld [vmem:[%s964 + $0x1b8] sm:$0xf]
                  %1091 = vst [vmem:[%s965 + $0xf8] sm:$0xf] %v1090
                  %v1092 = vld [vmem:[%s964 + $0x1bc] sm:$0xf]
                  %1093 = vst [vmem:[%s965 + $0xfc] sm:$0xf] %v1092
                $region134: #{tpu_custom_call.1} parent=121 // loop_footer
                  %s963 = sadd.s32 1, %s959
                $region135: #{tpu_custom_call.1} parent=121 // loop_footer_branch
                  %958 = sbr.rel target = $region131
                $region136: #{tpu_custom_call.1} parent=121 // loop_exit
                  _
              $region122: #{tpu_custom_call.1} parent=106 // pred_fallthru
                _
            $region107: #{tpu_custom_call.1} parent=102 // pred_fallthru
              _
            // Predicated region
            $region108: #{tpu_custom_call.1} parent=102 // pred_check
              _
            $region109: #{tpu_custom_call.1} parent=102 // pred_check_branch
              %809 = sbr.rel (0) target = $region111
            $region110: #{tpu_custom_call.1} parent=102 // pred_region
              loop: start=0, step=1, limit=1
              $region112: #{tpu_custom_call.1} parent=110 // loop_pre_header
                _
              $region113: #{tpu_custom_call.1} parent=110 // loop_header
                %s812 = sphi 0, %s816
                %p813 = scmp.ge.s32.totalorder %s812, 1
                %s817 = sphi %s803, %s803
                %s818 = sphi %s798, %s798
              $region114: #{tpu_custom_call.1} parent=110 // loop_header_branch
                %815 = sbr.rel (%p813) target = $region118
              $region115: #{tpu_custom_call.1} parent=110 // loop_body
                %v819 = vld [vmem:[%s817] sm:$0xf]
                %820 = vst [vmem:[%s818] sm:$0xf] %v819
                %v821 = vld [vmem:[%s817 + $0x4] sm:$0xf]
                %822 = vst [vmem:[%s818 + $0x4] sm:$0xf] %v821
                %v823 = vld [vmem:[%s817 + $0x8] sm:$0xf]
                %824 = vst [vmem:[%s818 + $0x8] sm:$0xf] %v823
                %v825 = vld [vmem:[%s817 + $0xc] sm:$0xf]
                %826 = vst [vmem:[%s818 + $0xc] sm:$0xf] %v825
                %v827 = vld [vmem:[%s817 + $0x10] sm:$0xf]
                %828 = vst [vmem:[%s818 + $0x10] sm:$0xf] %v827
                %v829 = vld [vmem:[%s817 + $0x14] sm:$0xf]
                %830 = vst [vmem:[%s818 + $0x14] sm:$0xf] %v829
                %v831 = vld [vmem:[%s817 + $0x18] sm:$0xf]
                %832 = vst [vmem:[%s818 + $0x18] sm:$0xf] %v831
                %v833 = vld [vmem:[%s817 + $0x1c] sm:$0xf]
                %834 = vst [vmem:[%s818 + $0x1c] sm:$0xf] %v833
                %v835 = vld [vmem:[%s817 + $0x20] sm:$0xf]
                %836 = vst [vmem:[%s818 + $0x20] sm:$0xf] %v835
                %v837 = vld [vmem:[%s817 + $0x24] sm:$0xf]
                %838 = vst [vmem:[%s818 + $0x24] sm:$0xf] %v837
                %v839 = vld [vmem:[%s817 + $0x28] sm:$0xf]
                %840 = vst [vmem:[%s818 + $0x28] sm:$0xf] %v839
                %v841 = vld [vmem:[%s817 + $0x2c] sm:$0xf]
                %842 = vst [vmem:[%s818 + $0x2c] sm:$0xf] %v841
                %v843 = vld [vmem:[%s817 + $0x30] sm:$0xf]
                %844 = vst [vmem:[%s818 + $0x30] sm:$0xf] %v843
                %v845 = vld [vmem:[%s817 + $0x34] sm:$0xf]
                %846 = vst [vmem:[%s818 + $0x34] sm:$0xf] %v845
                %v847 = vld [vmem:[%s817 + $0x38] sm:$0xf]
                %848 = vst [vmem:[%s818 + $0x38] sm:$0xf] %v847
                %v849 = vld [vmem:[%s817 + $0x3c] sm:$0xf]
                %850 = vst [vmem:[%s818 + $0x3c] sm:$0xf] %v849
                %v851 = vld [vmem:[%s817 + $0x80] sm:$0xf]
                %852 = vst [vmem:[%s818 + $0x40] sm:$0xf] %v851
                %v853 = vld [vmem:[%s817 + $0x84] sm:$0xf]
                %854 = vst [vmem:[%s818 + $0x44] sm:$0xf] %v853
                %v855 = vld [vmem:[%s817 + $0x88] sm:$0xf]
                %856 = vst [vmem:[%s818 + $0x48] sm:$0xf] %v855
                %v857 = vld [vmem:[%s817 + $0x8c] sm:$0xf]
                %858 = vst [vmem:[%s818 + $0x4c] sm:$0xf] %v857
                %v859 = vld [vmem:[%s817 + $0x90] sm:$0xf]
                %860 = vst [vmem:[%s818 + $0x50] sm:$0xf] %v859
                %v861 = vld [vmem:[%s817 + $0x94] sm:$0xf]
                %862 = vst [vmem:[%s818 + $0x54] sm:$0xf] %v861
                %v863 = vld [vmem:[%s817 + $0x98] sm:$0xf]
                %864 = vst [vmem:[%s818 + $0x58] sm:$0xf] %v863
                %v865 = vld [vmem:[%s817 + $0x9c] sm:$0xf]
                %866 = vst [vmem:[%s818 + $0x5c] sm:$0xf] %v865
                %v867 = vld [vmem:[%s817 + $0xa0] sm:$0xf]
                %868 = vst [vmem:[%s818 + $0x60] sm:$0xf] %v867
                %v869 = vld [vmem:[%s817 + $0xa4] sm:$0xf]
                %870 = vst [vmem:[%s818 + $0x64] sm:$0xf] %v869
                %v871 = vld [vmem:[%s817 + $0xa8] sm:$0xf]
                %872 = vst [vmem:[%s818 + $0x68] sm:$0xf] %v871
                %v873 = vld [vmem:[%s817 + $0xac] sm:$0xf]
                %874 = vst [vmem:[%s818 + $0x6c] sm:$0xf] %v873
                %v875 = vld [vmem:[%s817 + $0xb0] sm:$0xf]
                %876 = vst [vmem:[%s818 + $0x70] sm:$0xf] %v875
                %v877 = vld [vmem:[%s817 + $0xb4] sm:$0xf]
                %878 = vst [vmem:[%s818 + $0x74] sm:$0xf] %v877
                %v879 = vld [vmem:[%s817 + $0xb8] sm:$0xf]
                %880 = vst [vmem:[%s818 + $0x78] sm:$0xf] %v879
                %v881 = vld [vmem:[%s817 + $0xbc] sm:$0xf]
                %882 = vst [vmem:[%s818 + $0x7c] sm:$0xf] %v881
                %v883 = vld [vmem:[%s817 + $0x100] sm:$0xf]
                %884 = vst [vmem:[%s818 + $0x80] sm:$0xf] %v883
                %v885 = vld [vmem:[%s817 + $0x104] sm:$0xf]
                %886 = vst [vmem:[%s818 + $0x84] sm:$0xf] %v885
                %v887 = vld [vmem:[%s817 + $0x108] sm:$0xf]
                %888 = vst [vmem:[%s818 + $0x88] sm:$0xf] %v887
                %v889 = vld [vmem:[%s817 + $0x10c] sm:$0xf]
                %890 = vst [vmem:[%s818 + $0x8c] sm:$0xf] %v889
                %v891 = vld [vmem:[%s817 + $0x110] sm:$0xf]
                %892 = vst [vmem:[%s818 + $0x90] sm:$0xf] %v891
                %v893 = vld [vmem:[%s817 + $0x114] sm:$0xf]
                %894 = vst [vmem:[%s818 + $0x94] sm:$0xf] %v893
                %v895 = vld [vmem:[%s817 + $0x118] sm:$0xf]
                %896 = vst [vmem:[%s818 + $0x98] sm:$0xf] %v895
                %v897 = vld [vmem:[%s817 + $0x11c] sm:$0xf]
                %898 = vst [vmem:[%s818 + $0x9c] sm:$0xf] %v897
                %v899 = vld [vmem:[%s817 + $0x120] sm:$0xf]
                %900 = vst [vmem:[%s818 + $0xa0] sm:$0xf] %v899
                %v901 = vld [vmem:[%s817 + $0x124] sm:$0xf]
                %902 = vst [vmem:[%s818 + $0xa4] sm:$0xf] %v901
                %v903 = vld [vmem:[%s817 + $0x128] sm:$0xf]
                %904 = vst [vmem:[%s818 + $0xa8] sm:$0xf] %v903
                %v905 = vld [vmem:[%s817 + $0x12c] sm:$0xf]
                %906 = vst [vmem:[%s818 + $0xac] sm:$0xf] %v905
                %v907 = vld [vmem:[%s817 + $0x130] sm:$0xf]
                %908 = vst [vmem:[%s818 + $0xb0] sm:$0xf] %v907
                %v909 = vld [vmem:[%s817 + $0x134] sm:$0xf]
                %910 = vst [vmem:[%s818 + $0xb4] sm:$0xf] %v909
                %v911 = vld [vmem:[%s817 + $0x138] sm:$0xf]
                %912 = vst [vmem:[%s818 + $0xb8] sm:$0xf] %v911
                %v913 = vld [vmem:[%s817 + $0x13c] sm:$0xf]
                %914 = vst [vmem:[%s818 + $0xbc] sm:$0xf] %v913
                %v915 = vld [vmem:[%s817 + $0x180] sm:$0xf]
                %916 = vst [vmem:[%s818 + $0xc0] sm:$0xf] %v915
                %v917 = vld [vmem:[%s817 + $0x184] sm:$0xf]
                %918 = vst [vmem:[%s818 + $0xc4] sm:$0xf] %v917
                %v919 = vld [vmem:[%s817 + $0x188] sm:$0xf]
                %920 = vst [vmem:[%s818 + $0xc8] sm:$0xf] %v919
                %v921 = vld [vmem:[%s817 + $0x18c] sm:$0xf]
                %922 = vst [vmem:[%s818 + $0xcc] sm:$0xf] %v921
                %v923 = vld [vmem:[%s817 + $0x190] sm:$0xf]
                %924 = vst [vmem:[%s818 + $0xd0] sm:$0xf] %v923
                %v925 = vld [vmem:[%s817 + $0x194] sm:$0xf]
                %926 = vst [vmem:[%s818 + $0xd4] sm:$0xf] %v925
                %v927 = vld [vmem:[%s817 + $0x198] sm:$0xf]
                %928 = vst [vmem:[%s818 + $0xd8] sm:$0xf] %v927
                %v929 = vld [vmem:[%s817 + $0x19c] sm:$0xf]
                %930 = vst [vmem:[%s818 + $0xdc] sm:$0xf] %v929
                %v931 = vld [vmem:[%s817 + $0x1a0] sm:$0xf]
                %932 = vst [vmem:[%s818 + $0xe0] sm:$0xf] %v931
                %v933 = vld [vmem:[%s817 + $0x1a4] sm:$0xf]
                %934 = vst [vmem:[%s818 + $0xe4] sm:$0xf] %v933
                %v935 = vld [vmem:[%s817 + $0x1a8] sm:$0xf]
                %936 = vst [vmem:[%s818 + $0xe8] sm:$0xf] %v935
                %v937 = vld [vmem:[%s817 + $0x1ac] sm:$0xf]
                %938 = vst [vmem:[%s818 + $0xec] sm:$0xf] %v937
                %v939 = vld [vmem:[%s817 + $0x1b0] sm:$0xf]
                %940 = vst [vmem:[%s818 + $0xf0] sm:$0xf] %v939
                %v941 = vld [vmem:[%s817 + $0x1b4] sm:$0xf]
                %942 = vst [vmem:[%s818 + $0xf4] sm:$0xf] %v941
                %v943 = vld [vmem:[%s817 + $0x1b8] sm:$0xf]
                %944 = vst [vmem:[%s818 + $0xf8] sm:$0xf] %v943
                %v945 = vld [vmem:[%s817 + $0x1bc] sm:$0xf]
                %946 = vst [vmem:[%s818 + $0xfc] sm:$0xf] %v945
              $region116: #{tpu_custom_call.1} parent=110 // loop_footer
                %s816 = sadd.s32 1, %s812
              $region117: #{tpu_custom_call.1} parent=110 // loop_footer_branch
                %811 = sbr.rel target = $region113
              $region118: #{tpu_custom_call.1} parent=110 // loop_exit
                _
            $region111: #{tpu_custom_call.1} parent=102 // pred_fallthru
              _
          $region103: #{tpu_custom_call.1} parent=98 // pred_fallthru
            _
          %1094 = vnop
        $region99: #{tpu_custom_call.1} parent=15 // pred_fallthru
          _
        // Predicated region
        $region137: #{tpu_custom_call.1} parent=15 // pred_check
          %p1095 = pneg %p140
        $region138: #{tpu_custom_call.1} parent=15 // pred_check_branch
          %1097 = sbr.rel (%p1095) target = $region140
        $region139: #{tpu_custom_call.1} parent=15 // pred_region
          %s1098 = sand.u32 %s130, 1
          %s1099 = sand.u32 %s130, 1
          %s1100 = smul.addr %s1099, 128
          %s1101 = scalar_lea.vmem [#allocation8], %s1100
          %s1102 = smul.u32 16, %s21
          %s1103 = smul.addr %s1102, 2
          %s1104 = sadd.s32 %s22, %s1103
          %s1105 = smul.addr %s20, 64
          %s1106 = sadd.s32 %s1104, %s1105
          %s1107 = smul.addr %s1106, 8
          %s1108 = scalar_lea.vmem %s3, %s1107
          // Predicated region
          $region141: #{tpu_custom_call.1} parent=139 // pred_check
            _
          $region142: #{tpu_custom_call.1} parent=139 // pred_check_branch
            %1110 = sbr.rel (0) target = $region144
          $region143: #{tpu_custom_call.1} parent=139 // pred_region
            // Predicated region
            $region145: #{tpu_custom_call.1} parent=143 // pred_check
              _
            $region146: #{tpu_custom_call.1} parent=143 // pred_check_branch
              %1112 = sbr.rel (0) target = $region148
            $region147: #{tpu_custom_call.1} parent=143 // pred_region
              // Predicated region
              $region160: #{tpu_custom_call.1} parent=147 // pred_check
                _
              $region161: #{tpu_custom_call.1} parent=147 // pred_check_branch
                %1157 = sbr.rel (0) target = $region163
              $region162: #{tpu_custom_call.1} parent=147 // pred_region
                loop: start=0, step=1, limit=1
                $region164: #{tpu_custom_call.1} parent=162 // loop_pre_header
                  _
                $region165: #{tpu_custom_call.1} parent=162 // loop_header
                  %s1159 = sphi 0, %s1163
                  %p1160 = scmp.ge.s32.totalorder %s1159, 1
                  %s1164 = sphi %s1108, %s1108
                  %s1165 = sphi %s1101, %s1101
                $region166: #{tpu_custom_call.1} parent=162 // loop_header_branch
                  %1162 = sbr.rel (%p1160) target = $region170
                $region167: #{tpu_custom_call.1} parent=162 // loop_body
                  %v1166 = vld [vmem:[%s1164] sm:$0xff]
                  %1167 = vst [vmem:[%s1165] sm:$0xff] %v1166
                  %v1168 = vld [vmem:[%s1164 + $0x10] sm:$0xff]
                  %1169 = vst [vmem:[%s1165 + $0x8] sm:$0xff] %v1168
                  %v1170 = vld [vmem:[%s1164 + $0x20] sm:$0xff]
                  %1171 = vst [vmem:[%s1165 + $0x10] sm:$0xff] %v1170
                  %v1172 = vld [vmem:[%s1164 + $0x30] sm:$0xff]
                  %1173 = vst [vmem:[%s1165 + $0x18] sm:$0xff] %v1172
                  %v1174 = vld [vmem:[%s1164 + $0x40] sm:$0xff]
                  %1175 = vst [vmem:[%s1165 + $0x20] sm:$0xff] %v1174
                  %v1176 = vld [vmem:[%s1164 + $0x50] sm:$0xff]
                  %1177 = vst [vmem:[%s1165 + $0x28] sm:$0xff] %v1176
                  %v1178 = vld [vmem:[%s1164 + $0x60] sm:$0xff]
                  %1179 = vst [vmem:[%s1165 + $0x30] sm:$0xff] %v1178
                  %v1180 = vld [vmem:[%s1164 + $0x70] sm:$0xff]
                  %1181 = vst [vmem:[%s1165 + $0x38] sm:$0xff] %v1180
                  %v1182 = vld [vmem:[%s1164 + $0x80] sm:$0xff]
                  %1183 = vst [vmem:[%s1165 + $0x40] sm:$0xff] %v1182
                  %v1184 = vld [vmem:[%s1164 + $0x90] sm:$0xff]
                  %1185 = vst [vmem:[%s1165 + $0x48] sm:$0xff] %v1184
                  %v1186 = vld [vmem:[%s1164 + $0xa0] sm:$0xff]
                  %1187 = vst [vmem:[%s1165 + $0x50] sm:$0xff] %v1186
                  %v1188 = vld [vmem:[%s1164 + $0xb0] sm:$0xff]
                  %1189 = vst [vmem:[%s1165 + $0x58] sm:$0xff] %v1188
                  %v1190 = vld [vmem:[%s1164 + $0xc0] sm:$0xff]
                  %1191 = vst [vmem:[%s1165 + $0x60] sm:$0xff] %v1190
                  %v1192 = vld [vmem:[%s1164 + $0xd0] sm:$0xff]
                  %1193 = vst [vmem:[%s1165 + $0x68] sm:$0xff] %v1192
                  %v1194 = vld [vmem:[%s1164 + $0xe0] sm:$0xff]
                  %1195 = vst [vmem:[%s1165 + $0x70] sm:$0xff] %v1194
                  %v1196 = vld [vmem:[%s1164 + $0xf0] sm:$0xff]
                  %1197 = vst [vmem:[%s1165 + $0x78] sm:$0xff] %v1196
                $region168: #{tpu_custom_call.1} parent=162 // loop_footer
                  %s1163 = sadd.s32 1, %s1159
                $region169: #{tpu_custom_call.1} parent=162 // loop_footer_branch
                  %1158 = sbr.rel target = $region165
                $region170: #{tpu_custom_call.1} parent=162 // loop_exit
                  _
              $region163: #{tpu_custom_call.1} parent=147 // pred_fallthru
                _
              // Predicated region
              $region171: #{tpu_custom_call.1} parent=147 // pred_check
                _
              $region172: #{tpu_custom_call.1} parent=147 // pred_check_branch
                %1199 = sbr.rel target = $region174
              $region173: #{tpu_custom_call.1} parent=147 // pred_region
                _
              $region174: #{tpu_custom_call.1} parent=147 // pred_fallthru
                _
            $region148: #{tpu_custom_call.1} parent=143 // pred_fallthru
              _
            // Predicated region
            $region149: #{tpu_custom_call.1} parent=143 // pred_check
              _
            $region150: #{tpu_custom_call.1} parent=143 // pred_check_branch
              %1114 = sbr.rel target = $region152
            $region151: #{tpu_custom_call.1} parent=143 // pred_region
              loop: start=0, step=1, limit=1
              $region153: #{tpu_custom_call.1} parent=151 // loop_pre_header
                _
              $region154: #{tpu_custom_call.1} parent=151 // loop_header
                %s1117 = sphi 0, %s1121
                %p1118 = scmp.ge.s32.totalorder %s1117, 1
                %s1122 = sphi %s1108, %s1108
                %s1123 = sphi %s1101, %s1101
              $region155: #{tpu_custom_call.1} parent=151 // loop_header_branch
                %1120 = sbr.rel (%p1118) target = $region159
              $region156: #{tpu_custom_call.1} parent=151 // loop_body
                %v1124 = vld [vmem:[%s1122] sm:$0xff]
                %1125 = vst [vmem:[%s1123] sm:$0xff] %v1124
                %v1126 = vld [vmem:[%s1122 + $0x10] sm:$0xff]
                %1127 = vst [vmem:[%s1123 + $0x8] sm:$0xff] %v1126
                %v1128 = vld [vmem:[%s1122 + $0x20] sm:$0xff]
                %1129 = vst [vmem:[%s1123 + $0x10] sm:$0xff] %v1128
                %v1130 = vld [vmem:[%s1122 + $0x30] sm:$0xff]
                %1131 = vst [vmem:[%s1123 + $0x18] sm:$0xff] %v1130
                %v1132 = vld [vmem:[%s1122 + $0x40] sm:$0xff]
                %1133 = vst [vmem:[%s1123 + $0x20] sm:$0xff] %v1132
                %v1134 = vld [vmem:[%s1122 + $0x50] sm:$0xff]
                %1135 = vst [vmem:[%s1123 + $0x28] sm:$0xff] %v1134
                %v1136 = vld [vmem:[%s1122 + $0x60] sm:$0xff]
                %1137 = vst [vmem:[%s1123 + $0x30] sm:$0xff] %v1136
                %v1138 = vld [vmem:[%s1122 + $0x70] sm:$0xff]
                %1139 = vst [vmem:[%s1123 + $0x38] sm:$0xff] %v1138
                %v1140 = vld [vmem:[%s1122 + $0x80] sm:$0xff]
                %1141 = vst [vmem:[%s1123 + $0x40] sm:$0xff] %v1140
                %v1142 = vld [vmem:[%s1122 + $0x90] sm:$0xff]
                %1143 = vst [vmem:[%s1123 + $0x48] sm:$0xff] %v1142
                %v1144 = vld [vmem:[%s1122 + $0xa0] sm:$0xff]
                %1145 = vst [vmem:[%s1123 + $0x50] sm:$0xff] %v1144
                %v1146 = vld [vmem:[%s1122 + $0xb0] sm:$0xff]
                %1147 = vst [vmem:[%s1123 + $0x58] sm:$0xff] %v1146
                %v1148 = vld [vmem:[%s1122 + $0xc0] sm:$0xff]
                %1149 = vst [vmem:[%s1123 + $0x60] sm:$0xff] %v1148
                %v1150 = vld [vmem:[%s1122 + $0xd0] sm:$0xff]
                %1151 = vst [vmem:[%s1123 + $0x68] sm:$0xff] %v1150
                %v1152 = vld [vmem:[%s1122 + $0xe0] sm:$0xff]
                %1153 = vst [vmem:[%s1123 + $0x70] sm:$0xff] %v1152
                %v1154 = vld [vmem:[%s1122 + $0xf0] sm:$0xff]
                %1155 = vst [vmem:[%s1123 + $0x78] sm:$0xff] %v1154
              $region157: #{tpu_custom_call.1} parent=151 // loop_footer
                %s1121 = sadd.s32 1, %s1117
              $region158: #{tpu_custom_call.1} parent=151 // loop_footer_branch
                %1116 = sbr.rel target = $region154
              $region159: #{tpu_custom_call.1} parent=151 // loop_exit
                _
            $region152: #{tpu_custom_call.1} parent=143 // pred_fallthru
              _
          $region144: #{tpu_custom_call.1} parent=139 // pred_fallthru
            _
          %1200 = vnop
        $region140: #{tpu_custom_call.1} parent=15 // pred_fallthru
          _
      $region16: #{tpu_custom_call.1} parent=5 // pred_fallthru
        _
      %p1201 = scmp.le.s32.totalorder 1, %s13
      %p1202 = scmp.lt.s32.totalorder %s13, 9
      %p1203 = pnand %p1201, %p1202
      %p1204 = pneg %p1203
      // Predicated region
      $region175: #{tpu_custom_call.1} parent=5 // pred_check
        _
      $region176: #{tpu_custom_call.1} parent=5 // pred_check_branch
        %1206 = sbr.rel (%p1203) target = $region178
      $region177: #{tpu_custom_call.1} parent=5 // pred_region
        %s1207 = ssub.s32 %s13, 1
        %s1208 = sand.u32 %s47, 1
        %s1209 = sand.u32 %s47, 1
        %s1210 = smul.addr %s1209, 512
        %s1211 = scalar_lea.vmem [#allocation5], %s1210
        // Predicated region
        $region179: #{tpu_custom_call.1} parent=177 // pred_check
          %p1212 = pneg %p60
        $region180: #{tpu_custom_call.1} parent=177 // pred_check_branch
          %1214 = sbr.rel (%p1212) target = $region182
        $region181: #{tpu_custom_call.1} parent=177 // pred_region
          _
        $region182: #{tpu_custom_call.1} parent=177 // pred_fallthru
          _
        %s1215 = sand.u32 %s75, 1
        %s1216 = sand.u32 %s75, 1
        %s1217 = smul.addr %s1216, 256
        %s1218 = scalar_lea.vmem [#allocation6], %s1217
        // Predicated region
        $region183: #{tpu_custom_call.1} parent=177 // pred_check
          %p1219 = pneg %p88
        $region184: #{tpu_custom_call.1} parent=177 // pred_check_branch
          %1221 = sbr.rel (%p1219) target = $region186
        $region185: #{tpu_custom_call.1} parent=177 // pred_region
          _
        $region186: #{tpu_custom_call.1} parent=177 // pred_fallthru
          _
        %s1222 = sand.u32 %s103, 1
        %s1223 = sand.u32 %s103, 1
        %s1224 = smul.addr %s1223, 256
        %s1225 = scalar_lea.vmem [#allocation7], %s1224
        // Predicated region
        $region187: #{tpu_custom_call.1} parent=177 // pred_check
          %p1226 = pneg %p116
        $region188: #{tpu_custom_call.1} parent=177 // pred_check_branch
          %1228 = sbr.rel (%p1226) target = $region190
        $region189: #{tpu_custom_call.1} parent=177 // pred_region
          _
        $region190: #{tpu_custom_call.1} parent=177 // pred_fallthru
          _
        %s1229 = sand.u32 %s133, 1
        %s1230 = sand.u32 %s133, 1
        %s1231 = smul.addr %s1230, 128
        %s1232 = scalar_lea.vmem [#allocation8], %s1231
        // Predicated region
        $region191: #{tpu_custom_call.1} parent=177 // pred_check
          %p1233 = pneg %p146
        $region192: #{tpu_custom_call.1} parent=177 // pred_check_branch
          %1235 = sbr.rel (%p1233) target = $region194
        $region193: #{tpu_custom_call.1} parent=177 // pred_region
          _
        $region194: #{tpu_custom_call.1} parent=177 // pred_fallthru
          _
        %s1236 = sand.u32 %s47, 1
        %s1237 = sand.u32 %s47, 1
        %s1238 = smul.addr %s1237, 512
        %s1239 = scalar_lea.vmem [#allocation5], %s1238
        %p1240 = pneg %p60
        %p1241 = pneg %p57
        %s1242 = sand.u32 %s75, 1
        %s1243 = sand.u32 %s75, 1
        %s1244 = smul.addr %s1243, 256
        %s1245 = scalar_lea.vmem [#allocation6], %s1244
        %p1246 = pneg %p88
        %p1247 = pneg %p85
        %s1248 = sand.u32 %s103, 1
        %s1249 = sand.u32 %s103, 1
        %s1250 = smul.addr %s1249, 256
        %s1251 = scalar_lea.vmem [#allocation7], %s1250
        %p1252 = pneg %p116
        %p1253 = pneg %p113
        %s1254 = sand.u32 %s133, 1
        %s1255 = sand.u32 %s133, 1
        %s1256 = smul.addr %s1255, 128
        %s1257 = scalar_lea.vmem [#allocation8], %s1256
        %p1258 = pneg %p146
        %p1259 = pneg %p143
        %p1260 = pneg %p174
        %p1261 = pneg %p171
        %s1262 = sand.u32 %s161, 1
        %s1263 = scalar_lea.sflag [#allocation10], %s1262
        %s1264 = sand.u32 %s161, 1
        %s1265 = smul.addr %s1264, 128
        %s1266 = scalar_lea.vmem [#allocation9], %s1265
        %s1267 = smul.u32 16, %s24
        %s1268 = smul.u32 16, %s25
        %s1269 = smul.u32 16, %s25
        %s1270 = smul.u32 16, %s24
        %s1271 = smul.u32 16, %s24
        %p1273 = scmp.eq.s32.totalorder %s25, 0
        // Predicated region
        $region195: #{tpu_custom_call.1} parent=177 // pred_check
          %p1274 = pneg %p1273
        $region196: #{tpu_custom_call.1} parent=177 // pred_check_branch
          %1276 = sbr.rel (%p1274) target = $region198
        $region197: #{tpu_custom_call.1} parent=177 // pred_region
          %v1277 = vld [vmem:[%s1211] sm:$0xff]
          %v1278 = vld [vmem:[%s1211 + $0x8] sm:$0xff]
          %v1279 = vld [vmem:[%s1211 + $0x10] sm:$0xff]
          %v1280 = vld [vmem:[%s1211 + $0x18] sm:$0xff]
          %v1281 = vld [vmem:[%s1211 + $0x20] sm:$0xff]
          %v1282 = vld [vmem:[%s1211 + $0x28] sm:$0xff]
          %v1283 = vld [vmem:[%s1211 + $0x30] sm:$0xff]
          %v1284 = vld [vmem:[%s1211 + $0x38] sm:$0xff]
          %v1285 = vld [vmem:[%s1211 + $0x40] sm:$0xff]
          %v1286 = vld [vmem:[%s1211 + $0x48] sm:$0xff]
          %v1287 = vld [vmem:[%s1211 + $0x50] sm:$0xff]
          %v1288 = vld [vmem:[%s1211 + $0x58] sm:$0xff]
          %v1289 = vld [vmem:[%s1211 + $0x60] sm:$0xff]
          %v1290 = vld [vmem:[%s1211 + $0x68] sm:$0xff]
          %v1291 = vld [vmem:[%s1211 + $0x70] sm:$0xff]
          %v1292 = vld [vmem:[%s1211 + $0x78] sm:$0xff]
          %v1293 = vld [vmem:[%s1211 + $0x80] sm:$0xff]
          %v1294 = vld [vmem:[%s1211 + $0x88] sm:$0xff]
          %v1295 = vld [vmem:[%s1211 + $0x90] sm:$0xff]
          %v1296 = vld [vmem:[%s1211 + $0x98] sm:$0xff]
          %v1297 = vld [vmem:[%s1211 + $0xa0] sm:$0xff]
          %v1298 = vld [vmem:[%s1211 + $0xa8] sm:$0xff]
          %v1299 = vld [vmem:[%s1211 + $0xb0] sm:$0xff]
          %v1300 = vld [vmem:[%s1211 + $0xb8] sm:$0xff]
          %v1301 = vld [vmem:[%s1211 + $0xc0] sm:$0xff]
          %v1302 = vld [vmem:[%s1211 + $0xc8] sm:$0xff]
          %v1303 = vld [vmem:[%s1211 + $0xd0] sm:$0xff]
          %v1304 = vld [vmem:[%s1211 + $0xd8] sm:$0xff]
          %v1305 = vld [vmem:[%s1211 + $0xe0] sm:$0xff]
          %v1306 = vld [vmem:[%s1211 + $0xe8] sm:$0xff]
          %v1307 = vld [vmem:[%s1211 + $0xf0] sm:$0xff]
          %v1308 = vld [vmem:[%s1211 + $0xf8] sm:$0xff]
          %v1309 = vld [vmem:[%s1211 + $0x100] sm:$0xff]
          %v1310 = vld [vmem:[%s1211 + $0x108] sm:$0xff]
          %v1311 = vld [vmem:[%s1211 + $0x110] sm:$0xff]
          %v1312 = vld [vmem:[%s1211 + $0x118] sm:$0xff]
          %v1313 = vld [vmem:[%s1211 + $0x120] sm:$0xff]
          %v1314 = vld [vmem:[%s1211 + $0x128] sm:$0xff]
          %v1315 = vld [vmem:[%s1211 + $0x130] sm:$0xff]
          %v1316 = vld [vmem:[%s1211 + $0x138] sm:$0xff]
          %v1317 = vld [vmem:[%s1211 + $0x140] sm:$0xff]
          %v1318 = vld [vmem:[%s1211 + $0x148] sm:$0xff]
          %v1319 = vld [vmem:[%s1211 + $0x150] sm:$0xff]
          %v1320 = vld [vmem:[%s1211 + $0x158] sm:$0xff]
          %v1321 = vld [vmem:[%s1211 + $0x160] sm:$0xff]
          %v1322 = vld [vmem:[%s1211 + $0x168] sm:$0xff]
          %v1323 = vld [vmem:[%s1211 + $0x170] sm:$0xff]
          %v1324 = vld [vmem:[%s1211 + $0x178] sm:$0xff]
          %v1325 = vld [vmem:[%s1211 + $0x180] sm:$0xff]
          %v1326 = vld [vmem:[%s1211 + $0x188] sm:$0xff]
          %v1327 = vld [vmem:[%s1211 + $0x190] sm:$0xff]
          %v1328 = vld [vmem:[%s1211 + $0x198] sm:$0xff]
          %v1329 = vld [vmem:[%s1211 + $0x1a0] sm:$0xff]
          %v1330 = vld [vmem:[%s1211 + $0x1a8] sm:$0xff]
          %v1331 = vld [vmem:[%s1211 + $0x1b0] sm:$0xff]
          %v1332 = vld [vmem:[%s1211 + $0x1b8] sm:$0xff]
          %v1333 = vld [vmem:[%s1211 + $0x1c0] sm:$0xff]
          %v1334 = vld [vmem:[%s1211 + $0x1c8] sm:$0xff]
          %v1335 = vld [vmem:[%s1211 + $0x1d0] sm:$0xff]
          %v1336 = vld [vmem:[%s1211 + $0x1d8] sm:$0xff]
          %v1337 = vld [vmem:[%s1211 + $0x1e0] sm:$0xff]
          %v1338 = vld [vmem:[%s1211 + $0x1e8] sm:$0xff]
          %v1339 = vld [vmem:[%s1211 + $0x1f0] sm:$0xff]
          %v1340 = vld [vmem:[%s1211 + $0x1f8] sm:$0xff]
          %v1341 = vmul.f32 %v1277, 0.25503486
          %v1342 = vmul.f32 %v1278, 0.25503486
          %v1343 = vmul.f32 %v1279, 0.25503486
          %v1344 = vmul.f32 %v1280, 0.25503486
          %v1345 = vmul.f32 %v1281, 0.25503486
          %v1346 = vmul.f32 %v1282, 0.25503486
          %v1347 = vmul.f32 %v1283, 0.25503486
          %v1348 = vmul.f32 %v1284, 0.25503486
          %v1349 = vmul.f32 %v1285, 0.25503486
          %v1350 = vmul.f32 %v1286, 0.25503486
          %v1351 = vmul.f32 %v1287, 0.25503486
          %v1352 = vmul.f32 %v1288, 0.25503486
          %v1353 = vmul.f32 %v1289, 0.25503486
          %v1354 = vmul.f32 %v1290, 0.25503486
          %v1355 = vmul.f32 %v1291, 0.25503486
          %v1356 = vmul.f32 %v1292, 0.25503486
          %v1357 = vmul.f32 %v1293, 0.25503486
          %v1358 = vmul.f32 %v1294, 0.25503486
          %v1359 = vmul.f32 %v1295, 0.25503486
          %v1360 = vmul.f32 %v1296, 0.25503486
          %v1361 = vmul.f32 %v1297, 0.25503486
          %v1362 = vmul.f32 %v1298, 0.25503486
          %v1363 = vmul.f32 %v1299, 0.25503486
          %v1364 = vmul.f32 %v1300, 0.25503486
          %v1365 = vmul.f32 %v1301, 0.25503486
          %v1366 = vmul.f32 %v1302, 0.25503486
          %v1367 = vmul.f32 %v1303, 0.25503486
          %v1368 = vmul.f32 %v1304, 0.25503486
          %v1369 = vmul.f32 %v1305, 0.25503486
          %v1370 = vmul.f32 %v1306, 0.25503486
          %v1371 = vmul.f32 %v1307, 0.25503486
          %v1372 = vmul.f32 %v1308, 0.25503486
          %v1373 = vmul.f32 %v1309, 0.25503486
          %v1374 = vmul.f32 %v1310, 0.25503486
          %v1375 = vmul.f32 %v1311, 0.25503486
          %v1376 = vmul.f32 %v1312, 0.25503486
          %v1377 = vmul.f32 %v1313, 0.25503486
          %v1378 = vmul.f32 %v1314, 0.25503486
          %v1379 = vmul.f32 %v1315, 0.25503486
          %v1380 = vmul.f32 %v1316, 0.25503486
          %v1381 = vmul.f32 %v1317, 0.25503486
          %v1382 = vmul.f32 %v1318, 0.25503486
          %v1383 = vmul.f32 %v1319, 0.25503486
          %v1384 = vmul.f32 %v1320, 0.25503486
          %v1385 = vmul.f32 %v1321, 0.25503486
          %v1386 = vmul.f32 %v1322, 0.25503486
          %v1387 = vmul.f32 %v1323, 0.25503486
          %v1388 = vmul.f32 %v1324, 0.25503486
          %v1389 = vmul.f32 %v1325, 0.25503486
          %v1390 = vmul.f32 %v1326, 0.25503486
          %v1391 = vmul.f32 %v1327, 0.25503486
          %v1392 = vmul.f32 %v1328, 0.25503486
          %v1393 = vmul.f32 %v1329, 0.25503486
          %v1394 = vmul.f32 %v1330, 0.25503486
          %v1395 = vmul.f32 %v1331, 0.25503486
          %v1396 = vmul.f32 %v1332, 0.25503486
          %v1397 = vmul.f32 %v1333, 0.25503486
          %v1398 = vmul.f32 %v1334, 0.25503486
          %v1399 = vmul.f32 %v1335, 0.25503486
          %v1400 = vmul.f32 %v1336, 0.25503486
          %v1401 = vmul.f32 %v1337, 0.25503486
          %v1402 = vmul.f32 %v1338, 0.25503486
          %v1403 = vmul.f32 %v1339, 0.25503486
          %v1404 = vmul.f32 %v1340, 0.25503486
          %v1405 = vpack.c.bf16 %v1342, %v1341
          %v1406 = vpack.c.bf16 %v1344, %v1343
          %v1407 = vpack.c.bf16 %v1346, %v1345
          %v1408 = vpack.c.bf16 %v1348, %v1347
          %v1409 = vpack.c.bf16 %v1350, %v1349
          %v1410 = vpack.c.bf16 %v1352, %v1351
          %v1411 = vpack.c.bf16 %v1354, %v1353
          %v1412 = vpack.c.bf16 %v1356, %v1355
          %v1413 = vpack.c.bf16 %v1358, %v1357
          %v1414 = vpack.c.bf16 %v1360, %v1359
          %v1415 = vpack.c.bf16 %v1362, %v1361
          %v1416 = vpack.c.bf16 %v1364, %v1363
          %v1417 = vpack.c.bf16 %v1366, %v1365
          %v1418 = vpack.c.bf16 %v1368, %v1367
          %v1419 = vpack.c.bf16 %v1370, %v1369
          %v1420 = vpack.c.bf16 %v1372, %v1371
          %v1421 = vpack.c.bf16 %v1374, %v1373
          %v1422 = vpack.c.bf16 %v1376, %v1375
          %v1423 = vpack.c.bf16 %v1378, %v1377
          %v1424 = vpack.c.bf16 %v1380, %v1379
          %v1425 = vpack.c.bf16 %v1382, %v1381
          %v1426 = vpack.c.bf16 %v1384, %v1383
          %v1427 = vpack.c.bf16 %v1386, %v1385
          %v1428 = vpack.c.bf16 %v1388, %v1387
          %v1429 = vpack.c.bf16 %v1390, %v1389
          %v1430 = vpack.c.bf16 %v1392, %v1391
          %v1431 = vpack.c.bf16 %v1394, %v1393
          %v1432 = vpack.c.bf16 %v1396, %v1395
          %v1433 = vpack.c.bf16 %v1398, %v1397
          %v1434 = vpack.c.bf16 %v1400, %v1399
          %v1435 = vpack.c.bf16 %v1402, %v1401
          %v1436 = vpack.c.bf16 %v1404, %v1403
          %vm1437 = vcmask 261120
          %1438 = vst.msk [vmem:[#allocation2] sm:$0xff] %vm1437, %v1405
          %1439 = vst.msk [vmem:[#allocation2 + $0x8] sm:$0xff] %vm1437, %v1406
          %1440 = vst.msk [vmem:[#allocation2 + $0x10] sm:$0xff] %vm1437, %v1407
          %1441 = vst.msk [vmem:[#allocation2 + $0x18] sm:$0xff] %vm1437, %v1408
          %1442 = vst.msk [vmem:[#allocation2 + $0x20] sm:$0xff] %vm1437, %v1409
          %1443 = vst.msk [vmem:[#allocation2 + $0x28] sm:$0xff] %vm1437, %v1410
          %1444 = vst.msk [vmem:[#allocation2 + $0x30] sm:$0xff] %vm1437, %v1411
          %1445 = vst.msk [vmem:[#allocation2 + $0x38] sm:$0xff] %vm1437, %v1412
          %1446 = vst.msk [vmem:[#allocation2 + $0x40] sm:$0xff] %vm1437, %v1413
          %1447 = vst.msk [vmem:[#allocation2 + $0x48] sm:$0xff] %vm1437, %v1414
          %1448 = vst.msk [vmem:[#allocation2 + $0x50] sm:$0xff] %vm1437, %v1415
          %1449 = vst.msk [vmem:[#allocation2 + $0x58] sm:$0xff] %vm1437, %v1416
          %1450 = vst.msk [vmem:[#allocation2 + $0x60] sm:$0xff] %vm1437, %v1417
          %1451 = vst.msk [vmem:[#allocation2 + $0x68] sm:$0xff] %vm1437, %v1418
          %1452 = vst.msk [vmem:[#allocation2 + $0x70] sm:$0xff] %vm1437, %v1419
          %1453 = vst.msk [vmem:[#allocation2 + $0x78] sm:$0xff] %vm1437, %v1420
          %1454 = vst.msk [vmem:[#allocation2 + $0x80] sm:$0xff] %vm1437, %v1421
          %1455 = vst.msk [vmem:[#allocation2 + $0x88] sm:$0xff] %vm1437, %v1422
          %1456 = vst.msk [vmem:[#allocation2 + $0x90] sm:$0xff] %vm1437, %v1423
          %1457 = vst.msk [vmem:[#allocation2 + $0x98] sm:$0xff] %vm1437, %v1424
          %1458 = vst.msk [vmem:[#allocation2 + $0xa0] sm:$0xff] %vm1437, %v1425
          %1459 = vst.msk [vmem:[#allocation2 + $0xa8] sm:$0xff] %vm1437, %v1426
          %1460 = vst.msk [vmem:[#allocation2 + $0xb0] sm:$0xff] %vm1437, %v1427
          %1461 = vst.msk [vmem:[#allocation2 + $0xb8] sm:$0xff] %vm1437, %v1428
          %1462 = vst.msk [vmem:[#allocation2 + $0xc0] sm:$0xff] %vm1437, %v1429
          %1463 = vst.msk [vmem:[#allocation2 + $0xc8] sm:$0xff] %vm1437, %v1430
          %1464 = vst.msk [vmem:[#allocation2 + $0xd0] sm:$0xff] %vm1437, %v1431
          %1465 = vst.msk [vmem:[#allocation2 + $0xd8] sm:$0xff] %vm1437, %v1432
          %1466 = vst.msk [vmem:[#allocation2 + $0xe0] sm:$0xff] %vm1437, %v1433
          %1467 = vst.msk [vmem:[#allocation2 + $0xe8] sm:$0xff] %vm1437, %v1434
          %1468 = vst.msk [vmem:[#allocation2 + $0xf0] sm:$0xff] %vm1437, %v1435
          %1469 = vst.msk [vmem:[#allocation2 + $0xf8] sm:$0xff] %vm1437, %v1436
          %vm1470 = vcmask 7168
          %1471 = vst.msk [vmem:[#allocation3] sm:$0xff] %vm1470, -inf
          %1472 = vst.msk [vmem:[#allocation3 + $0x8] sm:$0xff] %vm1470, -inf
          %1473 = vst.msk [vmem:[#allocation3 + $0x10] sm:$0xff] %vm1470, -inf
          %1474 = vst.msk [vmem:[#allocation3 + $0x18] sm:$0xff] %vm1470, -inf
          %1475 = vst.msk [vmem:[#allocation3 + $0x20] sm:$0xff] %vm1470, -inf
          %1476 = vst.msk [vmem:[#allocation3 + $0x28] sm:$0xff] %vm1470, -inf
          %1477 = vst.msk [vmem:[#allocation3 + $0x30] sm:$0xff] %vm1470, -inf
          %1478 = vst.msk [vmem:[#allocation3 + $0x38] sm:$0xff] %vm1470, -inf
          %1479 = vst.msk [vmem:[#allocation3 + $0x40] sm:$0xff] %vm1470, -inf
          %1480 = vst.msk [vmem:[#allocation3 + $0x48] sm:$0xff] %vm1470, -inf
          %1481 = vst.msk [vmem:[#allocation3 + $0x50] sm:$0xff] %vm1470, -inf
          %1482 = vst.msk [vmem:[#allocation3 + $0x58] sm:$0xff] %vm1470, -inf
          %1483 = vst.msk [vmem:[#allocation3 + $0x60] sm:$0xff] %vm1470, -inf
          %1484 = vst.msk [vmem:[#allocation3 + $0x68] sm:$0xff] %vm1470, -inf
          %1485 = vst.msk [vmem:[#allocation3 + $0x70] sm:$0xff] %vm1470, -inf
          %1486 = vst.msk [vmem:[#allocation3 + $0x78] sm:$0xff] %vm1470, -inf
          %1487 = vst.msk [vmem:[#allocation3 + $0x80] sm:$0xff] %vm1470, -inf
          %1488 = vst.msk [vmem:[#allocation3 + $0x88] sm:$0xff] %vm1470, -inf
          %1489 = vst.msk [vmem:[#allocation3 + $0x90] sm:$0xff] %vm1470, -inf
          %1490 = vst.msk [vmem:[#allocation3 + $0x98] sm:$0xff] %vm1470, -inf
          %1491 = vst.msk [vmem:[#allocation3 + $0xa0] sm:$0xff] %vm1470, -inf
          %1492 = vst.msk [vmem:[#allocation3 + $0xa8] sm:$0xff] %vm1470, -inf
          %1493 = vst.msk [vmem:[#allocation3 + $0xb0] sm:$0xff] %vm1470, -inf
          %1494 = vst.msk [vmem:[#allocation3 + $0xb8] sm:$0xff] %vm1470, -inf
          %1495 = vst.msk [vmem:[#allocation3 + $0xc0] sm:$0xff] %vm1470, -inf
          %1496 = vst.msk [vmem:[#allocation3 + $0xc8] sm:$0xff] %vm1470, -inf
          %1497 = vst.msk [vmem:[#allocation3 + $0xd0] sm:$0xff] %vm1470, -inf
          %1498 = vst.msk [vmem:[#allocation3 + $0xd8] sm:$0xff] %vm1470, -inf
          %1499 = vst.msk [vmem:[#allocation3 + $0xe0] sm:$0xff] %vm1470, -inf
          %1500 = vst.msk [vmem:[#allocation3 + $0xe8] sm:$0xff] %vm1470, -inf
          %1501 = vst.msk [vmem:[#allocation3 + $0xf0] sm:$0xff] %vm1470, -inf
          %1502 = vst.msk [vmem:[#allocation3 + $0xf8] sm:$0xff] %vm1470, -inf
          %1503 = vst.msk [vmem:[#allocation3 + $0x100] sm:$0xff] %vm1470, -inf
          %1504 = vst.msk [vmem:[#allocation3 + $0x108] sm:$0xff] %vm1470, -inf
          %1505 = vst.msk [vmem:[#allocation3 + $0x110] sm:$0xff] %vm1470, -inf
          %1506 = vst.msk [vmem:[#allocation3 + $0x118] sm:$0xff] %vm1470, -inf
          %1507 = vst.msk [vmem:[#allocation3 + $0x120] sm:$0xff] %vm1470, -inf
          %1508 = vst.msk [vmem:[#allocation3 + $0x128] sm:$0xff] %vm1470, -inf
          %1509 = vst.msk [vmem:[#allocation3 + $0x130] sm:$0xff] %vm1470, -inf
          %1510 = vst.msk [vmem:[#allocation3 + $0x138] sm:$0xff] %vm1470, -inf
          %1511 = vst.msk [vmem:[#allocation3 + $0x140] sm:$0xff] %vm1470, -inf
          %1512 = vst.msk [vmem:[#allocation3 + $0x148] sm:$0xff] %vm1470, -inf
          %1513 = vst.msk [vmem:[#allocation3 + $0x150] sm:$0xff] %vm1470, -inf
          %1514 = vst.msk [vmem:[#allocation3 + $0x158] sm:$0xff] %vm1470, -inf
          %1515 = vst.msk [vmem:[#allocation3 + $0x160] sm:$0xff] %vm1470, -inf
          %1516 = vst.msk [vmem:[#allocation3 + $0x168] sm:$0xff] %vm1470, -inf
          %1517 = vst.msk [vmem:[#allocation3 + $0x170] sm:$0xff] %vm1470, -inf
          %1518 = vst.msk [vmem:[#allocation3 + $0x178] sm:$0xff] %vm1470, -inf
          %1519 = vst.msk [vmem:[#allocation3 + $0x180] sm:$0xff] %vm1470, -inf
          %1520 = vst.msk [vmem:[#allocation3 + $0x188] sm:$0xff] %vm1470, -inf
          %1521 = vst.msk [vmem:[#allocation3 + $0x190] sm:$0xff] %vm1470, -inf
          %1522 = vst.msk [vmem:[#allocation3 + $0x198] sm:$0xff] %vm1470, -inf
          %1523 = vst.msk [vmem:[#allocation3 + $0x1a0] sm:$0xff] %vm1470, -inf
          %1524 = vst.msk [vmem:[#allocation3 + $0x1a8] sm:$0xff] %vm1470, -inf
          %1525 = vst.msk [vmem:[#allocation3 + $0x1b0] sm:$0xff] %vm1470, -inf
          %1526 = vst.msk [vmem:[#allocation3 + $0x1b8] sm:$0xff] %vm1470, -inf
          %1527 = vst.msk [vmem:[#allocation3 + $0x1c0] sm:$0xff] %vm1470, -inf
          %1528 = vst.msk [vmem:[#allocation3 + $0x1c8] sm:$0xff] %vm1470, -inf
          %1529 = vst.msk [vmem:[#allocation3 + $0x1d0] sm:$0xff] %vm1470, -inf
          %1530 = vst.msk [vmem:[#allocation3 + $0x1d8] sm:$0xff] %vm1470, -inf
          %1531 = vst.msk [vmem:[#allocation3 + $0x1e0] sm:$0xff] %vm1470, -inf
          %1532 = vst.msk [vmem:[#allocation3 + $0x1e8] sm:$0xff] %vm1470, -inf
          %1533 = vst.msk [vmem:[#allocation3 + $0x1f0] sm:$0xff] %vm1470, -inf
          %1534 = vst.msk [vmem:[#allocation3 + $0x1f8] sm:$0xff] %vm1470, -inf
          %vm1535 = vcmask 269312
          %1536 = vst.msk [vmem:[#allocation4] sm:$0xff] %vm1535, 0.0
          %1537 = vst.msk [vmem:[#allocation4 + $0x8] sm:$0xff] %vm1535, 0.0
          %1538 = vst.msk [vmem:[#allocation4 + $0x10] sm:$0xff] %vm1535, 0.0
          %1539 = vst.msk [vmem:[#allocation4 + $0x18] sm:$0xff] %vm1535, 0.0
          %1540 = vst.msk [vmem:[#allocation4 + $0x20] sm:$0xff] %vm1535, 0.0
          %1541 = vst.msk [vmem:[#allocation4 + $0x28] sm:$0xff] %vm1535, 0.0
          %1542 = vst.msk [vmem:[#allocation4 + $0x30] sm:$0xff] %vm1535, 0.0
          %1543 = vst.msk [vmem:[#allocation4 + $0x38] sm:$0xff] %vm1535, 0.0
          %1544 = vst.msk [vmem:[#allocation4 + $0x40] sm:$0xff] %vm1535, 0.0
          %1545 = vst.msk [vmem:[#allocation4 + $0x48] sm:$0xff] %vm1535, 0.0
          %1546 = vst.msk [vmem:[#allocation4 + $0x50] sm:$0xff] %vm1535, 0.0
          %1547 = vst.msk [vmem:[#allocation4 + $0x58] sm:$0xff] %vm1535, 0.0
          %1548 = vst.msk [vmem:[#allocation4 + $0x60] sm:$0xff] %vm1535, 0.0
          %1549 = vst.msk [vmem:[#allocation4 + $0x68] sm:$0xff] %vm1535, 0.0
          %1550 = vst.msk [vmem:[#allocation4 + $0x70] sm:$0xff] %vm1535, 0.0
          %1551 = vst.msk [vmem:[#allocation4 + $0x78] sm:$0xff] %vm1535, 0.0
          %1552 = vst.msk [vmem:[#allocation4 + $0x80] sm:$0xff] %vm1535, 0.0
          %1553 = vst.msk [vmem:[#allocation4 + $0x88] sm:$0xff] %vm1535, 0.0
          %1554 = vst.msk [vmem:[#allocation4 + $0x90] sm:$0xff] %vm1535, 0.0
          %1555 = vst.msk [vmem:[#allocation4 + $0x98] sm:$0xff] %vm1535, 0.0
          %1556 = vst.msk [vmem:[#allocation4 + $0xa0] sm:$0xff] %vm1535, 0.0
          %1557 = vst.msk [vmem:[#allocation4 + $0xa8] sm:$0xff] %vm1535, 0.0
          %1558 = vst.msk [vmem:[#allocation4 + $0xb0] sm:$0xff] %vm1535, 0.0
          %1559 = vst.msk [vmem:[#allocation4 + $0xb8] sm:$0xff] %vm1535, 0.0
          %1560 = vst.msk [vmem:[#allocation4 + $0xc0] sm:$0xff] %vm1535, 0.0
          %1561 = vst.msk [vmem:[#allocation4 + $0xc8] sm:$0xff] %vm1535, 0.0
          %1562 = vst.msk [vmem:[#allocation4 + $0xd0] sm:$0xff] %vm1535, 0.0
          %1563 = vst.msk [vmem:[#allocation4 + $0xd8] sm:$0xff] %vm1535, 0.0
          %1564 = vst.msk [vmem:[#allocation4 + $0xe0] sm:$0xff] %vm1535, 0.0
          %1565 = vst.msk [vmem:[#allocation4 + $0xe8] sm:$0xff] %vm1535, 0.0
          %1566 = vst.msk [vmem:[#allocation4 + $0xf0] sm:$0xff] %vm1535, 0.0
          %1567 = vst.msk [vmem:[#allocation4 + $0xf8] sm:$0xff] %vm1535, 0.0
          %1568 = vst.msk [vmem:[#allocation4 + $0x100] sm:$0xff] %vm1535, 0.0
          %1569 = vst.msk [vmem:[#allocation4 + $0x108] sm:$0xff] %vm1535, 0.0
          %1570 = vst.msk [vmem:[#allocation4 + $0x110] sm:$0xff] %vm1535, 0.0
          %1571 = vst.msk [vmem:[#allocation4 + $0x118] sm:$0xff] %vm1535, 0.0
          %1572 = vst.msk [vmem:[#allocation4 + $0x120] sm:$0xff] %vm1535, 0.0
          %1573 = vst.msk [vmem:[#allocation4 + $0x128] sm:$0xff] %vm1535, 0.0
          %1574 = vst.msk [vmem:[#allocation4 + $0x130] sm:$0xff] %vm1535, 0.0
          %1575 = vst.msk [vmem:[#allocation4 + $0x138] sm:$0xff] %vm1535, 0.0
          %1576 = vst.msk [vmem:[#allocation4 + $0x140] sm:$0xff] %vm1535, 0.0
          %1577 = vst.msk [vmem:[#allocation4 + $0x148] sm:$0xff] %vm1535, 0.0
          %1578 = vst.msk [vmem:[#allocation4 + $0x150] sm:$0xff] %vm1535, 0.0
          %1579 = vst.msk [vmem:[#allocation4 + $0x158] sm:$0xff] %vm1535, 0.0
          %1580 = vst.msk [vmem:[#allocation4 + $0x160] sm:$0xff] %vm1535, 0.0
          %1581 = vst.msk [vmem:[#allocation4 + $0x168] sm:$0xff] %vm1535, 0.0
          %1582 = vst.msk [vmem:[#allocation4 + $0x170] sm:$0xff] %vm1535, 0.0
          %1583 = vst.msk [vmem:[#allocation4 + $0x178] sm:$0xff] %vm1535, 0.0
          %1584 = vst.msk [vmem:[#allocation4 + $0x180] sm:$0xff] %vm1535, 0.0
          %1585 = vst.msk [vmem:[#allocation4 + $0x188] sm:$0xff] %vm1535, 0.0
          %1586 = vst.msk [vmem:[#allocation4 + $0x190] sm:$0xff] %vm1535, 0.0
          %1587 = vst.msk [vmem:[#allocation4 + $0x198] sm:$0xff] %vm1535, 0.0
          %1588 = vst.msk [vmem:[#allocation4 + $0x1a0] sm:$0xff] %vm1535, 0.0
          %1589 = vst.msk [vmem:[#allocation4 + $0x1a8] sm:$0xff] %vm1535, 0.0
          %1590 = vst.msk [vmem:[#allocation4 + $0x1b0] sm:$0xff] %vm1535, 0.0
          %1591 = vst.msk [vmem:[#allocation4 + $0x1b8] sm:$0xff] %vm1535, 0.0
          %1592 = vst.msk [vmem:[#allocation4 + $0x1c0] sm:$0xff] %vm1535, 0.0
          %1593 = vst.msk [vmem:[#allocation4 + $0x1c8] sm:$0xff] %vm1535, 0.0
          %1594 = vst.msk [vmem:[#allocation4 + $0x1d0] sm:$0xff] %vm1535, 0.0
          %1595 = vst.msk [vmem:[#allocation4 + $0x1d8] sm:$0xff] %vm1535, 0.0
          %1596 = vst.msk [vmem:[#allocation4 + $0x1e0] sm:$0xff] %vm1535, 0.0
          %1597 = vst.msk [vmem:[#allocation4 + $0x1e8] sm:$0xff] %vm1535, 0.0
          %1598 = vst.msk [vmem:[#allocation4 + $0x1f0] sm:$0xff] %vm1535, 0.0
          %1599 = vst.msk [vmem:[#allocation4 + $0x1f8] sm:$0xff] %vm1535, 0.0
        $region198: #{tpu_custom_call.1} parent=177 // pred_fallthru
          _
        %v1600 = vld [vmem:[#allocation2] sm:$0xff]
        %v1601 = vld [vmem:[#allocation2 + $0x8] sm:$0xff]
        %v1602 = vld [vmem:[#allocation2 + $0x10] sm:$0xff]
        %v1603 = vld [vmem:[#allocation2 + $0x18] sm:$0xff]
        %v1604 = vld [vmem:[#allocation2 + $0x20] sm:$0xff]
        %v1605 = vld [vmem:[#allocation2 + $0x28] sm:$0xff]
        %v1606 = vld [vmem:[#allocation2 + $0x30] sm:$0xff]
        %v1607 = vld [vmem:[#allocation2 + $0x38] sm:$0xff]
        %v1608 = vld [vmem:[#allocation2 + $0x40] sm:$0xff]
        %v1609 = vld [vmem:[#allocation2 + $0x48] sm:$0xff]
        %v1610 = vld [vmem:[#allocation2 + $0x50] sm:$0xff]
        %v1611 = vld [vmem:[#allocation2 + $0x58] sm:$0xff]
        %v1612 = vld [vmem:[#allocation2 + $0x60] sm:$0xff]
        %v1613 = vld [vmem:[#allocation2 + $0x68] sm:$0xff]
        %v1614 = vld [vmem:[#allocation2 + $0x70] sm:$0xff]
        %v1615 = vld [vmem:[#allocation2 + $0x78] sm:$0xff]
        %v1616 = vld [vmem:[#allocation2 + $0x80] sm:$0xff]
        %v1617 = vld [vmem:[#allocation2 + $0x88] sm:$0xff]
        %v1618 = vld [vmem:[#allocation2 + $0x90] sm:$0xff]
        %v1619 = vld [vmem:[#allocation2 + $0x98] sm:$0xff]
        %v1620 = vld [vmem:[#allocation2 + $0xa0] sm:$0xff]
        %v1621 = vld [vmem:[#allocation2 + $0xa8] sm:$0xff]
        %v1622 = vld [vmem:[#allocation2 + $0xb0] sm:$0xff]
        %v1623 = vld [vmem:[#allocation2 + $0xb8] sm:$0xff]
        %v1624 = vld [vmem:[#allocation2 + $0xc0] sm:$0xff]
        %v1625 = vld [vmem:[#allocation2 + $0xc8] sm:$0xff]
        %v1626 = vld [vmem:[#allocation2 + $0xd0] sm:$0xff]
        %v1627 = vld [vmem:[#allocation2 + $0xd8] sm:$0xff]
        %v1628 = vld [vmem:[#allocation2 + $0xe0] sm:$0xff]
        %v1629 = vld [vmem:[#allocation2 + $0xe8] sm:$0xff]
        %v1630 = vld [vmem:[#allocation2 + $0xf0] sm:$0xff]
        %v1631 = vld [vmem:[#allocation2 + $0xf8] sm:$0xff]
        %v1632 = vld [vmem:[%s1218] sm:$0xf]
        %v1633 = vld [vmem:[%s1218 + $0x4] sm:$0xf]
        %v1634 = vld [vmem:[%s1218 + $0x8] sm:$0xf]
        %v1635 = vld [vmem:[%s1218 + $0xc] sm:$0xf]
        %v1636 = vld [vmem:[%s1218 + $0x10] sm:$0xf]
        %v1637 = vld [vmem:[%s1218 + $0x14] sm:$0xf]
        %v1638 = vld [vmem:[%s1218 + $0x18] sm:$0xf]
        %v1639 = vld [vmem:[%s1218 + $0x1c] sm:$0xf]
        %v1640 = vld [vmem:[%s1218 + $0x20] sm:$0xf]
        %v1641 = vld [vmem:[%s1218 + $0x24] sm:$0xf]
        %v1642 = vld [vmem:[%s1218 + $0x28] sm:$0xf]
        %v1643 = vld [vmem:[%s1218 + $0x2c] sm:$0xf]
        %v1644 = vld [vmem:[%s1218 + $0x30] sm:$0xf]
        %v1645 = vld [vmem:[%s1218 + $0x34] sm:$0xf]
        %v1646 = vld [vmem:[%s1218 + $0x38] sm:$0xf]
        %v1647 = vld [vmem:[%s1218 + $0x3c] sm:$0xf]
        %v1648 = vld [vmem:[%s1218 + $0x40] sm:$0xf]
        %v1649 = vld [vmem:[%s1218 + $0x44] sm:$0xf]
        %v1650 = vld [vmem:[%s1218 + $0x48] sm:$0xf]
        %v1651 = vld [vmem:[%s1218 + $0x4c] sm:$0xf]
        %v1652 = vld [vmem:[%s1218 + $0x50] sm:$0xf]
        %v1653 = vld [vmem:[%s1218 + $0x54] sm:$0xf]
        %v1654 = vld [vmem:[%s1218 + $0x58] sm:$0xf]
        %v1655 = vld [vmem:[%s1218 + $0x5c] sm:$0xf]
        %v1656 = vld [vmem:[%s1218 + $0x60] sm:$0xf]
        %v1657 = vld [vmem:[%s1218 + $0x64] sm:$0xf]
        %v1658 = vld [vmem:[%s1218 + $0x68] sm:$0xf]
        %v1659 = vld [vmem:[%s1218 + $0x6c] sm:$0xf]
        %v1660 = vld [vmem:[%s1218 + $0x70] sm:$0xf]
        %v1661 = vld [vmem:[%s1218 + $0x74] sm:$0xf]
        %v1662 = vld [vmem:[%s1218 + $0x78] sm:$0xf]
        %v1663 = vld [vmem:[%s1218 + $0x7c] sm:$0xf]
        %v1664 = vld [vmem:[%s1218 + $0x80] sm:$0xf]
        %v1665 = vld [vmem:[%s1218 + $0x84] sm:$0xf]
        %v1666 = vld [vmem:[%s1218 + $0x88] sm:$0xf]
        %v1667 = vld [vmem:[%s1218 + $0x8c] sm:$0xf]
        %v1668 = vld [vmem:[%s1218 + $0x90] sm:$0xf]
        %v1669 = vld [vmem:[%s1218 + $0x94] sm:$0xf]
        %v1670 = vld [vmem:[%s1218 + $0x98] sm:$0xf]
        %v1671 = vld [vmem:[%s1218 + $0x9c] sm:$0xf]
        %v1672 = vld [vmem:[%s1218 + $0xa0] sm:$0xf]
        %v1673 = vld [vmem:[%s1218 + $0xa4] sm:$0xf]
        %v1674 = vld [vmem:[%s1218 + $0xa8] sm:$0xf]
        %v1675 = vld [vmem:[%s1218 + $0xac] sm:$0xf]
        %v1676 = vld [vmem:[%s1218 + $0xb0] sm:$0xf]
        %v1677 = vld [vmem:[%s1218 + $0xb4] sm:$0xf]
        %v1678 = vld [vmem:[%s1218 + $0xb8] sm:$0xf]
        %v1679 = vld [vmem:[%s1218 + $0xbc] sm:$0xf]
        %v1680 = vld [vmem:[%s1218 + $0xc0] sm:$0xf]
        %v1681 = vld [vmem:[%s1218 + $0xc4] sm:$0xf]
        %v1682 = vld [vmem:[%s1218 + $0xc8] sm:$0xf]
        %v1683 = vld [vmem:[%s1218 + $0xcc] sm:$0xf]
        %v1684 = vld [vmem:[%s1218 + $0xd0] sm:$0xf]
        %v1685 = vld [vmem:[%s1218 + $0xd4] sm:$0xf]
        %v1686 = vld [vmem:[%s1218 + $0xd8] sm:$0xf]
        %v1687 = vld [vmem:[%s1218 + $0xdc] sm:$0xf]
        %v1688 = vld [vmem:[%s1218 + $0xe0] sm:$0xf]
        %v1689 = vld [vmem:[%s1218 + $0xe4] sm:$0xf]
        %v1690 = vld [vmem:[%s1218 + $0xe8] sm:$0xf]
        %v1691 = vld [vmem:[%s1218 + $0xec] sm:$0xf]
        %v1692 = vld [vmem:[%s1218 + $0xf0] sm:$0xf]
        %v1693 = vld [vmem:[%s1218 + $0xf4] sm:$0xf]
        %v1694 = vld [vmem:[%s1218 + $0xf8] sm:$0xf]
        %v1695 = vld [vmem:[%s1218 + $0xfc] sm:$0xf]
        %v1696 = vld [vmem:[%s1225] sm:$0xf]
        %v1697 = vld [vmem:[%s1225 + $0x4] sm:$0xf]
        %v1698 = vld [vmem:[%s1225 + $0x8] sm:$0xf]
        %v1699 = vld [vmem:[%s1225 + $0xc] sm:$0xf]
        %v1700 = vld [vmem:[%s1225 + $0x10] sm:$0xf]
        %v1701 = vld [vmem:[%s1225 + $0x14] sm:$0xf]
        %v1702 = vld [vmem:[%s1225 + $0x18] sm:$0xf]
        %v1703 = vld [vmem:[%s1225 + $0x1c] sm:$0xf]
        %v1704 = vld [vmem:[%s1225 + $0x20] sm:$0xf]
        %v1705 = vld [vmem:[%s1225 + $0x24] sm:$0xf]
        %v1706 = vld [vmem:[%s1225 + $0x28] sm:$0xf]
        %v1707 = vld [vmem:[%s1225 + $0x2c] sm:$0xf]
        %v1708 = vld [vmem:[%s1225 + $0x30] sm:$0xf]
        %v1709 = vld [vmem:[%s1225 + $0x34] sm:$0xf]
        %v1710 = vld [vmem:[%s1225 + $0x38] sm:$0xf]
        %v1711 = vld [vmem:[%s1225 + $0x3c] sm:$0xf]
        %v1712 = vld [vmem:[%s1225 + $0x40] sm:$0xf]
        %v1713 = vld [vmem:[%s1225 + $0x44] sm:$0xf]
        %v1714 = vld [vmem:[%s1225 + $0x48] sm:$0xf]
        %v1715 = vld [vmem:[%s1225 + $0x4c] sm:$0xf]
        %v1716 = vld [vmem:[%s1225 + $0x50] sm:$0xf]
        %v1717 = vld [vmem:[%s1225 + $0x54] sm:$0xf]
        %v1718 = vld [vmem:[%s1225 + $0x58] sm:$0xf]
        %v1719 = vld [vmem:[%s1225 + $0x5c] sm:$0xf]
        %v1720 = vld [vmem:[%s1225 + $0x60] sm:$0xf]
        %v1721 = vld [vmem:[%s1225 + $0x64] sm:$0xf]
        %v1722 = vld [vmem:[%s1225 + $0x68] sm:$0xf]
        %v1723 = vld [vmem:[%s1225 + $0x6c] sm:$0xf]
        %v1724 = vld [vmem:[%s1225 + $0x70] sm:$0xf]
        %v1725 = vld [vmem:[%s1225 + $0x74] sm:$0xf]
        %v1726 = vld [vmem:[%s1225 + $0x78] sm:$0xf]
        %v1727 = vld [vmem:[%s1225 + $0x7c] sm:$0xf]
        %v1728 = vld [vmem:[%s1225 + $0x80] sm:$0xf]
        %v1729 = vld [vmem:[%s1225 + $0x84] sm:$0xf]
        %v1730 = vld [vmem:[%s1225 + $0x88] sm:$0xf]
        %v1731 = vld [vmem:[%s1225 + $0x8c] sm:$0xf]
        %v1732 = vld [vmem:[%s1225 + $0x90] sm:$0xf]
        %v1733 = vld [vmem:[%s1225 + $0x94] sm:$0xf]
        %v1734 = vld [vmem:[%s1225 + $0x98] sm:$0xf]
        %v1735 = vld [vmem:[%s1225 + $0x9c] sm:$0xf]
        %v1736 = vld [vmem:[%s1225 + $0xa0] sm:$0xf]
        %v1737 = vld [vmem:[%s1225 + $0xa4] sm:$0xf]
        %v1738 = vld [vmem:[%s1225 + $0xa8] sm:$0xf]
        %v1739 = vld [vmem:[%s1225 + $0xac] sm:$0xf]
        %v1740 = vld [vmem:[%s1225 + $0xb0] sm:$0xf]
        %v1741 = vld [vmem:[%s1225 + $0xb4] sm:$0xf]
        %v1742 = vld [vmem:[%s1225 + $0xb8] sm:$0xf]
        %v1743 = vld [vmem:[%s1225 + $0xbc] sm:$0xf]
        %v1744 = vld [vmem:[%s1225 + $0xc0] sm:$0xf]
        %v1745 = vld [vmem:[%s1225 + $0xc4] sm:$0xf]
        %v1746 = vld [vmem:[%s1225 + $0xc8] sm:$0xf]
        %v1747 = vld [vmem:[%s1225 + $0xcc] sm:$0xf]
        %v1748 = vld [vmem:[%s1225 + $0xd0] sm:$0xf]
        %v1749 = vld [vmem:[%s1225 + $0xd4] sm:$0xf]
        %v1750 = vld [vmem:[%s1225 + $0xd8] sm:$0xf]
        %v1751 = vld [vmem:[%s1225 + $0xdc] sm:$0xf]
        %v1752 = vld [vmem:[%s1225 + $0xe0] sm:$0xf]
        %v1753 = vld [vmem:[%s1225 + $0xe4] sm:$0xf]
        %v1754 = vld [vmem:[%s1225 + $0xe8] sm:$0xf]
        %v1755 = vld [vmem:[%s1225 + $0xec] sm:$0xf]
        %v1756 = vld [vmem:[%s1225 + $0xf0] sm:$0xf]
        %v1757 = vld [vmem:[%s1225 + $0xf4] sm:$0xf]
        %v1758 = vld [vmem:[%s1225 + $0xf8] sm:$0xf]
        %v1759 = vld [vmem:[%s1225 + $0xfc] sm:$0xf]
        %v1760 = vld [vmem:[%s1232] sm:$0xff]
        %v1761 = vld [vmem:[%s1232 + $0x8] sm:$0xff]
        %v1762 = vld [vmem:[%s1232 + $0x10] sm:$0xff]
        %v1763 = vld [vmem:[%s1232 + $0x18] sm:$0xff]
        %v1764 = vld [vmem:[%s1232 + $0x20] sm:$0xff]
        %v1765 = vld [vmem:[%s1232 + $0x28] sm:$0xff]
        %v1766 = vld [vmem:[%s1232 + $0x30] sm:$0xff]
        %v1767 = vld [vmem:[%s1232 + $0x38] sm:$0xff]
        %v1768 = vld [vmem:[%s1232 + $0x40] sm:$0xff]
        %v1769 = vld [vmem:[%s1232 + $0x48] sm:$0xff]
        %v1770 = vld [vmem:[%s1232 + $0x50] sm:$0xff]
        %v1771 = vld [vmem:[%s1232 + $0x58] sm:$0xff]
        %v1772 = vld [vmem:[%s1232 + $0x60] sm:$0xff]
        %v1773 = vld [vmem:[%s1232 + $0x68] sm:$0xff]
        %v1774 = vld [vmem:[%s1232 + $0x70] sm:$0xff]
        %v1775 = vld [vmem:[%s1232 + $0x78] sm:$0xff]
        %v1776 = vmul.f32 %v1760, 1.442695
        %v1777 = vmul.f32 %v1761, 1.442695
        %v1778 = vmul.f32 %v1762, 1.442695
        %v1779 = vmul.f32 %v1763, 1.442695
        %v1780 = vmul.f32 %v1764, 1.442695
        %v1781 = vmul.f32 %v1765, 1.442695
        %v1782 = vmul.f32 %v1766, 1.442695
        %v1783 = vmul.f32 %v1767, 1.442695
        %v1784 = vmul.f32 %v1768, 1.442695
        %v1785 = vmul.f32 %v1769, 1.442695
        %v1786 = vmul.f32 %v1770, 1.442695
        %v1787 = vmul.f32 %v1771, 1.442695
        %v1788 = vmul.f32 %v1772, 1.442695
        %v1789 = vmul.f32 %v1773, 1.442695
        %v1790 = vmul.f32 %v1774, 1.442695
        %v1791 = vmul.f32 %v1775, 1.442695
        %v1808 = vunpack.c.l.b16 %v1632
        %v1809 = vunpack.c.l.b16 %v1633
        %v1810 = vunpack.c.l.b16 %v1634
        %v1811 = vunpack.c.l.b16 %v1635
        %v1812 = vunpack.c.l.b16 %v1636
        %v1813 = vunpack.c.l.b16 %v1637
        %v1814 = vunpack.c.l.b16 %v1638
        %v1815 = vunpack.c.l.b16 %v1639
        %v1816 = vunpack.c.l.b16 %v1640
        %v1817 = vunpack.c.l.b16 %v1641
        %v1818 = vunpack.c.l.b16 %v1642
        %v1819 = vunpack.c.l.b16 %v1643
        %v1820 = vunpack.c.l.b16 %v1644
        %v1821 = vunpack.c.l.b16 %v1645
        %v1822 = vunpack.c.l.b16 %v1646
        %v1823 = vunpack.c.l.b16 %v1647
        %v1824 = vpack.c.b16 %v1809, %v1808
        %v1825 = vpack.c.b16 %v1811, %v1810
        %v1826 = vpack.c.b16 %v1813, %v1812
        %v1827 = vpack.c.b16 %v1815, %v1814
        %v1828 = vpack.c.b16 %v1817, %v1816
        %v1829 = vpack.c.b16 %v1819, %v1818
        %v1830 = vpack.c.b16 %v1821, %v1820
        %v1831 = vpack.c.b16 %v1823, %v1822
        %vm1832 = vcmask 261120
        %v1834 = vsel %vm1832, %v1600, 0
        %v1837 = vsel %vm1832, %v1601, 0
        %v1840 = vsel %vm1832, %v1602, 0
        %v1843 = vsel %vm1832, %v1603, 0
        %v1846 = vsel %vm1832, %v1604, 0
        %v1849 = vsel %vm1832, %v1605, 0
        %v1852 = vsel %vm1832, %v1606, 0
        %v1855 = vsel %vm1832, %v1607, 0
        %v1858 = vsel %vm1832, %v1824, 0
        %v1861 = vsel %vm1832, %v1825, 0
        %v1864 = vsel %vm1832, %v1826, 0
        %v1867 = vsel %vm1832, %v1827, 0
        %v1870 = vsel %vm1832, %v1828, 0
        %v1873 = vsel %vm1832, %v1829, 0
        %v1876 = vsel %vm1832, %v1830, 0
        %v1879 = vsel %vm1832, %v1831, 0
        %1881 = vmatprep.subr.bf16.mxu0 0
        %1882 = vmatpush1.bf16.xpose.msra.mxu0 %v1858
        %1883 = vmatprep.subr.bf16.mxu0 0
        %1884 = vmatpush1.bf16.xpose.msra.mxu0 %v1861
        %1885 = vmatprep.subr.bf16.mxu0 0
        %1886 = vmatpush1.bf16.xpose.msra.mxu0 %v1864
        %1887 = vmatprep.subr.bf16.mxu0 0
        %1888 = vmatpush1.bf16.xpose.msra.mxu0 %v1867
        %1889 = vmatprep.subr.bf16.mxu0 0
        %1890 = vmatpush1.bf16.xpose.msra.mxu0 %v1870
        %1891 = vmatprep.subr.bf16.mxu0 0
        %1892 = vmatpush1.bf16.xpose.msra.mxu0 %v1873
        %1893 = vmatprep.subr.bf16.mxu0 0
        %1894 = vmatpush1.bf16.xpose.msra.mxu0 %v1876
        %1895 = vmatprep.subr.bf16.mxu0 0
        %1896 = vmatpush1.bf16.xpose.msra.mxu0 %v1879
        %1897 = vmatprep.subr.bf16.mxu0 0
        %1898 = vmatpush1.bf16.xpose.msra.mxu0 0
        %1899 = vmatprep.subr.bf16.mxu0 0
        %1900 = vmatpush1.bf16.xpose.msra.mxu0 0
        %1901 = vmatprep.subr.bf16.mxu0 0
        %1902 = vmatpush1.bf16.xpose.msra.mxu0 0
        %1903 = vmatprep.subr.bf16.mxu0 0
        %1904 = vmatpush1.bf16.xpose.msra.mxu0 0
        %1905 = vmatprep.subr.bf16.mxu0 0
        %1906 = vmatpush1.bf16.xpose.msra.mxu0 0
        %1907 = vmatprep.subr.bf16.mxu0 0
        %1908 = vmatpush1.bf16.xpose.msra.mxu0 0
        %1909 = vmatprep.subr.bf16.mxu0 0
        %1910 = vmatpush1.bf16.xpose.msra.mxu0 0
        %1911 = vmatprep.subr.bf16.mxu0 0
        %1912 = vmatpush1.bf16.xpose.msra.mxu0 0
        %1913 = vmatprep.mubr.bf16.mxu0 0
        %1914 = vmatmul.mubr.bf16.gmra.mrb[0].mxu0 %v1834
        %v1915 = vpop.f32.mrb[0].mxu0
        %v1916 = vadd.f32 %v1776, %v1915
        %v1917 = vpop.f32.mrb[0].mxu0
        %v1918 = vpop.f32.mrb[0].mxu0
        %v1919 = vadd.f32 %v1777, %v1918
        %v1920 = vpop.f32.mrb[0].mxu0
        %1921 = vmatprep.mubr.bf16.mxu0 0
        %1922 = vmatmul.mubr.bf16.gmra.mrb[0].mxu0 %v1837
        %v1923 = vpop.f32.mrb[0].mxu0
        %v1924 = vadd.f32 %v1778, %v1923
        %v1925 = vpop.f32.mrb[0].mxu0
        %v1926 = vpop.f32.mrb[0].mxu0
        %v1927 = vadd.f32 %v1779, %v1926
        %v1928 = vpop.f32.mrb[0].mxu0
        %1929 = vmatprep.mubr.bf16.mxu0 0
        %1930 = vmatmul.mubr.bf16.gmra.mrb[0].mxu0 %v1840
        %v1931 = vpop.f32.mrb[0].mxu0
        %v1932 = vadd.f32 %v1780, %v1931
        %v1933 = vpop.f32.mrb[0].mxu0
        %v1934 = vpop.f32.mrb[0].mxu0
        %v1935 = vadd.f32 %v1781, %v1934
        %v1936 = vpop.f32.mrb[0].mxu0
        %1937 = vmatprep.mubr.bf16.mxu0 0
        %1938 = vmatmul.mubr.bf16.gmra.mrb[0].mxu0 %v1843
        %v1939 = vpop.f32.mrb[0].mxu0
        %v1940 = vadd.f32 %v1782, %v1939
        %v1941 = vpop.f32.mrb[0].mxu0
        %v1942 = vpop.f32.mrb[0].mxu0
        %v1943 = vadd.f32 %v1783, %v1942
        %v1944 = vpop.f32.mrb[0].mxu0
        %1945 = vmatprep.mubr.bf16.mxu0 0
        %1946 = vmatmul.mubr.bf16.gmra.mrb[0].mxu0 %v1846
        %v1947 = vpop.f32.mrb[0].mxu0
        %v1948 = vadd.f32 %v1784, %v1947
        %v1949 = vpop.f32.mrb[0].mxu0
        %v1950 = vpop.f32.mrb[0].mxu0
        %v1951 = vadd.f32 %v1785, %v1950
        %v1952 = vpop.f32.mrb[0].mxu0
        %1953 = vmatprep.mubr.bf16.mxu0 0
        %1954 = vmatmul.mubr.bf16.gmra.mrb[0].mxu0 %v1849
        %v1955 = vpop.f32.mrb[0].mxu0
        %v1956 = vadd.f32 %v1786, %v1955
        %v1957 = vpop.f32.mrb[0].mxu0
        %v1958 = vpop.f32.mrb[0].mxu0
        %v1959 = vadd.f32 %v1787, %v1958
        %v1960 = vpop.f32.mrb[0].mxu0
        %1961 = vmatprep.mubr.bf16.mxu0 0
        %1962 = vmatmul.mubr.bf16.gmra.mrb[0].mxu0 %v1852
        %v1963 = vpop.f32.mrb[0].mxu0
        %v1964 = vadd.f32 %v1788, %v1963
        %v1965 = vpop.f32.mrb[0].mxu0
        %v1966 = vpop.f32.mrb[0].mxu0
        %v1967 = vadd.f32 %v1789, %v1966
        %v1968 = vpop.f32.mrb[0].mxu0
        %1969 = vmatprep.mubr.bf16.mxu0 0
        %1970 = vmatmul.mubr.bf16.gmra.mrb[0].mxu0 %v1855
        %v1971 = vpop.f32.mrb[0].mxu0
        %v1972 = vadd.f32 %v1790, %v1971
        %v1973 = vpop.f32.mrb[0].mxu0
        %v1974 = vpop.f32.mrb[0].mxu0
        %v1975 = vadd.f32 %v1791, %v1974
        %v1976 = vpop.f32.mrb[0].mxu0
        %1977 = vdwg.mxu0
        %v1994 = vunpack.c.l.b16 %v1648
        %v1995 = vunpack.c.l.b16 %v1649
        %v1996 = vunpack.c.l.b16 %v1650
        %v1997 = vunpack.c.l.b16 %v1651
        %v1998 = vunpack.c.l.b16 %v1652
        %v1999 = vunpack.c.l.b16 %v1653
        %v2000 = vunpack.c.l.b16 %v1654
        %v2001 = vunpack.c.l.b16 %v1655
        %v2002 = vunpack.c.l.b16 %v1656
        %v2003 = vunpack.c.l.b16 %v1657
        %v2004 = vunpack.c.l.b16 %v1658
        %v2005 = vunpack.c.l.b16 %v1659
        %v2006 = vunpack.c.l.b16 %v1660
        %v2007 = vunpack.c.l.b16 %v1661
        %v2008 = vunpack.c.l.b16 %v1662
        %v2009 = vunpack.c.l.b16 %v1663
        %v2010 = vpack.c.b16 %v1995, %v1994
        %v2011 = vpack.c.b16 %v1997, %v1996
        %v2012 = vpack.c.b16 %v1999, %v1998
        %v2013 = vpack.c.b16 %v2001, %v2000
        %v2014 = vpack.c.b16 %v2003, %v2002
        %v2015 = vpack.c.b16 %v2005, %v2004
        %v2016 = vpack.c.b16 %v2007, %v2006
        %v2017 = vpack.c.b16 %v2009, %v2008
        %v2019 = vsel %vm1832, %v1608, 0
        %v2022 = vsel %vm1832, %v1609, 0
        %v2025 = vsel %vm1832, %v1610, 0
        %v2028 = vsel %vm1832, %v1611, 0
        %v2031 = vsel %vm1832, %v1612, 0
        %v2034 = vsel %vm1832, %v1613, 0
        %v2037 = vsel %vm1832, %v1614, 0
        %v2040 = vsel %vm1832, %v1615, 0
        %v2043 = vsel %vm1832, %v2010, 0
        %v2046 = vsel %vm1832, %v2011, 0
        %v2049 = vsel %vm1832, %v2012, 0
        %v2052 = vsel %vm1832, %v2013, 0
        %v2055 = vsel %vm1832, %v2014, 0
        %v2058 = vsel %vm1832, %v2015, 0
        %v2061 = vsel %vm1832, %v2016, 0
        %v2064 = vsel %vm1832, %v2017, 0
        %2066 = vmatprep.subr.bf16.mxu0 0
        %2067 = vmatpush1.bf16.xpose.msra.mxu0 %v2043
        %2068 = vmatprep.subr.bf16.mxu0 0
        %2069 = vmatpush1.bf16.xpose.msra.mxu0 %v2046
        %2070 = vmatprep.subr.bf16.mxu0 0
        %2071 = vmatpush1.bf16.xpose.msra.mxu0 %v2049
        %2072 = vmatprep.subr.bf16.mxu0 0
        %2073 = vmatpush1.bf16.xpose.msra.mxu0 %v2052
        %2074 = vmatprep.subr.bf16.mxu0 0
        %2075 = vmatpush1.bf16.xpose.msra.mxu0 %v2055
        %2076 = vmatprep.subr.bf16.mxu0 0
        %2077 = vmatpush1.bf16.xpose.msra.mxu0 %v2058
        %2078 = vmatprep.subr.bf16.mxu0 0
        %2079 = vmatpush1.bf16.xpose.msra.mxu0 %v2061
        %2080 = vmatprep.subr.bf16.mxu0 0
        %2081 = vmatpush1.bf16.xpose.msra.mxu0 %v2064
        %2082 = vmatprep.subr.bf16.mxu0 0
        %2083 = vmatpush1.bf16.xpose.msra.mxu0 0
        %2084 = vmatprep.subr.bf16.mxu0 0
        %2085 = vmatpush1.bf16.xpose.msra.mxu0 0
        %2086 = vmatprep.subr.bf16.mxu0 0
        %2087 = vmatpush1.bf16.xpose.msra.mxu0 0
        %2088 = vmatprep.subr.bf16.mxu0 0
        %2089 = vmatpush1.bf16.xpose.msra.mxu0 0
        %2090 = vmatprep.subr.bf16.mxu0 0
        %2091 = vmatpush1.bf16.xpose.msra.mxu0 0
        %2092 = vmatprep.subr.bf16.mxu0 0
        %2093 = vmatpush1.bf16.xpose.msra.mxu0 0
        %2094 = vmatprep.subr.bf16.mxu0 0
        %2095 = vmatpush1.bf16.xpose.msra.mxu0 0
        %2096 = vmatprep.subr.bf16.mxu0 0
        %2097 = vmatpush1.bf16.xpose.msra.mxu0 0
        %2098 = vmatprep.mubr.bf16.mxu0 0
        %2099 = vmatmul.mubr.bf16.gmra.mrb[0].mxu0 %v2019
        %v2100 = vpop.f32.mrb[0].mxu0
        %v2101 = vadd.f32 %v1776, %v2100
        %v2102 = vpop.f32.mrb[0].mxu0
        %v2103 = vpop.f32.mrb[0].mxu0
        %v2104 = vadd.f32 %v1777, %v2103
        %v2105 = vpop.f32.mrb[0].mxu0
        %2106 = vmatprep.mubr.bf16.mxu0 0
        %2107 = vmatmul.mubr.bf16.gmra.mrb[0].mxu0 %v2022
        %v2108 = vpop.f32.mrb[0].mxu0
        %v2109 = vadd.f32 %v1778, %v2108
        %v2110 = vpop.f32.mrb[0].mxu0
        %v2111 = vpop.f32.mrb[0].mxu0
        %v2112 = vadd.f32 %v1779, %v2111
        %v2113 = vpop.f32.mrb[0].mxu0
        %2114 = vmatprep.mubr.bf16.mxu0 0
        %2115 = vmatmul.mubr.bf16.gmra.mrb[0].mxu0 %v2025
        %v2116 = vpop.f32.mrb[0].mxu0
        %v2117 = vadd.f32 %v1780, %v2116
        %v2118 = vpop.f32.mrb[0].mxu0
        %v2119 = vpop.f32.mrb[0].mxu0
        %v2120 = vadd.f32 %v1781, %v2119
        %v2121 = vpop.f32.mrb[0].mxu0
        %2122 = vmatprep.mubr.bf16.mxu0 0
        %2123 = vmatmul.mubr.bf16.gmra.mrb[0].mxu0 %v2028
        %v2124 = vpop.f32.mrb[0].mxu0
        %v2125 = vadd.f32 %v1782, %v2124
        %v2126 = vpop.f32.mrb[0].mxu0
        %v2127 = vpop.f32.mrb[0].mxu0
        %v2128 = vadd.f32 %v1783, %v2127
        %v2129 = vpop.f32.mrb[0].mxu0
        %2130 = vmatprep.mubr.bf16.mxu0 0
        %2131 = vmatmul.mubr.bf16.gmra.mrb[0].mxu0 %v2031
        %v2132 = vpop.f32.mrb[0].mxu0
        %v2133 = vadd.f32 %v1784, %v2132
        %v2134 = vpop.f32.mrb[0].mxu0
        %v2135 = vpop.f32.mrb[0].mxu0
        %v2136 = vadd.f32 %v1785, %v2135
        %v2137 = vpop.f32.mrb[0].mxu0
        %2138 = vmatprep.mubr.bf16.mxu0 0
        %2139 = vmatmul.mubr.bf16.gmra.mrb[0].mxu0 %v2034
        %v2140 = vpop.f32.mrb[0].mxu0
        %v2141 = vadd.f32 %v1786, %v2140
        %v2142 = vpop.f32.mrb[0].mxu0
        %v2143 = vpop.f32.mrb[0].mxu0
        %v2144 = vadd.f32 %v1787, %v2143
        %v2145 = vpop.f32.mrb[0].mxu0
        %2146 = vmatprep.mubr.bf16.mxu0 0
        %2147 = vmatmul.mubr.bf16.gmra.mrb[0].mxu0 %v2037
        %v2148 = vpop.f32.mrb[0].mxu0
        %v2149 = vadd.f32 %v1788, %v2148
        %v2150 = vpop.f32.mrb[0].mxu0
        %v2151 = vpop.f32.mrb[0].mxu0
        %v2152 = vadd.f32 %v1789, %v2151
        %v2153 = vpop.f32.mrb[0].mxu0
        %2154 = vmatprep.mubr.bf16.mxu0 0
        %2155 = vmatmul.mubr.bf16.gmra.mrb[0].mxu0 %v2040
        %v2156 = vpop.f32.mrb[0].mxu0
        %v2157 = vadd.f32 %v1790, %v2156
        %v2158 = vpop.f32.mrb[0].mxu0
        %v2159 = vpop.f32.mrb[0].mxu0
        %v2160 = vadd.f32 %v1791, %v2159
        %v2161 = vpop.f32.mrb[0].mxu0
        %2162 = vdwg.mxu0
        %v2179 = vunpack.c.l.b16 %v1664
        %v2180 = vunpack.c.l.b16 %v1665
        %v2181 = vunpack.c.l.b16 %v1666
        %v2182 = vunpack.c.l.b16 %v1667
        %v2183 = vunpack.c.l.b16 %v1668
        %v2184 = vunpack.c.l.b16 %v1669
        %v2185 = vunpack.c.l.b16 %v1670
        %v2186 = vunpack.c.l.b16 %v1671
        %v2187 = vunpack.c.l.b16 %v1672
        %v2188 = vunpack.c.l.b16 %v1673
        %v2189 = vunpack.c.l.b16 %v1674
        %v2190 = vunpack.c.l.b16 %v1675
        %v2191 = vunpack.c.l.b16 %v1676
        %v2192 = vunpack.c.l.b16 %v1677
        %v2193 = vunpack.c.l.b16 %v1678
        %v2194 = vunpack.c.l.b16 %v1679
        %v2195 = vpack.c.b16 %v2180, %v2179
        %v2196 = vpack.c.b16 %v2182, %v2181
        %v2197 = vpack.c.b16 %v2184, %v2183
        %v2198 = vpack.c.b16 %v2186, %v2185
        %v2199 = vpack.c.b16 %v2188, %v2187
        %v2200 = vpack.c.b16 %v2190, %v2189
        %v2201 = vpack.c.b16 %v2192, %v2191
        %v2202 = vpack.c.b16 %v2194, %v2193
        %v2204 = vsel %vm1832, %v1616, 0
        %v2207 = vsel %vm1832, %v1617, 0
        %v2210 = vsel %vm1832, %v1618, 0
        %v2213 = vsel %vm1832, %v1619, 0
        %v2216 = vsel %vm1832, %v1620, 0
        %v2219 = vsel %vm1832, %v1621, 0
        %v2222 = vsel %vm1832, %v1622, 0
        %v2225 = vsel %vm1832, %v1623, 0
        %v2228 = vsel %vm1832, %v2195, 0
        %v2231 = vsel %vm1832, %v2196, 0
        %v2234 = vsel %vm1832, %v2197, 0
        %v2237 = vsel %vm1832, %v2198, 0
        %v2240 = vsel %vm1832, %v2199, 0
        %v2243 = vsel %vm1832, %v2200, 0
        %v2246 = vsel %vm1832, %v2201, 0
        %v2249 = vsel %vm1832, %v2202, 0
        %2251 = vmatprep.subr.bf16.mxu0 0
        %2252 = vmatpush1.bf16.xpose.msra.mxu0 %v2228
        %2253 = vmatprep.subr.bf16.mxu0 0
        %2254 = vmatpush1.bf16.xpose.msra.mxu0 %v2231
        %2255 = vmatprep.subr.bf16.mxu0 0
        %2256 = vmatpush1.bf16.xpose.msra.mxu0 %v2234
        %2257 = vmatprep.subr.bf16.mxu0 0
        %2258 = vmatpush1.bf16.xpose.msra.mxu0 %v2237
        %2259 = vmatprep.subr.bf16.mxu0 0
        %2260 = vmatpush1.bf16.xpose.msra.mxu0 %v2240
        %2261 = vmatprep.subr.bf16.mxu0 0
        %2262 = vmatpush1.bf16.xpose.msra.mxu0 %v2243
        %2263 = vmatprep.subr.bf16.mxu0 0
        %2264 = vmatpush1.bf16.xpose.msra.mxu0 %v2246
        %2265 = vmatprep.subr.bf16.mxu0 0
        %2266 = vmatpush1.bf16.xpose.msra.mxu0 %v2249
        %2267 = vmatprep.subr.bf16.mxu0 0
        %2268 = vmatpush1.bf16.xpose.msra.mxu0 0
        %2269 = vmatprep.subr.bf16.mxu0 0
        %2270 = vmatpush1.bf16.xpose.msra.mxu0 0
        %2271 = vmatprep.subr.bf16.mxu0 0
        %2272 = vmatpush1.bf16.xpose.msra.mxu0 0
        %2273 = vmatprep.subr.bf16.mxu0 0
        %2274 = vmatpush1.bf16.xpose.msra.mxu0 0
        %2275 = vmatprep.subr.bf16.mxu0 0
        %2276 = vmatpush1.bf16.xpose.msra.mxu0 0
        %2277 = vmatprep.subr.bf16.mxu0 0
        %2278 = vmatpush1.bf16.xpose.msra.mxu0 0
        %2279 = vmatprep.subr.bf16.mxu0 0
        %2280 = vmatpush1.bf16.xpose.msra.mxu0 0
        %2281 = vmatprep.subr.bf16.mxu0 0
        %2282 = vmatpush1.bf16.xpose.msra.mxu0 0
        %2283 = vmatprep.mubr.bf16.mxu0 0
        %2284 = vmatmul.mubr.bf16.gmra.mrb[0].mxu0 %v2204
        %v2285 = vpop.f32.mrb[0].mxu0
        %v2286 = vadd.f32 %v1776, %v2285
        %v2287 = vpop.f32.mrb[0].mxu0
        %v2288 = vpop.f32.mrb[0].mxu0
        %v2289 = vadd.f32 %v1777, %v2288
        %v2290 = vpop.f32.mrb[0].mxu0
        %2291 = vmatprep.mubr.bf16.mxu0 0
        %2292 = vmatmul.mubr.bf16.gmra.mrb[0].mxu0 %v2207
        %v2293 = vpop.f32.mrb[0].mxu0
        %v2294 = vadd.f32 %v1778, %v2293
        %v2295 = vpop.f32.mrb[0].mxu0
        %v2296 = vpop.f32.mrb[0].mxu0
        %v2297 = vadd.f32 %v1779, %v2296
        %v2298 = vpop.f32.mrb[0].mxu0
        %2299 = vmatprep.mubr.bf16.mxu0 0
        %2300 = vmatmul.mubr.bf16.gmra.mrb[0].mxu0 %v2210
        %v2301 = vpop.f32.mrb[0].mxu0
        %v2302 = vadd.f32 %v1780, %v2301
        %v2303 = vpop.f32.mrb[0].mxu0
        %v2304 = vpop.f32.mrb[0].mxu0
        %v2305 = vadd.f32 %v1781, %v2304
        %v2306 = vpop.f32.mrb[0].mxu0
        %2307 = vmatprep.mubr.bf16.mxu0 0
        %2308 = vmatmul.mubr.bf16.gmra.mrb[0].mxu0 %v2213
        %v2309 = vpop.f32.mrb[0].mxu0
        %v2310 = vadd.f32 %v1782, %v2309
        %v2311 = vpop.f32.mrb[0].mxu0
        %v2312 = vpop.f32.mrb[0].mxu0
        %v2313 = vadd.f32 %v1783, %v2312
        %v2314 = vpop.f32.mrb[0].mxu0
        %2315 = vmatprep.mubr.bf16.mxu0 0
        %2316 = vmatmul.mubr.bf16.gmra.mrb[0].mxu0 %v2216
        %v2317 = vpop.f32.mrb[0].mxu0
        %v2318 = vadd.f32 %v1784, %v2317
        %v2319 = vpop.f32.mrb[0].mxu0
        %v2320 = vpop.f32.mrb[0].mxu0
        %v2321 = vadd.f32 %v1785, %v2320
        %v2322 = vpop.f32.mrb[0].mxu0
        %2323 = vmatprep.mubr.bf16.mxu0 0
        %2324 = vmatmul.mubr.bf16.gmra.mrb[0].mxu0 %v2219
        %v2325 = vpop.f32.mrb[0].mxu0
        %v2326 = vadd.f32 %v1786, %v2325
        %v2327 = vpop.f32.mrb[0].mxu0
        %v2328 = vpop.f32.mrb[0].mxu0
        %v2329 = vadd.f32 %v1787, %v2328
        %v2330 = vpop.f32.mrb[0].mxu0
        %2331 = vmatprep.mubr.bf16.mxu0 0
        %2332 = vmatmul.mubr.bf16.gmra.mrb[0].mxu0 %v2222
        %v2333 = vpop.f32.mrb[0].mxu0
        %v2334 = vadd.f32 %v1788, %v2333
        %v2335 = vpop.f32.mrb[0].mxu0
        %v2336 = vpop.f32.mrb[0].mxu0
        %v2337 = vadd.f32 %v1789, %v2336
        %v2338 = vpop.f32.mrb[0].mxu0
        %2339 = vmatprep.mubr.bf16.mxu0 0
        %2340 = vmatmul.mubr.bf16.gmra.mrb[0].mxu0 %v2225
        %v2341 = vpop.f32.mrb[0].mxu0
        %v2342 = vadd.f32 %v1790, %v2341
        %v2343 = vpop.f32.mrb[0].mxu0
        %v2344 = vpop.f32.mrb[0].mxu0
        %v2345 = vadd.f32 %v1791, %v2344
        %v2346 = vpop.f32.mrb[0].mxu0
        %2347 = vdwg.mxu0
        %v2364 = vunpack.c.l.b16 %v1680
        %v2365 = vunpack.c.l.b16 %v1681
        %v2366 = vunpack.c.l.b16 %v1682
        %v2367 = vunpack.c.l.b16 %v1683
        %v2368 = vunpack.c.l.b16 %v1684
        %v2369 = vunpack.c.l.b16 %v1685
        %v2370 = vunpack.c.l.b16 %v1686
        %v2371 = vunpack.c.l.b16 %v1687
        %v2372 = vunpack.c.l.b16 %v1688
        %v2373 = vunpack.c.l.b16 %v1689
        %v2374 = vunpack.c.l.b16 %v1690
        %v2375 = vunpack.c.l.b16 %v1691
        %v2376 = vunpack.c.l.b16 %v1692
        %v2377 = vunpack.c.l.b16 %v1693
        %v2378 = vunpack.c.l.b16 %v1694
        %v2379 = vunpack.c.l.b16 %v1695
        %v2380 = vpack.c.b16 %v2365, %v2364
        %v2381 = vpack.c.b16 %v2367, %v2366
        %v2382 = vpack.c.b16 %v2369, %v2368
        %v2383 = vpack.c.b16 %v2371, %v2370
        %v2384 = vpack.c.b16 %v2373, %v2372
        %v2385 = vpack.c.b16 %v2375, %v2374
        %v2386 = vpack.c.b16 %v2377, %v2376
        %v2387 = vpack.c.b16 %v2379, %v2378
        %v2389 = vsel %vm1832, %v1624, 0
        %v2392 = vsel %vm1832, %v1625, 0
        %v2395 = vsel %vm1832, %v1626, 0
        %v2398 = vsel %vm1832, %v1627, 0
        %v2401 = vsel %vm1832, %v1628, 0
        %v2404 = vsel %vm1832, %v1629, 0
        %v2407 = vsel %vm1832, %v1630, 0
        %v2410 = vsel %vm1832, %v1631, 0
        %v2413 = vsel %vm1832, %v2380, 0
        %v2416 = vsel %vm1832, %v2381, 0
        %v2419 = vsel %vm1832, %v2382, 0
        %v2422 = vsel %vm1832, %v2383, 0
        %v2425 = vsel %vm1832, %v2384, 0
        %v2428 = vsel %vm1832, %v2385, 0
        %v2431 = vsel %vm1832, %v2386, 0
        %v2434 = vsel %vm1832, %v2387, 0
        %2436 = vmatprep.subr.bf16.mxu0 0
        %2437 = vmatpush1.bf16.xpose.msra.mxu0 %v2413
        %2438 = vmatprep.subr.bf16.mxu0 0
        %2439 = vmatpush1.bf16.xpose.msra.mxu0 %v2416
        %2440 = vmatprep.subr.bf16.mxu0 0
        %2441 = vmatpush1.bf16.xpose.msra.mxu0 %v2419
        %2442 = vmatprep.subr.bf16.mxu0 0
        %2443 = vmatpush1.bf16.xpose.msra.mxu0 %v2422
        %2444 = vmatprep.subr.bf16.mxu0 0
        %2445 = vmatpush1.bf16.xpose.msra.mxu0 %v2425
        %2446 = vmatprep.subr.bf16.mxu0 0
        %2447 = vmatpush1.bf16.xpose.msra.mxu0 %v2428
        %2448 = vmatprep.subr.bf16.mxu0 0
        %2449 = vmatpush1.bf16.xpose.msra.mxu0 %v2431
        %2450 = vmatprep.subr.bf16.mxu0 0
        %2451 = vmatpush1.bf16.xpose.msra.mxu0 %v2434
        %2452 = vmatprep.subr.bf16.mxu0 0
        %2453 = vmatpush1.bf16.xpose.msra.mxu0 0
        %2454 = vmatprep.subr.bf16.mxu0 0
        %2455 = vmatpush1.bf16.xpose.msra.mxu0 0
        %2456 = vmatprep.subr.bf16.mxu0 0
        %2457 = vmatpush1.bf16.xpose.msra.mxu0 0
        %2458 = vmatprep.subr.bf16.mxu0 0
        %2459 = vmatpush1.bf16.xpose.msra.mxu0 0
        %2460 = vmatprep.subr.bf16.mxu0 0
        %2461 = vmatpush1.bf16.xpose.msra.mxu0 0
        %2462 = vmatprep.subr.bf16.mxu0 0
        %2463 = vmatpush1.bf16.xpose.msra.mxu0 0
        %2464 = vmatprep.subr.bf16.mxu0 0
        %2465 = vmatpush1.bf16.xpose.msra.mxu0 0
        %2466 = vmatprep.subr.bf16.mxu0 0
        %2467 = vmatpush1.bf16.xpose.msra.mxu0 0
        %2468 = vmatprep.mubr.bf16.mxu0 0
        %2469 = vmatmul.mubr.bf16.gmra.mrb[0].mxu0 %v2389
        %v2470 = vpop.f32.mrb[0].mxu0
        %v2471 = vadd.f32 %v1776, %v2470
        %v2472 = vpop.f32.mrb[0].mxu0
        %v2473 = vpop.f32.mrb[0].mxu0
        %v2474 = vadd.f32 %v1777, %v2473
        %v2475 = vpop.f32.mrb[0].mxu0
        %2476 = vmatprep.mubr.bf16.mxu0 0
        %2477 = vmatmul.mubr.bf16.gmra.mrb[0].mxu0 %v2392
        %v2478 = vpop.f32.mrb[0].mxu0
        %v2479 = vadd.f32 %v1778, %v2478
        %v2480 = vpop.f32.mrb[0].mxu0
        %v2481 = vpop.f32.mrb[0].mxu0
        %v2482 = vadd.f32 %v1779, %v2481
        %v2483 = vpop.f32.mrb[0].mxu0
        %2484 = vmatprep.mubr.bf16.mxu0 0
        %2485 = vmatmul.mubr.bf16.gmra.mrb[0].mxu0 %v2395
        %v2486 = vpop.f32.mrb[0].mxu0
        %v2487 = vadd.f32 %v1780, %v2486
        %v2488 = vpop.f32.mrb[0].mxu0
        %v2489 = vpop.f32.mrb[0].mxu0
        %v2490 = vadd.f32 %v1781, %v2489
        %v2491 = vpop.f32.mrb[0].mxu0
        %2492 = vmatprep.mubr.bf16.mxu0 0
        %2493 = vmatmul.mubr.bf16.gmra.mrb[0].mxu0 %v2398
        %v2494 = vpop.f32.mrb[0].mxu0
        %v2495 = vadd.f32 %v1782, %v2494
        %v2496 = vpop.f32.mrb[0].mxu0
        %v2497 = vpop.f32.mrb[0].mxu0
        %v2498 = vadd.f32 %v1783, %v2497
        %v2499 = vpop.f32.mrb[0].mxu0
        %2500 = vmatprep.mubr.bf16.mxu0 0
        %2501 = vmatmul.mubr.bf16.gmra.mrb[0].mxu0 %v2401
        %v2502 = vpop.f32.mrb[0].mxu0
        %v2503 = vadd.f32 %v1784, %v2502
        %v2504 = vpop.f32.mrb[0].mxu0
        %v2505 = vpop.f32.mrb[0].mxu0
        %v2506 = vadd.f32 %v1785, %v2505
        %v2507 = vpop.f32.mrb[0].mxu0
        %2508 = vmatprep.mubr.bf16.mxu0 0
        %2509 = vmatmul.mubr.bf16.gmra.mrb[0].mxu0 %v2404
        %v2510 = vpop.f32.mrb[0].mxu0
        %v2511 = vadd.f32 %v1786, %v2510
        %v2512 = vpop.f32.mrb[0].mxu0
        %v2513 = vpop.f32.mrb[0].mxu0
        %v2514 = vadd.f32 %v1787, %v2513
        %v2515 = vpop.f32.mrb[0].mxu0
        %2516 = vmatprep.mubr.bf16.mxu0 0
        %2517 = vmatmul.mubr.bf16.gmra.mrb[0].mxu0 %v2407
        %v2518 = vpop.f32.mrb[0].mxu0
        %v2519 = vadd.f32 %v1788, %v2518
        %v2520 = vpop.f32.mrb[0].mxu0
        %v2521 = vpop.f32.mrb[0].mxu0
        %v2522 = vadd.f32 %v1789, %v2521
        %v2523 = vpop.f32.mrb[0].mxu0
        %2524 = vmatprep.mubr.bf16.mxu0 0
        %2525 = vmatmul.mubr.bf16.gmra.mrb[0].mxu0 %v2410
        %v2526 = vpop.f32.mrb[0].mxu0
        %v2527 = vadd.f32 %v1790, %v2526
        %v2528 = vpop.f32.mrb[0].mxu0
        %v2529 = vpop.f32.mrb[0].mxu0
        %v2530 = vadd.f32 %v1791, %v2529
        %v2531 = vpop.f32.mrb[0].mxu0
        %2532 = vdwg.mxu0
        %v2533 = vld [vmem:[#allocation3] sm:$0xff]
        %v2534 = vld [vmem:[#allocation3 + $0x8] sm:$0xff]
        %v2535 = vld [vmem:[#allocation3 + $0x10] sm:$0xff]
        %v2536 = vld [vmem:[#allocation3 + $0x18] sm:$0xff]
        %v2537 = vld [vmem:[#allocation3 + $0x20] sm:$0xff]
        %v2538 = vld [vmem:[#allocation3 + $0x28] sm:$0xff]
        %v2539 = vld [vmem:[#allocation3 + $0x30] sm:$0xff]
        %v2540 = vld [vmem:[#allocation3 + $0x38] sm:$0xff]
        %v2541 = vld [vmem:[#allocation3 + $0x40] sm:$0xff]
        %v2542 = vld [vmem:[#allocation3 + $0x48] sm:$0xff]
        %v2543 = vld [vmem:[#allocation3 + $0x50] sm:$0xff]
        %v2544 = vld [vmem:[#allocation3 + $0x58] sm:$0xff]
        %v2545 = vld [vmem:[#allocation3 + $0x60] sm:$0xff]
        %v2546 = vld [vmem:[#allocation3 + $0x68] sm:$0xff]
        %v2547 = vld [vmem:[#allocation3 + $0x70] sm:$0xff]
        %v2548 = vld [vmem:[#allocation3 + $0x78] sm:$0xff]
        %v2549 = vld [vmem:[#allocation3 + $0x80] sm:$0xff]
        %v2550 = vld [vmem:[#allocation3 + $0x88] sm:$0xff]
        %v2551 = vld [vmem:[#allocation3 + $0x90] sm:$0xff]
        %v2552 = vld [vmem:[#allocation3 + $0x98] sm:$0xff]
        %v2553 = vld [vmem:[#allocation3 + $0xa0] sm:$0xff]
        %v2554 = vld [vmem:[#allocation3 + $0xa8] sm:$0xff]
        %v2555 = vld [vmem:[#allocation3 + $0xb0] sm:$0xff]
        %v2556 = vld [vmem:[#allocation3 + $0xb8] sm:$0xff]
        %v2557 = vld [vmem:[#allocation3 + $0xc0] sm:$0xff]
        %v2558 = vld [vmem:[#allocation3 + $0xc8] sm:$0xff]
        %v2559 = vld [vmem:[#allocation3 + $0xd0] sm:$0xff]
        %v2560 = vld [vmem:[#allocation3 + $0xd8] sm:$0xff]
        %v2561 = vld [vmem:[#allocation3 + $0xe0] sm:$0xff]
        %v2562 = vld [vmem:[#allocation3 + $0xe8] sm:$0xff]
        %v2563 = vld [vmem:[#allocation3 + $0xf0] sm:$0xff]
        %v2564 = vld [vmem:[#allocation3 + $0xf8] sm:$0xff]
        %v2565 = vld [vmem:[#allocation3 + $0x100] sm:$0xff]
        %v2566 = vld [vmem:[#allocation3 + $0x108] sm:$0xff]
        %v2567 = vld [vmem:[#allocation3 + $0x110] sm:$0xff]
        %v2568 = vld [vmem:[#allocation3 + $0x118] sm:$0xff]
        %v2569 = vld [vmem:[#allocation3 + $0x120] sm:$0xff]
        %v2570 = vld [vmem:[#allocation3 + $0x128] sm:$0xff]
        %v2571 = vld [vmem:[#allocation3 + $0x130] sm:$0xff]
        %v2572 = vld [vmem:[#allocation3 + $0x138] sm:$0xff]
        %v2573 = vld [vmem:[#allocation3 + $0x140] sm:$0xff]
        %v2574 = vld [vmem:[#allocation3 + $0x148] sm:$0xff]
        %v2575 = vld [vmem:[#allocation3 + $0x150] sm:$0xff]
        %v2576 = vld [vmem:[#allocation3 + $0x158] sm:$0xff]
        %v2577 = vld [vmem:[#allocation3 + $0x160] sm:$0xff]
        %v2578 = vld [vmem:[#allocation3 + $0x168] sm:$0xff]
        %v2579 = vld [vmem:[#allocation3 + $0x170] sm:$0xff]
        %v2580 = vld [vmem:[#allocation3 + $0x178] sm:$0xff]
        %v2581 = vld [vmem:[#allocation3 + $0x180] sm:$0xff]
        %v2582 = vld [vmem:[#allocation3 + $0x188] sm:$0xff]
        %v2583 = vld [vmem:[#allocation3 + $0x190] sm:$0xff]
        %v2584 = vld [vmem:[#allocation3 + $0x198] sm:$0xff]
        %v2585 = vld [vmem:[#allocation3 + $0x1a0] sm:$0xff]
        %v2586 = vld [vmem:[#allocation3 + $0x1a8] sm:$0xff]
        %v2587 = vld [vmem:[#allocation3 + $0x1b0] sm:$0xff]
        %v2588 = vld [vmem:[#allocation3 + $0x1b8] sm:$0xff]
        %v2589 = vld [vmem:[#allocation3 + $0x1c0] sm:$0xff]
        %v2590 = vld [vmem:[#allocation3 + $0x1c8] sm:$0xff]
        %v2591 = vld [vmem:[#allocation3 + $0x1d0] sm:$0xff]
        %v2592 = vld [vmem:[#allocation3 + $0x1d8] sm:$0xff]
        %v2593 = vld [vmem:[#allocation3 + $0x1e0] sm:$0xff]
        %v2594 = vld [vmem:[#allocation3 + $0x1e8] sm:$0xff]
        %v2595 = vld [vmem:[#allocation3 + $0x1f0] sm:$0xff]
        %v2596 = vld [vmem:[#allocation3 + $0x1f8] sm:$0xff]
        %2597 = vmax.xlane.f32.xlu0 %v1916
        %v2598 = vpop.xlane.xlu0 %2597
        %2599 = vmax.xlane.f32.xlu0 %v1919
        %v2600 = vpop.xlane.xlu0 %2599
        %2601 = vmax.xlane.f32.xlu0 %v1924
        %v2602 = vpop.xlane.xlu0 %2601
        %2603 = vmax.xlane.f32.xlu0 %v1927
        %v2604 = vpop.xlane.xlu0 %2603
        %2605 = vmax.xlane.f32.xlu0 %v1932
        %v2606 = vpop.xlane.xlu0 %2605
        %2607 = vmax.xlane.f32.xlu0 %v1935
        %v2608 = vpop.xlane.xlu0 %2607
        %2609 = vmax.xlane.f32.xlu0 %v1940
        %v2610 = vpop.xlane.xlu0 %2609
        %2611 = vmax.xlane.f32.xlu0 %v1943
        %v2612 = vpop.xlane.xlu0 %2611
        %2613 = vmax.xlane.f32.xlu0 %v1948
        %v2614 = vpop.xlane.xlu0 %2613
        %2615 = vmax.xlane.f32.xlu0 %v1951
        %v2616 = vpop.xlane.xlu0 %2615
        %2617 = vmax.xlane.f32.xlu0 %v1956
        %v2618 = vpop.xlane.xlu0 %2617
        %2619 = vmax.xlane.f32.xlu0 %v1959
        %v2620 = vpop.xlane.xlu0 %2619
        %2621 = vmax.xlane.f32.xlu0 %v1964
        %v2622 = vpop.xlane.xlu0 %2621
        %2623 = vmax.xlane.f32.xlu0 %v1967
        %v2624 = vpop.xlane.xlu0 %2623
        %2625 = vmax.xlane.f32.xlu0 %v1972
        %v2626 = vpop.xlane.xlu0 %2625
        %2627 = vmax.xlane.f32.xlu0 %v1975
        %v2628 = vpop.xlane.xlu0 %2627
        %2629 = vmax.xlane.f32.xlu0 %v2101
        %v2630 = vpop.xlane.xlu0 %2629
        %2631 = vmax.xlane.f32.xlu0 %v2104
        %v2632 = vpop.xlane.xlu0 %2631
        %2633 = vmax.xlane.f32.xlu0 %v2109
        %v2634 = vpop.xlane.xlu0 %2633
        %2635 = vmax.xlane.f32.xlu0 %v2112
        %v2636 = vpop.xlane.xlu0 %2635
        %2637 = vmax.xlane.f32.xlu0 %v2117
        %v2638 = vpop.xlane.xlu0 %2637
        %2639 = vmax.xlane.f32.xlu0 %v2120
        %v2640 = vpop.xlane.xlu0 %2639
        %2641 = vmax.xlane.f32.xlu0 %v2125
        %v2642 = vpop.xlane.xlu0 %2641
        %2643 = vmax.xlane.f32.xlu0 %v2128
        %v2644 = vpop.xlane.xlu0 %2643
        %2645 = vmax.xlane.f32.xlu0 %v2133
        %v2646 = vpop.xlane.xlu0 %2645
        %2647 = vmax.xlane.f32.xlu0 %v2136
        %v2648 = vpop.xlane.xlu0 %2647
        %2649 = vmax.xlane.f32.xlu0 %v2141
        %v2650 = vpop.xlane.xlu0 %2649
        %2651 = vmax.xlane.f32.xlu0 %v2144
        %v2652 = vpop.xlane.xlu0 %2651
        %2653 = vmax.xlane.f32.xlu0 %v2149
        %v2654 = vpop.xlane.xlu0 %2653
        %2655 = vmax.xlane.f32.xlu0 %v2152
        %v2656 = vpop.xlane.xlu0 %2655
        %2657 = vmax.xlane.f32.xlu0 %v2157
        %v2658 = vpop.xlane.xlu0 %2657
        %2659 = vmax.xlane.f32.xlu0 %v2160
        %v2660 = vpop.xlane.xlu0 %2659
        %2661 = vmax.xlane.f32.xlu0 %v2286
        %v2662 = vpop.xlane.xlu0 %2661
        %2663 = vmax.xlane.f32.xlu0 %v2289
        %v2664 = vpop.xlane.xlu0 %2663
        %2665 = vmax.xlane.f32.xlu0 %v2294
        %v2666 = vpop.xlane.xlu0 %2665
        %2667 = vmax.xlane.f32.xlu0 %v2297
        %v2668 = vpop.xlane.xlu0 %2667
        %2669 = vmax.xlane.f32.xlu0 %v2302
        %v2670 = vpop.xlane.xlu0 %2669
        %2671 = vmax.xlane.f32.xlu0 %v2305
        %v2672 = vpop.xlane.xlu0 %2671
        %2673 = vmax.xlane.f32.xlu0 %v2310
        %v2674 = vpop.xlane.xlu0 %2673
        %2675 = vmax.xlane.f32.xlu0 %v2313
        %v2676 = vpop.xlane.xlu0 %2675
        %2677 = vmax.xlane.f32.xlu0 %v2318
        %v2678 = vpop.xlane.xlu0 %2677
        %2679 = vmax.xlane.f32.xlu0 %v2321
        %v2680 = vpop.xlane.xlu0 %2679
        %2681 = vmax.xlane.f32.xlu0 %v2326
        %v2682 = vpop.xlane.xlu0 %2681
        %2683 = vmax.xlane.f32.xlu0 %v2329
        %v2684 = vpop.xlane.xlu0 %2683
        %2685 = vmax.xlane.f32.xlu0 %v2334
        %v2686 = vpop.xlane.xlu0 %2685
        %2687 = vmax.xlane.f32.xlu0 %v2337
        %v2688 = vpop.xlane.xlu0 %2687
        %2689 = vmax.xlane.f32.xlu0 %v2342
        %v2690 = vpop.xlane.xlu0 %2689
        %2691 = vmax.xlane.f32.xlu0 %v2345
        %v2692 = vpop.xlane.xlu0 %2691
        %2693 = vmax.xlane.f32.xlu0 %v2471
        %v2694 = vpop.xlane.xlu0 %2693
        %2695 = vmax.xlane.f32.xlu0 %v2474
        %v2696 = vpop.xlane.xlu0 %2695
        %2697 = vmax.xlane.f32.xlu0 %v2479
        %v2698 = vpop.xlane.xlu0 %2697
        %2699 = vmax.xlane.f32.xlu0 %v2482
        %v2700 = vpop.xlane.xlu0 %2699
        %2701 = vmax.xlane.f32.xlu0 %v2487
        %v2702 = vpop.xlane.xlu0 %2701
        %2703 = vmax.xlane.f32.xlu0 %v2490
        %v2704 = vpop.xlane.xlu0 %2703
        %2705 = vmax.xlane.f32.xlu0 %v2495
        %v2706 = vpop.xlane.xlu0 %2705
        %2707 = vmax.xlane.f32.xlu0 %v2498
        %v2708 = vpop.xlane.xlu0 %2707
        %2709 = vmax.xlane.f32.xlu0 %v2503
        %v2710 = vpop.xlane.xlu0 %2709
        %2711 = vmax.xlane.f32.xlu0 %v2506
        %v2712 = vpop.xlane.xlu0 %2711
        %2713 = vmax.xlane.f32.xlu0 %v2511
        %v2714 = vpop.xlane.xlu0 %2713
        %2715 = vmax.xlane.f32.xlu0 %v2514
        %v2716 = vpop.xlane.xlu0 %2715
        %2717 = vmax.xlane.f32.xlu0 %v2519
        %v2718 = vpop.xlane.xlu0 %2717
        %2719 = vmax.xlane.f32.xlu0 %v2522
        %v2720 = vpop.xlane.xlu0 %2719
        %2721 = vmax.xlane.f32.xlu0 %v2527
        %v2722 = vpop.xlane.xlu0 %2721
        %2723 = vmax.xlane.f32.xlu0 %v2530
        %v2724 = vpop.xlane.xlu0 %2723
        %v2725 = vmax.f32 %v2533, %v2598
        %v2726 = vmax.f32 %v2534, %v2600
        %v2727 = vmax.f32 %v2535, %v2602
        %v2728 = vmax.f32 %v2536, %v2604
        %v2729 = vmax.f32 %v2537, %v2606
        %v2730 = vmax.f32 %v2538, %v2608
        %v2731 = vmax.f32 %v2539, %v2610
        %v2732 = vmax.f32 %v2540, %v2612
        %v2733 = vmax.f32 %v2541, %v2614
        %v2734 = vmax.f32 %v2542, %v2616
        %v2735 = vmax.f32 %v2543, %v2618
        %v2736 = vmax.f32 %v2544, %v2620
        %v2737 = vmax.f32 %v2545, %v2622
        %v2738 = vmax.f32 %v2546, %v2624
        %v2739 = vmax.f32 %v2547, %v2626
        %v2740 = vmax.f32 %v2548, %v2628
        %v2741 = vmax.f32 %v2549, %v2630
        %v2742 = vmax.f32 %v2550, %v2632
        %v2743 = vmax.f32 %v2551, %v2634
        %v2744 = vmax.f32 %v2552, %v2636
        %v2745 = vmax.f32 %v2553, %v2638
        %v2746 = vmax.f32 %v2554, %v2640
        %v2747 = vmax.f32 %v2555, %v2642
        %v2748 = vmax.f32 %v2556, %v2644
        %v2749 = vmax.f32 %v2557, %v2646
        %v2750 = vmax.f32 %v2558, %v2648
        %v2751 = vmax.f32 %v2559, %v2650
        %v2752 = vmax.f32 %v2560, %v2652
        %v2753 = vmax.f32 %v2561, %v2654
        %v2754 = vmax.f32 %v2562, %v2656
        %v2755 = vmax.f32 %v2563, %v2658
        %v2756 = vmax.f32 %v2564, %v2660
        %v2757 = vmax.f32 %v2565, %v2662
        %v2758 = vmax.f32 %v2566, %v2664
        %v2759 = vmax.f32 %v2567, %v2666
        %v2760 = vmax.f32 %v2568, %v2668
        %v2761 = vmax.f32 %v2569, %v2670
        %v2762 = vmax.f32 %v2570, %v2672
        %v2763 = vmax.f32 %v2571, %v2674
        %v2764 = vmax.f32 %v2572, %v2676
        %v2765 = vmax.f32 %v2573, %v2678
        %v2766 = vmax.f32 %v2574, %v2680
        %v2767 = vmax.f32 %v2575, %v2682
        %v2768 = vmax.f32 %v2576, %v2684
        %v2769 = vmax.f32 %v2577, %v2686
        %v2770 = vmax.f32 %v2578, %v2688
        %v2771 = vmax.f32 %v2579, %v2690
        %v2772 = vmax.f32 %v2580, %v2692
        %v2773 = vmax.f32 %v2581, %v2694
        %v2774 = vmax.f32 %v2582, %v2696
        %v2775 = vmax.f32 %v2583, %v2698
        %v2776 = vmax.f32 %v2584, %v2700
        %v2777 = vmax.f32 %v2585, %v2702
        %v2778 = vmax.f32 %v2586, %v2704
        %v2779 = vmax.f32 %v2587, %v2706
        %v2780 = vmax.f32 %v2588, %v2708
        %v2781 = vmax.f32 %v2589, %v2710
        %v2782 = vmax.f32 %v2590, %v2712
        %v2783 = vmax.f32 %v2591, %v2714
        %v2784 = vmax.f32 %v2592, %v2716
        %v2785 = vmax.f32 %v2593, %v2718
        %v2786 = vmax.f32 %v2594, %v2720
        %v2787 = vmax.f32 %v2595, %v2722
        %v2788 = vmax.f32 %v2596, %v2724
        %v2789 = vsub.f32 %v2533, %v2725
        %v2790 = vsub.f32 %v2534, %v2726
        %v2791 = vsub.f32 %v2535, %v2727
        %v2792 = vsub.f32 %v2536, %v2728
        %v2793 = vsub.f32 %v2537, %v2729
        %v2794 = vsub.f32 %v2538, %v2730
        %v2795 = vsub.f32 %v2539, %v2731
        %v2796 = vsub.f32 %v2540, %v2732
        %v2797 = vsub.f32 %v2541, %v2733
        %v2798 = vsub.f32 %v2542, %v2734
        %v2799 = vsub.f32 %v2543, %v2735
        %v2800 = vsub.f32 %v2544, %v2736
        %v2801 = vsub.f32 %v2545, %v2737
        %v2802 = vsub.f32 %v2546, %v2738
        %v2803 = vsub.f32 %v2547, %v2739
        %v2804 = vsub.f32 %v2548, %v2740
        %v2805 = vsub.f32 %v2549, %v2741
        %v2806 = vsub.f32 %v2550, %v2742
        %v2807 = vsub.f32 %v2551, %v2743
        %v2808 = vsub.f32 %v2552, %v2744
        %v2809 = vsub.f32 %v2553, %v2745
        %v2810 = vsub.f32 %v2554, %v2746
        %v2811 = vsub.f32 %v2555, %v2747
        %v2812 = vsub.f32 %v2556, %v2748
        %v2813 = vsub.f32 %v2557, %v2749
        %v2814 = vsub.f32 %v2558, %v2750
        %v2815 = vsub.f32 %v2559, %v2751
        %v2816 = vsub.f32 %v2560, %v2752
        %v2817 = vsub.f32 %v2561, %v2753
        %v2818 = vsub.f32 %v2562, %v2754
        %v2819 = vsub.f32 %v2563, %v2755
        %v2820 = vsub.f32 %v2564, %v2756
        %v2821 = vsub.f32 %v2565, %v2757
        %v2822 = vsub.f32 %v2566, %v2758
        %v2823 = vsub.f32 %v2567, %v2759
        %v2824 = vsub.f32 %v2568, %v2760
        %v2825 = vsub.f32 %v2569, %v2761
        %v2826 = vsub.f32 %v2570, %v2762
        %v2827 = vsub.f32 %v2571, %v2763
        %v2828 = vsub.f32 %v2572, %v2764
        %v2829 = vsub.f32 %v2573, %v2765
        %v2830 = vsub.f32 %v2574, %v2766
        %v2831 = vsub.f32 %v2575, %v2767
        %v2832 = vsub.f32 %v2576, %v2768
        %v2833 = vsub.f32 %v2577, %v2769
        %v2834 = vsub.f32 %v2578, %v2770
        %v2835 = vsub.f32 %v2579, %v2771
        %v2836 = vsub.f32 %v2580, %v2772
        %v2837 = vsub.f32 %v2581, %v2773
        %v2838 = vsub.f32 %v2582, %v2774
        %v2839 = vsub.f32 %v2583, %v2775
        %v2840 = vsub.f32 %v2584, %v2776
        %v2841 = vsub.f32 %v2585, %v2777
        %v2842 = vsub.f32 %v2586, %v2778
        %v2843 = vsub.f32 %v2587, %v2779
        %v2844 = vsub.f32 %v2588, %v2780
        %v2845 = vsub.f32 %v2589, %v2781
        %v2846 = vsub.f32 %v2590, %v2782
        %v2847 = vsub.f32 %v2591, %v2783
        %v2848 = vsub.f32 %v2592, %v2784
        %v2849 = vsub.f32 %v2593, %v2785
        %v2850 = vsub.f32 %v2594, %v2786
        %v2851 = vsub.f32 %v2595, %v2787
        %v2852 = vsub.f32 %v2596, %v2788
        %v2853 = vpow.pop %v2789
        %v2854 = vpow.pop %v2790
        %v2855 = vpow.pop %v2791
        %v2856 = vpow.pop %v2792
        %v2857 = vpow.pop %v2793
        %v2858 = vpow.pop %v2794
        %v2859 = vpow.pop %v2795
        %v2860 = vpow.pop %v2796
        %v2861 = vpow.pop %v2797
        %v2862 = vpow.pop %v2798
        %v2863 = vpow.pop %v2799
        %v2864 = vpow.pop %v2800
        %v2865 = vpow.pop %v2801
        %v2866 = vpow.pop %v2802
        %v2867 = vpow.pop %v2803
        %v2868 = vpow.pop %v2804
        %v2869 = vpow.pop %v2805
        %v2870 = vpow.pop %v2806
        %v2871 = vpow.pop %v2807
        %v2872 = vpow.pop %v2808
        %v2873 = vpow.pop %v2809
        %v2874 = vpow.pop %v2810
        %v2875 = vpow.pop %v2811
        %v2876 = vpow.pop %v2812
        %v2877 = vpow.pop %v2813
        %v2878 = vpow.pop %v2814
        %v2879 = vpow.pop %v2815
        %v2880 = vpow.pop %v2816
        %v2881 = vpow.pop %v2817
        %v2882 = vpow.pop %v2818
        %v2883 = vpow.pop %v2819
        %v2884 = vpow.pop %v2820
        %v2885 = vpow.pop %v2821
        %v2886 = vpow.pop %v2822
        %v2887 = vpow.pop %v2823
        %v2888 = vpow.pop %v2824
        %v2889 = vpow.pop %v2825
        %v2890 = vpow.pop %v2826
        %v2891 = vpow.pop %v2827
        %v2892 = vpow.pop %v2828
        %v2893 = vpow.pop %v2829
        %v2894 = vpow.pop %v2830
        %v2895 = vpow.pop %v2831
        %v2896 = vpow.pop %v2832
        %v2897 = vpow.pop %v2833
        %v2898 = vpow.pop %v2834
        %v2899 = vpow.pop %v2835
        %v2900 = vpow.pop %v2836
        %v2901 = vpow.pop %v2837
        %v2902 = vpow.pop %v2838
        %v2903 = vpow.pop %v2839
        %v2904 = vpow.pop %v2840
        %v2905 = vpow.pop %v2841
        %v2906 = vpow.pop %v2842
        %v2907 = vpow.pop %v2843
        %v2908 = vpow.pop %v2844
        %v2909 = vpow.pop %v2845
        %v2910 = vpow.pop %v2846
        %v2911 = vpow.pop %v2847
        %v2912 = vpow.pop %v2848
        %v2913 = vpow.pop %v2849
        %v2914 = vpow.pop %v2850
        %v2915 = vpow.pop %v2851
        %v2916 = vpow.pop %v2852
        %2918 = vset.pattern.permute.xlu0 0
        %2919 = vperm.xlu0 %2918, %v2725
        %v2920 = vpop.permute.xlu0 %2919
        %2923 = vset.pattern.permute.xlu0 0
        %2924 = vperm.xlu0 %2923, %v2726
        %v2925 = vpop.permute.xlu0 %2924
        %2928 = vset.pattern.permute.xlu0 0
        %2929 = vperm.xlu0 %2928, %v2727
        %v2930 = vpop.permute.xlu0 %2929
        %2933 = vset.pattern.permute.xlu0 0
        %2934 = vperm.xlu0 %2933, %v2728
        %v2935 = vpop.permute.xlu0 %2934
        %2938 = vset.pattern.permute.xlu0 0
        %2939 = vperm.xlu0 %2938, %v2729
        %v2940 = vpop.permute.xlu0 %2939
        %2943 = vset.pattern.permute.xlu0 0
        %2944 = vperm.xlu0 %2943, %v2730
        %v2945 = vpop.permute.xlu0 %2944
        %2948 = vset.pattern.permute.xlu0 0
        %2949 = vperm.xlu0 %2948, %v2731
        %v2950 = vpop.permute.xlu0 %2949
        %2953 = vset.pattern.permute.xlu0 0
        %2954 = vperm.xlu0 %2953, %v2732
        %v2955 = vpop.permute.xlu0 %2954
        %2958 = vset.pattern.permute.xlu0 0
        %2959 = vperm.xlu0 %2958, %v2733
        %v2960 = vpop.permute.xlu0 %2959
        %2963 = vset.pattern.permute.xlu0 0
        %2964 = vperm.xlu0 %2963, %v2734
        %v2965 = vpop.permute.xlu0 %2964
        %2968 = vset.pattern.permute.xlu0 0
        %2969 = vperm.xlu0 %2968, %v2735
        %v2970 = vpop.permute.xlu0 %2969
        %2973 = vset.pattern.permute.xlu0 0
        %2974 = vperm.xlu0 %2973, %v2736
        %v2975 = vpop.permute.xlu0 %2974
        %2978 = vset.pattern.permute.xlu0 0
        %2979 = vperm.xlu0 %2978, %v2737
        %v2980 = vpop.permute.xlu0 %2979
        %2983 = vset.pattern.permute.xlu0 0
        %2984 = vperm.xlu0 %2983, %v2738
        %v2985 = vpop.permute.xlu0 %2984
        %2988 = vset.pattern.permute.xlu0 0
        %2989 = vperm.xlu0 %2988, %v2739
        %v2990 = vpop.permute.xlu0 %2989
        %2993 = vset.pattern.permute.xlu0 0
        %2994 = vperm.xlu0 %2993, %v2740
        %v2995 = vpop.permute.xlu0 %2994
        %2998 = vset.pattern.permute.xlu0 0
        %2999 = vperm.xlu0 %2998, %v2741
        %v3000 = vpop.permute.xlu0 %2999
        %3003 = vset.pattern.permute.xlu0 0
        %3004 = vperm.xlu0 %3003, %v2742
        %v3005 = vpop.permute.xlu0 %3004
        %3008 = vset.pattern.permute.xlu0 0
        %3009 = vperm.xlu0 %3008, %v2743
        %v3010 = vpop.permute.xlu0 %3009
        %3013 = vset.pattern.permute.xlu0 0
        %3014 = vperm.xlu0 %3013, %v2744
        %v3015 = vpop.permute.xlu0 %3014
        %3018 = vset.pattern.permute.xlu0 0
        %3019 = vperm.xlu0 %3018, %v2745
        %v3020 = vpop.permute.xlu0 %3019
        %3023 = vset.pattern.permute.xlu0 0
        %3024 = vperm.xlu0 %3023, %v2746
        %v3025 = vpop.permute.xlu0 %3024
        %3028 = vset.pattern.permute.xlu0 0
        %3029 = vperm.xlu0 %3028, %v2747
        %v3030 = vpop.permute.xlu0 %3029
        %3033 = vset.pattern.permute.xlu0 0
        %3034 = vperm.xlu0 %3033, %v2748
        %v3035 = vpop.permute.xlu0 %3034
        %3038 = vset.pattern.permute.xlu0 0
        %3039 = vperm.xlu0 %3038, %v2749
        %v3040 = vpop.permute.xlu0 %3039
        %3043 = vset.pattern.permute.xlu0 0
        %3044 = vperm.xlu0 %3043, %v2750
        %v3045 = vpop.permute.xlu0 %3044
        %3048 = vset.pattern.permute.xlu0 0
        %3049 = vperm.xlu0 %3048, %v2751
        %v3050 = vpop.permute.xlu0 %3049
        %3053 = vset.pattern.permute.xlu0 0
        %3054 = vperm.xlu0 %3053, %v2752
        %v3055 = vpop.permute.xlu0 %3054
        %3058 = vset.pattern.permute.xlu0 0
        %3059 = vperm.xlu0 %3058, %v2753
        %v3060 = vpop.permute.xlu0 %3059
        %3063 = vset.pattern.permute.xlu0 0
        %3064 = vperm.xlu0 %3063, %v2754
        %v3065 = vpop.permute.xlu0 %3064
        %3068 = vset.pattern.permute.xlu0 0
        %3069 = vperm.xlu0 %3068, %v2755
        %v3070 = vpop.permute.xlu0 %3069
        %3073 = vset.pattern.permute.xlu0 0
        %3074 = vperm.xlu0 %3073, %v2756
        %v3075 = vpop.permute.xlu0 %3074
        %3078 = vset.pattern.permute.xlu0 0
        %3079 = vperm.xlu0 %3078, %v2757
        %v3080 = vpop.permute.xlu0 %3079
        %3083 = vset.pattern.permute.xlu0 0
        %3084 = vperm.xlu0 %3083, %v2758
        %v3085 = vpop.permute.xlu0 %3084
        %3088 = vset.pattern.permute.xlu0 0
        %3089 = vperm.xlu0 %3088, %v2759
        %v3090 = vpop.permute.xlu0 %3089
        %3093 = vset.pattern.permute.xlu0 0
        %3094 = vperm.xlu0 %3093, %v2760
        %v3095 = vpop.permute.xlu0 %3094
        %3098 = vset.pattern.permute.xlu0 0
        %3099 = vperm.xlu0 %3098, %v2761
        %v3100 = vpop.permute.xlu0 %3099
        %3103 = vset.pattern.permute.xlu0 0
        %3104 = vperm.xlu0 %3103, %v2762
        %v3105 = vpop.permute.xlu0 %3104
        %3108 = vset.pattern.permute.xlu0 0
        %3109 = vperm.xlu0 %3108, %v2763
        %v3110 = vpop.permute.xlu0 %3109
        %3113 = vset.pattern.permute.xlu0 0
        %3114 = vperm.xlu0 %3113, %v2764
        %v3115 = vpop.permute.xlu0 %3114
        %3118 = vset.pattern.permute.xlu0 0
        %3119 = vperm.xlu0 %3118, %v2765
        %v3120 = vpop.permute.xlu0 %3119
        %3123 = vset.pattern.permute.xlu0 0
        %3124 = vperm.xlu0 %3123, %v2766
        %v3125 = vpop.permute.xlu0 %3124
        %3128 = vset.pattern.permute.xlu0 0
        %3129 = vperm.xlu0 %3128, %v2767
        %v3130 = vpop.permute.xlu0 %3129
        %3133 = vset.pattern.permute.xlu0 0
        %3134 = vperm.xlu0 %3133, %v2768
        %v3135 = vpop.permute.xlu0 %3134
        %3138 = vset.pattern.permute.xlu0 0
        %3139 = vperm.xlu0 %3138, %v2769
        %v3140 = vpop.permute.xlu0 %3139
        %3143 = vset.pattern.permute.xlu0 0
        %3144 = vperm.xlu0 %3143, %v2770
        %v3145 = vpop.permute.xlu0 %3144
        %3148 = vset.pattern.permute.xlu0 0
        %3149 = vperm.xlu0 %3148, %v2771
        %v3150 = vpop.permute.xlu0 %3149
        %3153 = vset.pattern.permute.xlu0 0
        %3154 = vperm.xlu0 %3153, %v2772
        %v3155 = vpop.permute.xlu0 %3154
        %3158 = vset.pattern.permute.xlu0 0
        %3159 = vperm.xlu0 %3158, %v2773
        %v3160 = vpop.permute.xlu0 %3159
        %3163 = vset.pattern.permute.xlu0 0
        %3164 = vperm.xlu0 %3163, %v2774
        %v3165 = vpop.permute.xlu0 %3164
        %3168 = vset.pattern.permute.xlu0 0
        %3169 = vperm.xlu0 %3168, %v2775
        %v3170 = vpop.permute.xlu0 %3169
        %3173 = vset.pattern.permute.xlu0 0
        %3174 = vperm.xlu0 %3173, %v2776
        %v3175 = vpop.permute.xlu0 %3174
        %3178 = vset.pattern.permute.xlu0 0
        %3179 = vperm.xlu0 %3178, %v2777
        %v3180 = vpop.permute.xlu0 %3179
        %3183 = vset.pattern.permute.xlu0 0
        %3184 = vperm.xlu0 %3183, %v2778
        %v3185 = vpop.permute.xlu0 %3184
        %3188 = vset.pattern.permute.xlu0 0
        %3189 = vperm.xlu0 %3188, %v2779
        %v3190 = vpop.permute.xlu0 %3189
        %3193 = vset.pattern.permute.xlu0 0
        %3194 = vperm.xlu0 %3193, %v2780
        %v3195 = vpop.permute.xlu0 %3194
        %3198 = vset.pattern.permute.xlu0 0
        %3199 = vperm.xlu0 %3198, %v2781
        %v3200 = vpop.permute.xlu0 %3199
        %3203 = vset.pattern.permute.xlu0 0
        %3204 = vperm.xlu0 %3203, %v2782
        %v3205 = vpop.permute.xlu0 %3204
        %3208 = vset.pattern.permute.xlu0 0
        %3209 = vperm.xlu0 %3208, %v2783
        %v3210 = vpop.permute.xlu0 %3209
        %3213 = vset.pattern.permute.xlu0 0
        %3214 = vperm.xlu0 %3213, %v2784
        %v3215 = vpop.permute.xlu0 %3214
        %3218 = vset.pattern.permute.xlu0 0
        %3219 = vperm.xlu0 %3218, %v2785
        %v3220 = vpop.permute.xlu0 %3219
        %3223 = vset.pattern.permute.xlu0 0
        %3224 = vperm.xlu0 %3223, %v2786
        %v3225 = vpop.permute.xlu0 %3224
        %3228 = vset.pattern.permute.xlu0 0
        %3229 = vperm.xlu0 %3228, %v2787
        %v3230 = vpop.permute.xlu0 %3229
        %3233 = vset.pattern.permute.xlu0 0
        %3234 = vperm.xlu0 %3233, %v2788
        %v3235 = vpop.permute.xlu0 %3234
        %v3237 = vsub.f32 %v1916, %v2920
        %v3238 = vsub.f32 %v1919, %v2925
        %v3239 = vsub.f32 %v1924, %v2930
        %v3240 = vsub.f32 %v1927, %v2935
        %v3241 = vsub.f32 %v1932, %v2940
        %v3242 = vsub.f32 %v1935, %v2945
        %v3243 = vsub.f32 %v1940, %v2950
        %v3244 = vsub.f32 %v1943, %v2955
        %v3245 = vsub.f32 %v1948, %v2960
        %v3246 = vsub.f32 %v1951, %v2965
        %v3247 = vsub.f32 %v1956, %v2970
        %v3248 = vsub.f32 %v1959, %v2975
        %v3249 = vsub.f32 %v1964, %v2980
        %v3250 = vsub.f32 %v1967, %v2985
        %v3251 = vsub.f32 %v1972, %v2990
        %v3252 = vsub.f32 %v1975, %v2995
        %v3253 = vsub.f32 %v2101, %v3000
        %v3254 = vsub.f32 %v2104, %v3005
        %v3255 = vsub.f32 %v2109, %v3010
        %v3256 = vsub.f32 %v2112, %v3015
        %v3257 = vsub.f32 %v2117, %v3020
        %v3258 = vsub.f32 %v2120, %v3025
        %v3259 = vsub.f32 %v2125, %v3030
        %v3260 = vsub.f32 %v2128, %v3035
        %v3261 = vsub.f32 %v2133, %v3040
        %v3262 = vsub.f32 %v2136, %v3045
        %v3263 = vsub.f32 %v2141, %v3050
        %v3264 = vsub.f32 %v2144, %v3055
        %v3265 = vsub.f32 %v2149, %v3060
        %v3266 = vsub.f32 %v2152, %v3065
        %v3267 = vsub.f32 %v2157, %v3070
        %v3268 = vsub.f32 %v2160, %v3075
        %v3269 = vsub.f32 %v2286, %v3080
        %v3270 = vsub.f32 %v2289, %v3085
        %v3271 = vsub.f32 %v2294, %v3090
        %v3272 = vsub.f32 %v2297, %v3095
        %v3273 = vsub.f32 %v2302, %v3100
        %v3274 = vsub.f32 %v2305, %v3105
        %v3275 = vsub.f32 %v2310, %v3110
        %v3276 = vsub.f32 %v2313, %v3115
        %v3277 = vsub.f32 %v2318, %v3120
        %v3278 = vsub.f32 %v2321, %v3125
        %v3279 = vsub.f32 %v2326, %v3130
        %v3280 = vsub.f32 %v2329, %v3135
        %v3281 = vsub.f32 %v2334, %v3140
        %v3282 = vsub.f32 %v2337, %v3145
        %v3283 = vsub.f32 %v2342, %v3150
        %v3284 = vsub.f32 %v2345, %v3155
        %v3285 = vsub.f32 %v2471, %v3160
        %v3286 = vsub.f32 %v2474, %v3165
        %v3287 = vsub.f32 %v2479, %v3170
        %v3288 = vsub.f32 %v2482, %v3175
        %v3289 = vsub.f32 %v2487, %v3180
        %v3290 = vsub.f32 %v2490, %v3185
        %v3291 = vsub.f32 %v2495, %v3190
        %v3292 = vsub.f32 %v2498, %v3195
        %v3293 = vsub.f32 %v2503, %v3200
        %v3294 = vsub.f32 %v2506, %v3205
        %v3295 = vsub.f32 %v2511, %v3210
        %v3296 = vsub.f32 %v2514, %v3215
        %v3297 = vsub.f32 %v2519, %v3220
        %v3298 = vsub.f32 %v2522, %v3225
        %v3299 = vsub.f32 %v2527, %v3230
        %v3300 = vsub.f32 %v2530, %v3235
        %v3301 = vpow.pop %v3237
        %v3302 = vpow.pop %v3238
        %v3303 = vpow.pop %v3239
        %v3304 = vpow.pop %v3240
        %v3305 = vpow.pop %v3241
        %v3306 = vpow.pop %v3242
        %v3307 = vpow.pop %v3243
        %v3308 = vpow.pop %v3244
        %v3309 = vpow.pop %v3245
        %v3310 = vpow.pop %v3246
        %v3311 = vpow.pop %v3247
        %v3312 = vpow.pop %v3248
        %v3313 = vpow.pop %v3249
        %v3314 = vpow.pop %v3250
        %v3315 = vpow.pop %v3251
        %v3316 = vpow.pop %v3252
        %v3317 = vpow.pop %v3253
        %v3318 = vpow.pop %v3254
        %v3319 = vpow.pop %v3255
        %v3320 = vpow.pop %v3256
        %v3321 = vpow.pop %v3257
        %v3322 = vpow.pop %v3258
        %v3323 = vpow.pop %v3259
        %v3324 = vpow.pop %v3260
        %v3325 = vpow.pop %v3261
        %v3326 = vpow.pop %v3262
        %v3327 = vpow.pop %v3263
        %v3328 = vpow.pop %v3264
        %v3329 = vpow.pop %v3265
        %v3330 = vpow.pop %v3266
        %v3331 = vpow.pop %v3267
        %v3332 = vpow.pop %v3268
        %v3333 = vpow.pop %v3269
        %v3334 = vpow.pop %v3270
        %v3335 = vpow.pop %v3271
        %v3336 = vpow.pop %v3272
        %v3337 = vpow.pop %v3273
        %v3338 = vpow.pop %v3274
        %v3339 = vpow.pop %v3275
        %v3340 = vpow.pop %v3276
        %v3341 = vpow.pop %v3277
        %v3342 = vpow.pop %v3278
        %v3343 = vpow.pop %v3279
        %v3344 = vpow.pop %v3280
        %v3345 = vpow.pop %v3281
        %v3346 = vpow.pop %v3282
        %v3347 = vpow.pop %v3283
        %v3348 = vpow.pop %v3284
        %v3349 = vpow.pop %v3285
        %v3350 = vpow.pop %v3286
        %v3351 = vpow.pop %v3287
        %v3352 = vpow.pop %v3288
        %v3353 = vpow.pop %v3289
        %v3354 = vpow.pop %v3290
        %v3355 = vpow.pop %v3291
        %v3356 = vpow.pop %v3292
        %v3357 = vpow.pop %v3293
        %v3358 = vpow.pop %v3294
        %v3359 = vpow.pop %v3295
        %v3360 = vpow.pop %v3296
        %v3361 = vpow.pop %v3297
        %v3362 = vpow.pop %v3298
        %v3363 = vpow.pop %v3299
        %v3364 = vpow.pop %v3300
        %v3365 = vpack.c.bf16 %v3302, %v3301
        %v3366 = vpack.c.bf16 %v3304, %v3303
        %v3367 = vpack.c.bf16 %v3306, %v3305
        %v3368 = vpack.c.bf16 %v3308, %v3307
        %v3369 = vpack.c.bf16 %v3310, %v3309
        %v3370 = vpack.c.bf16 %v3312, %v3311
        %v3371 = vpack.c.bf16 %v3314, %v3313
        %v3372 = vpack.c.bf16 %v3316, %v3315
        %v3373 = vpack.c.bf16 %v3318, %v3317
        %v3374 = vpack.c.bf16 %v3320, %v3319
        %v3375 = vpack.c.bf16 %v3322, %v3321
        %v3376 = vpack.c.bf16 %v3324, %v3323
        %v3377 = vpack.c.bf16 %v3326, %v3325
        %v3378 = vpack.c.bf16 %v3328, %v3327
        %v3379 = vpack.c.bf16 %v3330, %v3329
        %v3380 = vpack.c.bf16 %v3332, %v3331
        %v3381 = vpack.c.bf16 %v3334, %v3333
        %v3382 = vpack.c.bf16 %v3336, %v3335
        %v3383 = vpack.c.bf16 %v3338, %v3337
        %v3384 = vpack.c.bf16 %v3340, %v3339
        %v3385 = vpack.c.bf16 %v3342, %v3341
        %v3386 = vpack.c.bf16 %v3344, %v3343
        %v3387 = vpack.c.bf16 %v3346, %v3345
        %v3388 = vpack.c.bf16 %v3348, %v3347
        %v3389 = vpack.c.bf16 %v3350, %v3349
        %v3390 = vpack.c.bf16 %v3352, %v3351
        %v3391 = vpack.c.bf16 %v3354, %v3353
        %v3392 = vpack.c.bf16 %v3356, %v3355
        %v3393 = vpack.c.bf16 %v3358, %v3357
        %v3394 = vpack.c.bf16 %v3360, %v3359
        %v3395 = vpack.c.bf16 %v3362, %v3361
        %v3396 = vpack.c.bf16 %v3364, %v3363
        %v3413 = vunpack.c.l.b16 %v1696
        %v3414 = vunpack.c.l.b16 %v1697
        %v3415 = vunpack.c.l.b16 %v1698
        %v3416 = vunpack.c.l.b16 %v1699
        %v3417 = vunpack.c.l.b16 %v1700
        %v3418 = vunpack.c.l.b16 %v1701
        %v3419 = vunpack.c.l.b16 %v1702
        %v3420 = vunpack.c.l.b16 %v1703
        %v3421 = vunpack.c.l.b16 %v1704
        %v3422 = vunpack.c.l.b16 %v1705
        %v3423 = vunpack.c.l.b16 %v1706
        %v3424 = vunpack.c.l.b16 %v1707
        %v3425 = vunpack.c.l.b16 %v1708
        %v3426 = vunpack.c.l.b16 %v1709
        %v3427 = vunpack.c.l.b16 %v1710
        %v3428 = vunpack.c.l.b16 %v1711
        %v3429 = vpack.c.b16 %v3414, %v3413
        %v3430 = vpack.c.b16 %v3416, %v3415
        %v3431 = vpack.c.b16 %v3418, %v3417
        %v3432 = vpack.c.b16 %v3420, %v3419
        %v3433 = vpack.c.b16 %v3422, %v3421
        %v3434 = vpack.c.b16 %v3424, %v3423
        %v3435 = vpack.c.b16 %v3426, %v3425
        %v3436 = vpack.c.b16 %v3428, %v3427
        %3445 = vmatprep.subr.bf16.mxu0 0
        %3446 = vmatpush1.bf16.msra.mxu0 %v3429
        %3447 = vmatprep.subr.bf16.mxu0 0
        %3448 = vmatpush1.bf16.msra.mxu0 %v3430
        %3449 = vmatprep.subr.bf16.mxu0 0
        %3450 = vmatpush1.bf16.msra.mxu0 %v3431
        %3451 = vmatprep.subr.bf16.mxu0 0
        %3452 = vmatpush1.bf16.msra.mxu0 %v3432
        %3453 = vmatprep.subr.bf16.mxu0 0
        %3454 = vmatpush1.bf16.msra.mxu0 %v3433
        %3455 = vmatprep.subr.bf16.mxu0 0
        %3456 = vmatpush1.bf16.msra.mxu0 %v3434
        %3457 = vmatprep.subr.bf16.mxu0 0
        %3458 = vmatpush1.bf16.msra.mxu0 %v3435
        %3459 = vmatprep.subr.bf16.mxu0 0
        %3460 = vmatpush1.bf16.msra.mxu0 %v3436
        %3461 = vmatprep.subr.bf16.mxu0 0
        %3462 = vmatpush1.bf16.msra.mxu0 0
        %3463 = vmatprep.subr.bf16.mxu0 0
        %3464 = vmatpush1.bf16.msra.mxu0 0
        %3465 = vmatprep.subr.bf16.mxu0 0
        %3466 = vmatpush1.bf16.msra.mxu0 0
        %3467 = vmatprep.subr.bf16.mxu0 0
        %3468 = vmatpush1.bf16.msra.mxu0 0
        %3469 = vmatprep.subr.bf16.mxu0 0
        %3470 = vmatpush1.bf16.msra.mxu0 0
        %3471 = vmatprep.subr.bf16.mxu0 0
        %3472 = vmatpush1.bf16.msra.mxu0 0
        %3473 = vmatprep.subr.bf16.mxu0 0
        %3474 = vmatpush1.bf16.msra.mxu0 0
        %3475 = vmatprep.subr.bf16.mxu0 0
        %3476 = vmatpush1.bf16.msra.mxu0 0
        %3477 = vmatprep.mubr.bf16.mxu0 0
        %3478 = vmatmul.mubr.bf16.gmra.mrb[0].mxu0 %v3365
        %v3479 = vpop.f32.mrb[0].mxu0
        %v3480 = vadd.f32 0.0, %v3479
        %v3481 = vpop.f32.mrb[0].mxu0
        %v3482 = vpop.f32.mrb[0].mxu0
        %v3483 = vadd.f32 0.0, %v3482
        %v3484 = vpop.f32.mrb[0].mxu0
        %3485 = vmatprep.mubr.bf16.mxu0 0
        %3486 = vmatmul.mubr.bf16.gmra.mrb[0].mxu0 %v3366
        %v3487 = vpop.f32.mrb[0].mxu0
        %v3488 = vadd.f32 0.0, %v3487
        %v3489 = vpop.f32.mrb[0].mxu0
        %v3490 = vpop.f32.mrb[0].mxu0
        %v3491 = vadd.f32 0.0, %v3490
        %v3492 = vpop.f32.mrb[0].mxu0
        %3493 = vmatprep.mubr.bf16.mxu0 0
        %3494 = vmatmul.mubr.bf16.gmra.mrb[0].mxu0 %v3367
        %v3495 = vpop.f32.mrb[0].mxu0
        %v3496 = vadd.f32 0.0, %v3495
        %v3497 = vpop.f32.mrb[0].mxu0
        %v3498 = vpop.f32.mrb[0].mxu0
        %v3499 = vadd.f32 0.0, %v3498
        %v3500 = vpop.f32.mrb[0].mxu0
        %3501 = vmatprep.mubr.bf16.mxu0 0
        %3502 = vmatmul.mubr.bf16.gmra.mrb[0].mxu0 %v3368
        %v3503 = vpop.f32.mrb[0].mxu0
        %v3504 = vadd.f32 0.0, %v3503
        %v3505 = vpop.f32.mrb[0].mxu0
        %v3506 = vpop.f32.mrb[0].mxu0
        %v3507 = vadd.f32 0.0, %v3506
        %v3508 = vpop.f32.mrb[0].mxu0
        %3509 = vmatprep.mubr.bf16.mxu0 0
        %3510 = vmatmul.mubr.bf16.gmra.mrb[0].mxu0 %v3369
        %v3511 = vpop.f32.mrb[0].mxu0
        %v3512 = vadd.f32 0.0, %v3511
        %v3513 = vpop.f32.mrb[0].mxu0
        %v3514 = vpop.f32.mrb[0].mxu0
        %v3515 = vadd.f32 0.0, %v3514
        %v3516 = vpop.f32.mrb[0].mxu0
        %3517 = vmatprep.mubr.bf16.mxu0 0
        %3518 = vmatmul.mubr.bf16.gmra.mrb[0].mxu0 %v3370
        %v3519 = vpop.f32.mrb[0].mxu0
        %v3520 = vadd.f32 0.0, %v3519
        %v3521 = vpop.f32.mrb[0].mxu0
        %v3522 = vpop.f32.mrb[0].mxu0
        %v3523 = vadd.f32 0.0, %v3522
        %v3524 = vpop.f32.mrb[0].mxu0
        %3525 = vmatprep.mubr.bf16.mxu0 0
        %3526 = vmatmul.mubr.bf16.gmra.mrb[0].mxu0 %v3371
        %v3527 = vpop.f32.mrb[0].mxu0
        %v3528 = vadd.f32 0.0, %v3527
        %v3529 = vpop.f32.mrb[0].mxu0
        %v3530 = vpop.f32.mrb[0].mxu0
        %v3531 = vadd.f32 0.0, %v3530
        %v3532 = vpop.f32.mrb[0].mxu0
        %3533 = vmatprep.mubr.bf16.mxu0 0
        %3534 = vmatmul.mubr.bf16.gmra.mrb[0].mxu0 %v3372
        %v3535 = vpop.f32.mrb[0].mxu0
        %v3536 = vadd.f32 0.0, %v3535
        %v3537 = vpop.f32.mrb[0].mxu0
        %v3538 = vpop.f32.mrb[0].mxu0
        %v3539 = vadd.f32 0.0, %v3538
        %v3540 = vpop.f32.mrb[0].mxu0
        %3541 = vdwg.mxu0
        %v3558 = vunpack.c.l.b16 %v1712
        %v3559 = vunpack.c.l.b16 %v1713
        %v3560 = vunpack.c.l.b16 %v1714
        %v3561 = vunpack.c.l.b16 %v1715
        %v3562 = vunpack.c.l.b16 %v1716
        %v3563 = vunpack.c.l.b16 %v1717
        %v3564 = vunpack.c.l.b16 %v1718
        %v3565 = vunpack.c.l.b16 %v1719
        %v3566 = vunpack.c.l.b16 %v1720
        %v3567 = vunpack.c.l.b16 %v1721
        %v3568 = vunpack.c.l.b16 %v1722
        %v3569 = vunpack.c.l.b16 %v1723
        %v3570 = vunpack.c.l.b16 %v1724
        %v3571 = vunpack.c.l.b16 %v1725
        %v3572 = vunpack.c.l.b16 %v1726
        %v3573 = vunpack.c.l.b16 %v1727
        %v3574 = vpack.c.b16 %v3559, %v3558
        %v3575 = vpack.c.b16 %v3561, %v3560
        %v3576 = vpack.c.b16 %v3563, %v3562
        %v3577 = vpack.c.b16 %v3565, %v3564
        %v3578 = vpack.c.b16 %v3567, %v3566
        %v3579 = vpack.c.b16 %v3569, %v3568
        %v3580 = vpack.c.b16 %v3571, %v3570
        %v3581 = vpack.c.b16 %v3573, %v3572
        %3590 = vmatprep.subr.bf16.mxu0 0
        %3591 = vmatpush1.bf16.msra.mxu0 %v3574
        %3592 = vmatprep.subr.bf16.mxu0 0
        %3593 = vmatpush1.bf16.msra.mxu0 %v3575
        %3594 = vmatprep.subr.bf16.mxu0 0
        %3595 = vmatpush1.bf16.msra.mxu0 %v3576
        %3596 = vmatprep.subr.bf16.mxu0 0
        %3597 = vmatpush1.bf16.msra.mxu0 %v3577
        %3598 = vmatprep.subr.bf16.mxu0 0
        %3599 = vmatpush1.bf16.msra.mxu0 %v3578
        %3600 = vmatprep.subr.bf16.mxu0 0
        %3601 = vmatpush1.bf16.msra.mxu0 %v3579
        %3602 = vmatprep.subr.bf16.mxu0 0
        %3603 = vmatpush1.bf16.msra.mxu0 %v3580
        %3604 = vmatprep.subr.bf16.mxu0 0
        %3605 = vmatpush1.bf16.msra.mxu0 %v3581
        %3606 = vmatprep.subr.bf16.mxu0 0
        %3607 = vmatpush1.bf16.msra.mxu0 0
        %3608 = vmatprep.subr.bf16.mxu0 0
        %3609 = vmatpush1.bf16.msra.mxu0 0
        %3610 = vmatprep.subr.bf16.mxu0 0
        %3611 = vmatpush1.bf16.msra.mxu0 0
        %3612 = vmatprep.subr.bf16.mxu0 0
        %3613 = vmatpush1.bf16.msra.mxu0 0
        %3614 = vmatprep.subr.bf16.mxu0 0
        %3615 = vmatpush1.bf16.msra.mxu0 0
        %3616 = vmatprep.subr.bf16.mxu0 0
        %3617 = vmatpush1.bf16.msra.mxu0 0
        %3618 = vmatprep.subr.bf16.mxu0 0
        %3619 = vmatpush1.bf16.msra.mxu0 0
        %3620 = vmatprep.subr.bf16.mxu0 0
        %3621 = vmatpush1.bf16.msra.mxu0 0
        %3622 = vmatprep.mubr.bf16.mxu0 0
        %3623 = vmatmul.mubr.bf16.gmra.mrb[0].mxu0 %v3373
        %v3624 = vpop.f32.mrb[0].mxu0
        %v3625 = vadd.f32 0.0, %v3624
        %v3626 = vpop.f32.mrb[0].mxu0
        %v3627 = vpop.f32.mrb[0].mxu0
        %v3628 = vadd.f32 0.0, %v3627
        %v3629 = vpop.f32.mrb[0].mxu0
        %3630 = vmatprep.mubr.bf16.mxu0 0
        %3631 = vmatmul.mubr.bf16.gmra.mrb[0].mxu0 %v3374
        %v3632 = vpop.f32.mrb[0].mxu0
        %v3633 = vadd.f32 0.0, %v3632
        %v3634 = vpop.f32.mrb[0].mxu0
        %v3635 = vpop.f32.mrb[0].mxu0
        %v3636 = vadd.f32 0.0, %v3635
        %v3637 = vpop.f32.mrb[0].mxu0
        %3638 = vmatprep.mubr.bf16.mxu0 0
        %3639 = vmatmul.mubr.bf16.gmra.mrb[0].mxu0 %v3375
        %v3640 = vpop.f32.mrb[0].mxu0
        %v3641 = vadd.f32 0.0, %v3640
        %v3642 = vpop.f32.mrb[0].mxu0
        %v3643 = vpop.f32.mrb[0].mxu0
        %v3644 = vadd.f32 0.0, %v3643
        %v3645 = vpop.f32.mrb[0].mxu0
        %3646 = vmatprep.mubr.bf16.mxu0 0
        %3647 = vmatmul.mubr.bf16.gmra.mrb[0].mxu0 %v3376
        %v3648 = vpop.f32.mrb[0].mxu0
        %v3649 = vadd.f32 0.0, %v3648
        %v3650 = vpop.f32.mrb[0].mxu0
        %v3651 = vpop.f32.mrb[0].mxu0
        %v3652 = vadd.f32 0.0, %v3651
        %v3653 = vpop.f32.mrb[0].mxu0
        %3654 = vmatprep.mubr.bf16.mxu0 0
        %3655 = vmatmul.mubr.bf16.gmra.mrb[0].mxu0 %v3377
        %v3656 = vpop.f32.mrb[0].mxu0
        %v3657 = vadd.f32 0.0, %v3656
        %v3658 = vpop.f32.mrb[0].mxu0
        %v3659 = vpop.f32.mrb[0].mxu0
        %v3660 = vadd.f32 0.0, %v3659
        %v3661 = vpop.f32.mrb[0].mxu0
        %3662 = vmatprep.mubr.bf16.mxu0 0
        %3663 = vmatmul.mubr.bf16.gmra.mrb[0].mxu0 %v3378
        %v3664 = vpop.f32.mrb[0].mxu0
        %v3665 = vadd.f32 0.0, %v3664
        %v3666 = vpop.f32.mrb[0].mxu0
        %v3667 = vpop.f32.mrb[0].mxu0
        %v3668 = vadd.f32 0.0, %v3667
        %v3669 = vpop.f32.mrb[0].mxu0
        %3670 = vmatprep.mubr.bf16.mxu0 0
        %3671 = vmatmul.mubr.bf16.gmra.mrb[0].mxu0 %v3379
        %v3672 = vpop.f32.mrb[0].mxu0
        %v3673 = vadd.f32 0.0, %v3672
        %v3674 = vpop.f32.mrb[0].mxu0
        %v3675 = vpop.f32.mrb[0].mxu0
        %v3676 = vadd.f32 0.0, %v3675
        %v3677 = vpop.f32.mrb[0].mxu0
        %3678 = vmatprep.mubr.bf16.mxu0 0
        %3679 = vmatmul.mubr.bf16.gmra.mrb[0].mxu0 %v3380
        %v3680 = vpop.f32.mrb[0].mxu0
        %v3681 = vadd.f32 0.0, %v3680
        %v3682 = vpop.f32.mrb[0].mxu0
        %v3683 = vpop.f32.mrb[0].mxu0
        %v3684 = vadd.f32 0.0, %v3683
        %v3685 = vpop.f32.mrb[0].mxu0
        %3686 = vdwg.mxu0
        %v3703 = vunpack.c.l.b16 %v1728
        %v3704 = vunpack.c.l.b16 %v1729
        %v3705 = vunpack.c.l.b16 %v1730
        %v3706 = vunpack.c.l.b16 %v1731
        %v3707 = vunpack.c.l.b16 %v1732
        %v3708 = vunpack.c.l.b16 %v1733
        %v3709 = vunpack.c.l.b16 %v1734
        %v3710 = vunpack.c.l.b16 %v1735
        %v3711 = vunpack.c.l.b16 %v1736
        %v3712 = vunpack.c.l.b16 %v1737
        %v3713 = vunpack.c.l.b16 %v1738
        %v3714 = vunpack.c.l.b16 %v1739
        %v3715 = vunpack.c.l.b16 %v1740
        %v3716 = vunpack.c.l.b16 %v1741
        %v3717 = vunpack.c.l.b16 %v1742
        %v3718 = vunpack.c.l.b16 %v1743
        %v3719 = vpack.c.b16 %v3704, %v3703
        %v3720 = vpack.c.b16 %v3706, %v3705
        %v3721 = vpack.c.b16 %v3708, %v3707
        %v3722 = vpack.c.b16 %v3710, %v3709
        %v3723 = vpack.c.b16 %v3712, %v3711
        %v3724 = vpack.c.b16 %v3714, %v3713
        %v3725 = vpack.c.b16 %v3716, %v3715
        %v3726 = vpack.c.b16 %v3718, %v3717
        %3735 = vmatprep.subr.bf16.mxu0 0
        %3736 = vmatpush1.bf16.msra.mxu0 %v3719
        %3737 = vmatprep.subr.bf16.mxu0 0
        %3738 = vmatpush1.bf16.msra.mxu0 %v3720
        %3739 = vmatprep.subr.bf16.mxu0 0
        %3740 = vmatpush1.bf16.msra.mxu0 %v3721
        %3741 = vmatprep.subr.bf16.mxu0 0
        %3742 = vmatpush1.bf16.msra.mxu0 %v3722
        %3743 = vmatprep.subr.bf16.mxu0 0
        %3744 = vmatpush1.bf16.msra.mxu0 %v3723
        %3745 = vmatprep.subr.bf16.mxu0 0
        %3746 = vmatpush1.bf16.msra.mxu0 %v3724
        %3747 = vmatprep.subr.bf16.mxu0 0
        %3748 = vmatpush1.bf16.msra.mxu0 %v3725
        %3749 = vmatprep.subr.bf16.mxu0 0
        %3750 = vmatpush1.bf16.msra.mxu0 %v3726
        %3751 = vmatprep.subr.bf16.mxu0 0
        %3752 = vmatpush1.bf16.msra.mxu0 0
        %3753 = vmatprep.subr.bf16.mxu0 0
        %3754 = vmatpush1.bf16.msra.mxu0 0
        %3755 = vmatprep.subr.bf16.mxu0 0
        %3756 = vmatpush1.bf16.msra.mxu0 0
        %3757 = vmatprep.subr.bf16.mxu0 0
        %3758 = vmatpush1.bf16.msra.mxu0 0
        %3759 = vmatprep.subr.bf16.mxu0 0
        %3760 = vmatpush1.bf16.msra.mxu0 0
        %3761 = vmatprep.subr.bf16.mxu0 0
        %3762 = vmatpush1.bf16.msra.mxu0 0
        %3763 = vmatprep.subr.bf16.mxu0 0
        %3764 = vmatpush1.bf16.msra.mxu0 0
        %3765 = vmatprep.subr.bf16.mxu0 0
        %3766 = vmatpush1.bf16.msra.mxu0 0
        %3767 = vmatprep.mubr.bf16.mxu0 0
        %3768 = vmatmul.mubr.bf16.gmra.mrb[0].mxu0 %v3381
        %v3769 = vpop.f32.mrb[0].mxu0
        %v3770 = vadd.f32 0.0, %v3769
        %v3771 = vpop.f32.mrb[0].mxu0
        %v3772 = vpop.f32.mrb[0].mxu0
        %v3773 = vadd.f32 0.0, %v3772
        %v3774 = vpop.f32.mrb[0].mxu0
        %3775 = vmatprep.mubr.bf16.mxu0 0
        %3776 = vmatmul.mubr.bf16.gmra.mrb[0].mxu0 %v3382
        %v3777 = vpop.f32.mrb[0].mxu0
        %v3778 = vadd.f32 0.0, %v3777
        %v3779 = vpop.f32.mrb[0].mxu0
        %v3780 = vpop.f32.mrb[0].mxu0
        %v3781 = vadd.f32 0.0, %v3780
        %v3782 = vpop.f32.mrb[0].mxu0
        %3783 = vmatprep.mubr.bf16.mxu0 0
        %3784 = vmatmul.mubr.bf16.gmra.mrb[0].mxu0 %v3383
        %v3785 = vpop.f32.mrb[0].mxu0
        %v3786 = vadd.f32 0.0, %v3785
        %v3787 = vpop.f32.mrb[0].mxu0
        %v3788 = vpop.f32.mrb[0].mxu0
        %v3789 = vadd.f32 0.0, %v3788
        %v3790 = vpop.f32.mrb[0].mxu0
        %3791 = vmatprep.mubr.bf16.mxu0 0
        %3792 = vmatmul.mubr.bf16.gmra.mrb[0].mxu0 %v3384
        %v3793 = vpop.f32.mrb[0].mxu0
        %v3794 = vadd.f32 0.0, %v3793
        %v3795 = vpop.f32.mrb[0].mxu0
        %v3796 = vpop.f32.mrb[0].mxu0
        %v3797 = vadd.f32 0.0, %v3796
        %v3798 = vpop.f32.mrb[0].mxu0
        %3799 = vmatprep.mubr.bf16.mxu0 0
        %3800 = vmatmul.mubr.bf16.gmra.mrb[0].mxu0 %v3385
        %v3801 = vpop.f32.mrb[0].mxu0
        %v3802 = vadd.f32 0.0, %v3801
        %v3803 = vpop.f32.mrb[0].mxu0
        %v3804 = vpop.f32.mrb[0].mxu0
        %v3805 = vadd.f32 0.0, %v3804
        %v3806 = vpop.f32.mrb[0].mxu0
        %3807 = vmatprep.mubr.bf16.mxu0 0
        %3808 = vmatmul.mubr.bf16.gmra.mrb[0].mxu0 %v3386
        %v3809 = vpop.f32.mrb[0].mxu0
        %v3810 = vadd.f32 0.0, %v3809
        %v3811 = vpop.f32.mrb[0].mxu0
        %v3812 = vpop.f32.mrb[0].mxu0
        %v3813 = vadd.f32 0.0, %v3812
        %v3814 = vpop.f32.mrb[0].mxu0
        %3815 = vmatprep.mubr.bf16.mxu0 0
        %3816 = vmatmul.mubr.bf16.gmra.mrb[0].mxu0 %v3387
        %v3817 = vpop.f32.mrb[0].mxu0
        %v3818 = vadd.f32 0.0, %v3817
        %v3819 = vpop.f32.mrb[0].mxu0
        %v3820 = vpop.f32.mrb[0].mxu0
        %v3821 = vadd.f32 0.0, %v3820
        %v3822 = vpop.f32.mrb[0].mxu0
        %3823 = vmatprep.mubr.bf16.mxu0 0
        %3824 = vmatmul.mubr.bf16.gmra.mrb[0].mxu0 %v3388
        %v3825 = vpop.f32.mrb[0].mxu0
        %v3826 = vadd.f32 0.0, %v3825
        %v3827 = vpop.f32.mrb[0].mxu0
        %v3828 = vpop.f32.mrb[0].mxu0
        %v3829 = vadd.f32 0.0, %v3828
        %v3830 = vpop.f32.mrb[0].mxu0
        %3831 = vdwg.mxu0
        %v3848 = vunpack.c.l.b16 %v1744
        %v3849 = vunpack.c.l.b16 %v1745
        %v3850 = vunpack.c.l.b16 %v1746
        %v3851 = vunpack.c.l.b16 %v1747
        %v3852 = vunpack.c.l.b16 %v1748
        %v3853 = vunpack.c.l.b16 %v1749
        %v3854 = vunpack.c.l.b16 %v1750
        %v3855 = vunpack.c.l.b16 %v1751
        %v3856 = vunpack.c.l.b16 %v1752
        %v3857 = vunpack.c.l.b16 %v1753
        %v3858 = vunpack.c.l.b16 %v1754
        %v3859 = vunpack.c.l.b16 %v1755
        %v3860 = vunpack.c.l.b16 %v1756
        %v3861 = vunpack.c.l.b16 %v1757
        %v3862 = vunpack.c.l.b16 %v1758
        %v3863 = vunpack.c.l.b16 %v1759
        %v3864 = vpack.c.b16 %v3849, %v3848
        %v3865 = vpack.c.b16 %v3851, %v3850
        %v3866 = vpack.c.b16 %v3853, %v3852
        %v3867 = vpack.c.b16 %v3855, %v3854
        %v3868 = vpack.c.b16 %v3857, %v3856
        %v3869 = vpack.c.b16 %v3859, %v3858
        %v3870 = vpack.c.b16 %v3861, %v3860
        %v3871 = vpack.c.b16 %v3863, %v3862
        %3880 = vmatprep.subr.bf16.mxu0 0
        %3881 = vmatpush1.bf16.msra.mxu0 %v3864
        %3882 = vmatprep.subr.bf16.mxu0 0
        %3883 = vmatpush1.bf16.msra.mxu0 %v3865
        %3884 = vmatprep.subr.bf16.mxu0 0
        %3885 = vmatpush1.bf16.msra.mxu0 %v3866
        %3886 = vmatprep.subr.bf16.mxu0 0
        %3887 = vmatpush1.bf16.msra.mxu0 %v3867
        %3888 = vmatprep.subr.bf16.mxu0 0
        %3889 = vmatpush1.bf16.msra.mxu0 %v3868
        %3890 = vmatprep.subr.bf16.mxu0 0
        %3891 = vmatpush1.bf16.msra.mxu0 %v3869
        %3892 = vmatprep.subr.bf16.mxu0 0
        %3893 = vmatpush1.bf16.msra.mxu0 %v3870
        %3894 = vmatprep.subr.bf16.mxu0 0
        %3895 = vmatpush1.bf16.msra.mxu0 %v3871
        %3896 = vmatprep.subr.bf16.mxu0 0
        %3897 = vmatpush1.bf16.msra.mxu0 0
        %3898 = vmatprep.subr.bf16.mxu0 0
        %3899 = vmatpush1.bf16.msra.mxu0 0
        %3900 = vmatprep.subr.bf16.mxu0 0
        %3901 = vmatpush1.bf16.msra.mxu0 0
        %3902 = vmatprep.subr.bf16.mxu0 0
        %3903 = vmatpush1.bf16.msra.mxu0 0
        %3904 = vmatprep.subr.bf16.mxu0 0
        %3905 = vmatpush1.bf16.msra.mxu0 0
        %3906 = vmatprep.subr.bf16.mxu0 0
        %3907 = vmatpush1.bf16.msra.mxu0 0
        %3908 = vmatprep.subr.bf16.mxu0 0
        %3909 = vmatpush1.bf16.msra.mxu0 0
        %3910 = vmatprep.subr.bf16.mxu0 0
        %3911 = vmatpush1.bf16.msra.mxu0 0
        %3912 = vmatprep.mubr.bf16.mxu0 0
        %3913 = vmatmul.mubr.bf16.gmra.mrb[0].mxu0 %v3389
        %v3914 = vpop.f32.mrb[0].mxu0
        %v3915 = vadd.f32 0.0, %v3914
        %v3916 = vpop.f32.mrb[0].mxu0
        %v3917 = vpop.f32.mrb[0].mxu0
        %v3918 = vadd.f32 0.0, %v3917
        %v3919 = vpop.f32.mrb[0].mxu0
        %3920 = vmatprep.mubr.bf16.mxu0 0
        %3921 = vmatmul.mubr.bf16.gmra.mrb[0].mxu0 %v3390
        %v3922 = vpop.f32.mrb[0].mxu0
        %v3923 = vadd.f32 0.0, %v3922
        %v3924 = vpop.f32.mrb[0].mxu0
        %v3925 = vpop.f32.mrb[0].mxu0
        %v3926 = vadd.f32 0.0, %v3925
        %v3927 = vpop.f32.mrb[0].mxu0
        %3928 = vmatprep.mubr.bf16.mxu0 0
        %3929 = vmatmul.mubr.bf16.gmra.mrb[0].mxu0 %v3391
        %v3930 = vpop.f32.mrb[0].mxu0
        %v3931 = vadd.f32 0.0, %v3930
        %v3932 = vpop.f32.mrb[0].mxu0
        %v3933 = vpop.f32.mrb[0].mxu0
        %v3934 = vadd.f32 0.0, %v3933
        %v3935 = vpop.f32.mrb[0].mxu0
        %3936 = vmatprep.mubr.bf16.mxu0 0
        %3937 = vmatmul.mubr.bf16.gmra.mrb[0].mxu0 %v3392
        %v3938 = vpop.f32.mrb[0].mxu0
        %v3939 = vadd.f32 0.0, %v3938
        %v3940 = vpop.f32.mrb[0].mxu0
        %v3941 = vpop.f32.mrb[0].mxu0
        %v3942 = vadd.f32 0.0, %v3941
        %v3943 = vpop.f32.mrb[0].mxu0
        %3944 = vmatprep.mubr.bf16.mxu0 0
        %3945 = vmatmul.mubr.bf16.gmra.mrb[0].mxu0 %v3393
        %v3946 = vpop.f32.mrb[0].mxu0
        %v3947 = vadd.f32 0.0, %v3946
        %v3948 = vpop.f32.mrb[0].mxu0
        %v3949 = vpop.f32.mrb[0].mxu0
        %v3950 = vadd.f32 0.0, %v3949
        %v3951 = vpop.f32.mrb[0].mxu0
        %3952 = vmatprep.mubr.bf16.mxu0 0
        %3953 = vmatmul.mubr.bf16.gmra.mrb[0].mxu0 %v3394
        %v3954 = vpop.f32.mrb[0].mxu0
        %v3955 = vadd.f32 0.0, %v3954
        %v3956 = vpop.f32.mrb[0].mxu0
        %v3957 = vpop.f32.mrb[0].mxu0
        %v3958 = vadd.f32 0.0, %v3957
        %v3959 = vpop.f32.mrb[0].mxu0
        %3960 = vmatprep.mubr.bf16.mxu0 0
        %3961 = vmatmul.mubr.bf16.gmra.mrb[0].mxu0 %v3395
        %v3962 = vpop.f32.mrb[0].mxu0
        %v3963 = vadd.f32 0.0, %v3962
        %v3964 = vpop.f32.mrb[0].mxu0
        %v3965 = vpop.f32.mrb[0].mxu0
        %v3966 = vadd.f32 0.0, %v3965
        %v3967 = vpop.f32.mrb[0].mxu0
        %3968 = vmatprep.mubr.bf16.mxu0 0
        %3969 = vmatmul.mubr.bf16.gmra.mrb[0].mxu0 %v3396
        %v3970 = vpop.f32.mrb[0].mxu0
        %v3971 = vadd.f32 0.0, %v3970
        %v3972 = vpop.f32.mrb[0].mxu0
        %v3973 = vpop.f32.mrb[0].mxu0
        %v3974 = vadd.f32 0.0, %v3973
        %v3975 = vpop.f32.mrb[0].mxu0
        %3976 = vdwg.mxu0
        %v3977 = vld [vmem:[#allocation4] sm:$0xff]
        %v3978 = vld [vmem:[#allocation4 + $0x8] sm:$0xff]
        %v3979 = vld [vmem:[#allocation4 + $0x10] sm:$0xff]
        %v3980 = vld [vmem:[#allocation4 + $0x18] sm:$0xff]
        %v3981 = vld [vmem:[#allocation4 + $0x20] sm:$0xff]
        %v3982 = vld [vmem:[#allocation4 + $0x28] sm:$0xff]
        %v3983 = vld [vmem:[#allocation4 + $0x30] sm:$0xff]
        %v3984 = vld [vmem:[#allocation4 + $0x38] sm:$0xff]
        %v3985 = vld [vmem:[#allocation4 + $0x40] sm:$0xff]
        %v3986 = vld [vmem:[#allocation4 + $0x48] sm:$0xff]
        %v3987 = vld [vmem:[#allocation4 + $0x50] sm:$0xff]
        %v3988 = vld [vmem:[#allocation4 + $0x58] sm:$0xff]
        %v3989 = vld [vmem:[#allocation4 + $0x60] sm:$0xff]
        %v3990 = vld [vmem:[#allocation4 + $0x68] sm:$0xff]
        %v3991 = vld [vmem:[#allocation4 + $0x70] sm:$0xff]
        %v3992 = vld [vmem:[#allocation4 + $0x78] sm:$0xff]
        %v3993 = vld [vmem:[#allocation4 + $0x80] sm:$0xff]
        %v3994 = vld [vmem:[#allocation4 + $0x88] sm:$0xff]
        %v3995 = vld [vmem:[#allocation4 + $0x90] sm:$0xff]
        %v3996 = vld [vmem:[#allocation4 + $0x98] sm:$0xff]
        %v3997 = vld [vmem:[#allocation4 + $0xa0] sm:$0xff]
        %v3998 = vld [vmem:[#allocation4 + $0xa8] sm:$0xff]
        %v3999 = vld [vmem:[#allocation4 + $0xb0] sm:$0xff]
        %v4000 = vld [vmem:[#allocation4 + $0xb8] sm:$0xff]
        %v4001 = vld [vmem:[#allocation4 + $0xc0] sm:$0xff]
        %v4002 = vld [vmem:[#allocation4 + $0xc8] sm:$0xff]
        %v4003 = vld [vmem:[#allocation4 + $0xd0] sm:$0xff]
        %v4004 = vld [vmem:[#allocation4 + $0xd8] sm:$0xff]
        %v4005 = vld [vmem:[#allocation4 + $0xe0] sm:$0xff]
        %v4006 = vld [vmem:[#allocation4 + $0xe8] sm:$0xff]
        %v4007 = vld [vmem:[#allocation4 + $0xf0] sm:$0xff]
        %v4008 = vld [vmem:[#allocation4 + $0xf8] sm:$0xff]
        %v4009 = vld [vmem:[#allocation4 + $0x100] sm:$0xff]
        %v4010 = vld [vmem:[#allocation4 + $0x108] sm:$0xff]
        %v4011 = vld [vmem:[#allocation4 + $0x110] sm:$0xff]
        %v4012 = vld [vmem:[#allocation4 + $0x118] sm:$0xff]
        %v4013 = vld [vmem:[#allocation4 + $0x120] sm:$0xff]
        %v4014 = vld [vmem:[#allocation4 + $0x128] sm:$0xff]
        %v4015 = vld [vmem:[#allocation4 + $0x130] sm:$0xff]
        %v4016 = vld [vmem:[#allocation4 + $0x138] sm:$0xff]
        %v4017 = vld [vmem:[#allocation4 + $0x140] sm:$0xff]
        %v4018 = vld [vmem:[#allocation4 + $0x148] sm:$0xff]
        %v4019 = vld [vmem:[#allocation4 + $0x150] sm:$0xff]
        %v4020 = vld [vmem:[#allocation4 + $0x158] sm:$0xff]
        %v4021 = vld [vmem:[#allocation4 + $0x160] sm:$0xff]
        %v4022 = vld [vmem:[#allocation4 + $0x168] sm:$0xff]
        %v4023 = vld [vmem:[#allocation4 + $0x170] sm:$0xff]
        %v4024 = vld [vmem:[#allocation4 + $0x178] sm:$0xff]
        %v4025 = vld [vmem:[#allocation4 + $0x180] sm:$0xff]
        %v4026 = vld [vmem:[#allocation4 + $0x188] sm:$0xff]
        %v4027 = vld [vmem:[#allocation4 + $0x190] sm:$0xff]
        %v4028 = vld [vmem:[#allocation4 + $0x198] sm:$0xff]
        %v4029 = vld [vmem:[#allocation4 + $0x1a0] sm:$0xff]
        %v4030 = vld [vmem:[#allocation4 + $0x1a8] sm:$0xff]
        %v4031 = vld [vmem:[#allocation4 + $0x1b0] sm:$0xff]
        %v4032 = vld [vmem:[#allocation4 + $0x1b8] sm:$0xff]
        %v4033 = vld [vmem:[#allocation4 + $0x1c0] sm:$0xff]
        %v4034 = vld [vmem:[#allocation4 + $0x1c8] sm:$0xff]
        %v4035 = vld [vmem:[#allocation4 + $0x1d0] sm:$0xff]
        %v4036 = vld [vmem:[#allocation4 + $0x1d8] sm:$0xff]
        %v4037 = vld [vmem:[#allocation4 + $0x1e0] sm:$0xff]
        %v4038 = vld [vmem:[#allocation4 + $0x1e8] sm:$0xff]
        %v4039 = vld [vmem:[#allocation4 + $0x1f0] sm:$0xff]
        %v4040 = vld [vmem:[#allocation4 + $0x1f8] sm:$0xff]
        %4042 = vset.pattern.permute.xlu0 0
        %4043 = vperm.xlu0 %4042, %v2853
        %v4044 = vpop.permute.xlu0 %4043
        %4047 = vset.pattern.permute.xlu0 0
        %4048 = vperm.xlu0 %4047, %v2854
        %v4049 = vpop.permute.xlu0 %4048
        %4052 = vset.pattern.permute.xlu0 0
        %4053 = vperm.xlu0 %4052, %v2855
        %v4054 = vpop.permute.xlu0 %4053
        %4057 = vset.pattern.permute.xlu0 0
        %4058 = vperm.xlu0 %4057, %v2856
        %v4059 = vpop.permute.xlu0 %4058
        %4062 = vset.pattern.permute.xlu0 0
        %4063 = vperm.xlu0 %4062, %v2857
        %v4064 = vpop.permute.xlu0 %4063
        %4067 = vset.pattern.permute.xlu0 0
        %4068 = vperm.xlu0 %4067, %v2858
        %v4069 = vpop.permute.xlu0 %4068
        %4072 = vset.pattern.permute.xlu0 0
        %4073 = vperm.xlu0 %4072, %v2859
        %v4074 = vpop.permute.xlu0 %4073
        %4077 = vset.pattern.permute.xlu0 0
        %4078 = vperm.xlu0 %4077, %v2860
        %v4079 = vpop.permute.xlu0 %4078
        %4082 = vset.pattern.permute.xlu0 0
        %4083 = vperm.xlu0 %4082, %v2861
        %v4084 = vpop.permute.xlu0 %4083
        %4087 = vset.pattern.permute.xlu0 0
        %4088 = vperm.xlu0 %4087, %v2862
        %v4089 = vpop.permute.xlu0 %4088
        %4092 = vset.pattern.permute.xlu0 0
        %4093 = vperm.xlu0 %4092, %v2863
        %v4094 = vpop.permute.xlu0 %4093
        %4097 = vset.pattern.permute.xlu0 0
        %4098 = vperm.xlu0 %4097, %v2864
        %v4099 = vpop.permute.xlu0 %4098
        %4102 = vset.pattern.permute.xlu0 0
        %4103 = vperm.xlu0 %4102, %v2865
        %v4104 = vpop.permute.xlu0 %4103
        %4107 = vset.pattern.permute.xlu0 0
        %4108 = vperm.xlu0 %4107, %v2866
        %v4109 = vpop.permute.xlu0 %4108
        %4112 = vset.pattern.permute.xlu0 0
        %4113 = vperm.xlu0 %4112, %v2867
        %v4114 = vpop.permute.xlu0 %4113
        %4117 = vset.pattern.permute.xlu0 0
        %4118 = vperm.xlu0 %4117, %v2868
        %v4119 = vpop.permute.xlu0 %4118
        %4122 = vset.pattern.permute.xlu0 0
        %4123 = vperm.xlu0 %4122, %v2869
        %v4124 = vpop.permute.xlu0 %4123
        %4127 = vset.pattern.permute.xlu0 0
        %4128 = vperm.xlu0 %4127, %v2870
        %v4129 = vpop.permute.xlu0 %4128
        %4132 = vset.pattern.permute.xlu0 0
        %4133 = vperm.xlu0 %4132, %v2871
        %v4134 = vpop.permute.xlu0 %4133
        %4137 = vset.pattern.permute.xlu0 0
        %4138 = vperm.xlu0 %4137, %v2872
        %v4139 = vpop.permute.xlu0 %4138
        %4142 = vset.pattern.permute.xlu0 0
        %4143 = vperm.xlu0 %4142, %v2873
        %v4144 = vpop.permute.xlu0 %4143
        %4147 = vset.pattern.permute.xlu0 0
        %4148 = vperm.xlu0 %4147, %v2874
        %v4149 = vpop.permute.xlu0 %4148
        %4152 = vset.pattern.permute.xlu0 0
        %4153 = vperm.xlu0 %4152, %v2875
        %v4154 = vpop.permute.xlu0 %4153
        %4157 = vset.pattern.permute.xlu0 0
        %4158 = vperm.xlu0 %4157, %v2876
        %v4159 = vpop.permute.xlu0 %4158
        %4162 = vset.pattern.permute.xlu0 0
        %4163 = vperm.xlu0 %4162, %v2877
        %v4164 = vpop.permute.xlu0 %4163
        %4167 = vset.pattern.permute.xlu0 0
        %4168 = vperm.xlu0 %4167, %v2878
        %v4169 = vpop.permute.xlu0 %4168
        %4172 = vset.pattern.permute.xlu0 0
        %4173 = vperm.xlu0 %4172, %v2879
        %v4174 = vpop.permute.xlu0 %4173
        %4177 = vset.pattern.permute.xlu0 0
        %4178 = vperm.xlu0 %4177, %v2880
        %v4179 = vpop.permute.xlu0 %4178
        %4182 = vset.pattern.permute.xlu0 0
        %4183 = vperm.xlu0 %4182, %v2881
        %v4184 = vpop.permute.xlu0 %4183
        %4187 = vset.pattern.permute.xlu0 0
        %4188 = vperm.xlu0 %4187, %v2882
        %v4189 = vpop.permute.xlu0 %4188
        %4192 = vset.pattern.permute.xlu0 0
        %4193 = vperm.xlu0 %4192, %v2883
        %v4194 = vpop.permute.xlu0 %4193
        %4197 = vset.pattern.permute.xlu0 0
        %4198 = vperm.xlu0 %4197, %v2884
        %v4199 = vpop.permute.xlu0 %4198
        %4202 = vset.pattern.permute.xlu0 0
        %4203 = vperm.xlu0 %4202, %v2885
        %v4204 = vpop.permute.xlu0 %4203
        %4207 = vset.pattern.permute.xlu0 0
        %4208 = vperm.xlu0 %4207, %v2886
        %v4209 = vpop.permute.xlu0 %4208
        %4212 = vset.pattern.permute.xlu0 0
        %4213 = vperm.xlu0 %4212, %v2887
        %v4214 = vpop.permute.xlu0 %4213
        %4217 = vset.pattern.permute.xlu0 0
        %4218 = vperm.xlu0 %4217, %v2888
        %v4219 = vpop.permute.xlu0 %4218
        %4222 = vset.pattern.permute.xlu0 0
        %4223 = vperm.xlu0 %4222, %v2889
        %v4224 = vpop.permute.xlu0 %4223
        %4227 = vset.pattern.permute.xlu0 0
        %4228 = vperm.xlu0 %4227, %v2890
        %v4229 = vpop.permute.xlu0 %4228
        %4232 = vset.pattern.permute.xlu0 0
        %4233 = vperm.xlu0 %4232, %v2891
        %v4234 = vpop.permute.xlu0 %4233
        %4237 = vset.pattern.permute.xlu0 0
        %4238 = vperm.xlu0 %4237, %v2892
        %v4239 = vpop.permute.xlu0 %4238
        %4242 = vset.pattern.permute.xlu0 0
        %4243 = vperm.xlu0 %4242, %v2893
        %v4244 = vpop.permute.xlu0 %4243
        %4247 = vset.pattern.permute.xlu0 0
        %4248 = vperm.xlu0 %4247, %v2894
        %v4249 = vpop.permute.xlu0 %4248
        %4252 = vset.pattern.permute.xlu0 0
        %4253 = vperm.xlu0 %4252, %v2895
        %v4254 = vpop.permute.xlu0 %4253
        %4257 = vset.pattern.permute.xlu0 0
        %4258 = vperm.xlu0 %4257, %v2896
        %v4259 = vpop.permute.xlu0 %4258
        %4262 = vset.pattern.permute.xlu0 0
        %4263 = vperm.xlu0 %4262, %v2897
        %v4264 = vpop.permute.xlu0 %4263
        %4267 = vset.pattern.permute.xlu0 0
        %4268 = vperm.xlu0 %4267, %v2898
        %v4269 = vpop.permute.xlu0 %4268
        %4272 = vset.pattern.permute.xlu0 0
        %4273 = vperm.xlu0 %4272, %v2899
        %v4274 = vpop.permute.xlu0 %4273
        %4277 = vset.pattern.permute.xlu0 0
        %4278 = vperm.xlu0 %4277, %v2900
        %v4279 = vpop.permute.xlu0 %4278
        %4282 = vset.pattern.permute.xlu0 0
        %4283 = vperm.xlu0 %4282, %v2901
        %v4284 = vpop.permute.xlu0 %4283
        %4287 = vset.pattern.permute.xlu0 0
        %4288 = vperm.xlu0 %4287, %v2902
        %v4289 = vpop.permute.xlu0 %4288
        %4292 = vset.pattern.permute.xlu0 0
        %4293 = vperm.xlu0 %4292, %v2903
        %v4294 = vpop.permute.xlu0 %4293
        %4297 = vset.pattern.permute.xlu0 0
        %4298 = vperm.xlu0 %4297, %v2904
        %v4299 = vpop.permute.xlu0 %4298
        %4302 = vset.pattern.permute.xlu0 0
        %4303 = vperm.xlu0 %4302, %v2905
        %v4304 = vpop.permute.xlu0 %4303
        %4307 = vset.pattern.permute.xlu0 0
        %4308 = vperm.xlu0 %4307, %v2906
        %v4309 = vpop.permute.xlu0 %4308
        %4312 = vset.pattern.permute.xlu0 0
        %4313 = vperm.xlu0 %4312, %v2907
        %v4314 = vpop.permute.xlu0 %4313
        %4317 = vset.pattern.permute.xlu0 0
        %4318 = vperm.xlu0 %4317, %v2908
        %v4319 = vpop.permute.xlu0 %4318
        %4322 = vset.pattern.permute.xlu0 0
        %4323 = vperm.xlu0 %4322, %v2909
        %v4324 = vpop.permute.xlu0 %4323
        %4327 = vset.pattern.permute.xlu0 0
        %4328 = vperm.xlu0 %4327, %v2910
        %v4329 = vpop.permute.xlu0 %4328
        %4332 = vset.pattern.permute.xlu0 0
        %4333 = vperm.xlu0 %4332, %v2911
        %v4334 = vpop.permute.xlu0 %4333
        %4337 = vset.pattern.permute.xlu0 0
        %4338 = vperm.xlu0 %4337, %v2912
        %v4339 = vpop.permute.xlu0 %4338
        %4342 = vset.pattern.permute.xlu0 0
        %4343 = vperm.xlu0 %4342, %v2913
        %v4344 = vpop.permute.xlu0 %4343
        %4347 = vset.pattern.permute.xlu0 0
        %4348 = vperm.xlu0 %4347, %v2914
        %v4349 = vpop.permute.xlu0 %4348
        %4352 = vset.pattern.permute.xlu0 0
        %4353 = vperm.xlu0 %4352, %v2915
        %v4354 = vpop.permute.xlu0 %4353
        %4357 = vset.pattern.permute.xlu0 0
        %4358 = vperm.xlu0 %4357, %v2916
        %v4359 = vpop.permute.xlu0 %4358
        %v4361 = vmul.f32 %v4044, %v3977
        %v4362 = vmul.f32 %v4049, %v3978
        %v4363 = vmul.f32 %v4054, %v3979
        %v4364 = vmul.f32 %v4059, %v3980
        %v4365 = vmul.f32 %v4064, %v3981
        %v4366 = vmul.f32 %v4069, %v3982
        %v4367 = vmul.f32 %v4074, %v3983
        %v4368 = vmul.f32 %v4079, %v3984
        %v4369 = vmul.f32 %v4084, %v3985
        %v4370 = vmul.f32 %v4089, %v3986
        %v4371 = vmul.f32 %v4094, %v3987
        %v4372 = vmul.f32 %v4099, %v3988
        %v4373 = vmul.f32 %v4104, %v3989
        %v4374 = vmul.f32 %v4109, %v3990
        %v4375 = vmul.f32 %v4114, %v3991
        %v4376 = vmul.f32 %v4119, %v3992
        %v4377 = vmul.f32 %v4124, %v3993
        %v4378 = vmul.f32 %v4129, %v3994
        %v4379 = vmul.f32 %v4134, %v3995
        %v4380 = vmul.f32 %v4139, %v3996
        %v4381 = vmul.f32 %v4144, %v3997
        %v4382 = vmul.f32 %v4149, %v3998
        %v4383 = vmul.f32 %v4154, %v3999
        %v4384 = vmul.f32 %v4159, %v4000
        %v4385 = vmul.f32 %v4164, %v4001
        %v4386 = vmul.f32 %v4169, %v4002
        %v4387 = vmul.f32 %v4174, %v4003
        %v4388 = vmul.f32 %v4179, %v4004
        %v4389 = vmul.f32 %v4184, %v4005
        %v4390 = vmul.f32 %v4189, %v4006
        %v4391 = vmul.f32 %v4194, %v4007
        %v4392 = vmul.f32 %v4199, %v4008
        %v4393 = vmul.f32 %v4204, %v4009
        %v4394 = vmul.f32 %v4209, %v4010
        %v4395 = vmul.f32 %v4214, %v4011
        %v4396 = vmul.f32 %v4219, %v4012
        %v4397 = vmul.f32 %v4224, %v4013
        %v4398 = vmul.f32 %v4229, %v4014
        %v4399 = vmul.f32 %v4234, %v4015
        %v4400 = vmul.f32 %v4239, %v4016
        %v4401 = vmul.f32 %v4244, %v4017
        %v4402 = vmul.f32 %v4249, %v4018
        %v4403 = vmul.f32 %v4254, %v4019
        %v4404 = vmul.f32 %v4259, %v4020
        %v4405 = vmul.f32 %v4264, %v4021
        %v4406 = vmul.f32 %v4269, %v4022
        %v4407 = vmul.f32 %v4274, %v4023
        %v4408 = vmul.f32 %v4279, %v4024
        %v4409 = vmul.f32 %v4284, %v4025
        %v4410 = vmul.f32 %v4289, %v4026
        %v4411 = vmul.f32 %v4294, %v4027
        %v4412 = vmul.f32 %v4299, %v4028
        %v4413 = vmul.f32 %v4304, %v4029
        %v4414 = vmul.f32 %v4309, %v4030
        %v4415 = vmul.f32 %v4314, %v4031
        %v4416 = vmul.f32 %v4319, %v4032
        %v4417 = vmul.f32 %v4324, %v4033
        %v4418 = vmul.f32 %v4329, %v4034
        %v4419 = vmul.f32 %v4334, %v4035
        %v4420 = vmul.f32 %v4339, %v4036
        %v4421 = vmul.f32 %v4344, %v4037
        %v4422 = vmul.f32 %v4349, %v4038
        %v4423 = vmul.f32 %v4354, %v4039
        %v4424 = vmul.f32 %v4359, %v4040
        %v4425 = vadd.f32 %v4361, %v3480
        %v4426 = vadd.f32 %v4362, %v3483
        %v4427 = vadd.f32 %v4363, %v3488
        %v4428 = vadd.f32 %v4364, %v3491
        %v4429 = vadd.f32 %v4365, %v3496
        %v4430 = vadd.f32 %v4366, %v3499
        %v4431 = vadd.f32 %v4367, %v3504
        %v4432 = vadd.f32 %v4368, %v3507
        %v4433 = vadd.f32 %v4369, %v3512
        %v4434 = vadd.f32 %v4370, %v3515
        %v4435 = vadd.f32 %v4371, %v3520
        %v4436 = vadd.f32 %v4372, %v3523
        %v4437 = vadd.f32 %v4373, %v3528
        %v4438 = vadd.f32 %v4374, %v3531
        %v4439 = vadd.f32 %v4375, %v3536
        %v4440 = vadd.f32 %v4376, %v3539
        %v4441 = vadd.f32 %v4377, %v3625
        %v4442 = vadd.f32 %v4378, %v3628
        %v4443 = vadd.f32 %v4379, %v3633
        %v4444 = vadd.f32 %v4380, %v3636
        %v4445 = vadd.f32 %v4381, %v3641
        %v4446 = vadd.f32 %v4382, %v3644
        %v4447 = vadd.f32 %v4383, %v3649
        %v4448 = vadd.f32 %v4384, %v3652
        %v4449 = vadd.f32 %v4385, %v3657
        %v4450 = vadd.f32 %v4386, %v3660
        %v4451 = vadd.f32 %v4387, %v3665
        %v4452 = vadd.f32 %v4388, %v3668
        %v4453 = vadd.f32 %v4389, %v3673
        %v4454 = vadd.f32 %v4390, %v3676
        %v4455 = vadd.f32 %v4391, %v3681
        %v4456 = vadd.f32 %v4392, %v3684
        %v4457 = vadd.f32 %v4393, %v3770
        %v4458 = vadd.f32 %v4394, %v3773
        %v4459 = vadd.f32 %v4395, %v3778
        %v4460 = vadd.f32 %v4396, %v3781
        %v4461 = vadd.f32 %v4397, %v3786
        %v4462 = vadd.f32 %v4398, %v3789
        %v4463 = vadd.f32 %v4399, %v3794
        %v4464 = vadd.f32 %v4400, %v3797
        %v4465 = vadd.f32 %v4401, %v3802
        %v4466 = vadd.f32 %v4402, %v3805
        %v4467 = vadd.f32 %v4403, %v3810
        %v4468 = vadd.f32 %v4404, %v3813
        %v4469 = vadd.f32 %v4405, %v3818
        %v4470 = vadd.f32 %v4406, %v3821
        %v4471 = vadd.f32 %v4407, %v3826
        %v4472 = vadd.f32 %v4408, %v3829
        %v4473 = vadd.f32 %v4409, %v3915
        %v4474 = vadd.f32 %v4410, %v3918
        %v4475 = vadd.f32 %v4411, %v3923
        %v4476 = vadd.f32 %v4412, %v3926
        %v4477 = vadd.f32 %v4413, %v3931
        %v4478 = vadd.f32 %v4414, %v3934
        %v4479 = vadd.f32 %v4415, %v3939
        %v4480 = vadd.f32 %v4416, %v3942
        %v4481 = vadd.f32 %v4417, %v3947
        %v4482 = vadd.f32 %v4418, %v3950
        %v4483 = vadd.f32 %v4419, %v3955
        %v4484 = vadd.f32 %v4420, %v3958
        %v4485 = vadd.f32 %v4421, %v3963
        %v4486 = vadd.f32 %v4422, %v3966
        %v4487 = vadd.f32 %v4423, %v3971
        %v4488 = vadd.f32 %v4424, %v3974
        %vm4489 = vcmask 269312
        %4490 = vst.msk [vmem:[#allocation4] sm:$0xff] %vm4489, %v4425
        %4491 = vst.msk [vmem:[#allocation4 + $0x8] sm:$0xff] %vm4489, %v4426
        %4492 = vst.msk [vmem:[#allocation4 + $0x10] sm:$0xff] %vm4489, %v4427
        %4493 = vst.msk [vmem:[#allocation4 + $0x18] sm:$0xff] %vm4489, %v4428
        %4494 = vst.msk [vmem:[#allocation4 + $0x20] sm:$0xff] %vm4489, %v4429
        %4495 = vst.msk [vmem:[#allocation4 + $0x28] sm:$0xff] %vm4489, %v4430
        %4496 = vst.msk [vmem:[#allocation4 + $0x30] sm:$0xff] %vm4489, %v4431
        %4497 = vst.msk [vmem:[#allocation4 + $0x38] sm:$0xff] %vm4489, %v4432
        %4498 = vst.msk [vmem:[#allocation4 + $0x40] sm:$0xff] %vm4489, %v4433
        %4499 = vst.msk [vmem:[#allocation4 + $0x48] sm:$0xff] %vm4489, %v4434
        %4500 = vst.msk [vmem:[#allocation4 + $0x50] sm:$0xff] %vm4489, %v4435
        %4501 = vst.msk [vmem:[#allocation4 + $0x58] sm:$0xff] %vm4489, %v4436
        %4502 = vst.msk [vmem:[#allocation4 + $0x60] sm:$0xff] %vm4489, %v4437
        %4503 = vst.msk [vmem:[#allocation4 + $0x68] sm:$0xff] %vm4489, %v4438
        %4504 = vst.msk [vmem:[#allocation4 + $0x70] sm:$0xff] %vm4489, %v4439
        %4505 = vst.msk [vmem:[#allocation4 + $0x78] sm:$0xff] %vm4489, %v4440
        %4506 = vst.msk [vmem:[#allocation4 + $0x80] sm:$0xff] %vm4489, %v4441
        %4507 = vst.msk [vmem:[#allocation4 + $0x88] sm:$0xff] %vm4489, %v4442
        %4508 = vst.msk [vmem:[#allocation4 + $0x90] sm:$0xff] %vm4489, %v4443
        %4509 = vst.msk [vmem:[#allocation4 + $0x98] sm:$0xff] %vm4489, %v4444
        %4510 = vst.msk [vmem:[#allocation4 + $0xa0] sm:$0xff] %vm4489, %v4445
        %4511 = vst.msk [vmem:[#allocation4 + $0xa8] sm:$0xff] %vm4489, %v4446
        %4512 = vst.msk [vmem:[#allocation4 + $0xb0] sm:$0xff] %vm4489, %v4447
        %4513 = vst.msk [vmem:[#allocation4 + $0xb8] sm:$0xff] %vm4489, %v4448
        %4514 = vst.msk [vmem:[#allocation4 + $0xc0] sm:$0xff] %vm4489, %v4449
        %4515 = vst.msk [vmem:[#allocation4 + $0xc8] sm:$0xff] %vm4489, %v4450
        %4516 = vst.msk [vmem:[#allocation4 + $0xd0] sm:$0xff] %vm4489, %v4451
        %4517 = vst.msk [vmem:[#allocation4 + $0xd8] sm:$0xff] %vm4489, %v4452
        %4518 = vst.msk [vmem:[#allocation4 + $0xe0] sm:$0xff] %vm4489, %v4453
        %4519 = vst.msk [vmem:[#allocation4 + $0xe8] sm:$0xff] %vm4489, %v4454
        %4520 = vst.msk [vmem:[#allocation4 + $0xf0] sm:$0xff] %vm4489, %v4455
        %4521 = vst.msk [vmem:[#allocation4 + $0xf8] sm:$0xff] %vm4489, %v4456
        %4522 = vst.msk [vmem:[#allocation4 + $0x100] sm:$0xff] %vm4489, %v4457
        %4523 = vst.msk [vmem:[#allocation4 + $0x108] sm:$0xff] %vm4489, %v4458
        %4524 = vst.msk [vmem:[#allocation4 + $0x110] sm:$0xff] %vm4489, %v4459
        %4525 = vst.msk [vmem:[#allocation4 + $0x118] sm:$0xff] %vm4489, %v4460
        %4526 = vst.msk [vmem:[#allocation4 + $0x120] sm:$0xff] %vm4489, %v4461
        %4527 = vst.msk [vmem:[#allocation4 + $0x128] sm:$0xff] %vm4489, %v4462
        %4528 = vst.msk [vmem:[#allocation4 + $0x130] sm:$0xff] %vm4489, %v4463
        %4529 = vst.msk [vmem:[#allocation4 + $0x138] sm:$0xff] %vm4489, %v4464
        %4530 = vst.msk [vmem:[#allocation4 + $0x140] sm:$0xff] %vm4489, %v4465
        %4531 = vst.msk [vmem:[#allocation4 + $0x148] sm:$0xff] %vm4489, %v4466
        %4532 = vst.msk [vmem:[#allocation4 + $0x150] sm:$0xff] %vm4489, %v4467
        %4533 = vst.msk [vmem:[#allocation4 + $0x158] sm:$0xff] %vm4489, %v4468
        %4534 = vst.msk [vmem:[#allocation4 + $0x160] sm:$0xff] %vm4489, %v4469
        %4535 = vst.msk [vmem:[#allocation4 + $0x168] sm:$0xff] %vm4489, %v4470
        %4536 = vst.msk [vmem:[#allocation4 + $0x170] sm:$0xff] %vm4489, %v4471
        %4537 = vst.msk [vmem:[#allocation4 + $0x178] sm:$0xff] %vm4489, %v4472
        %4538 = vst.msk [vmem:[#allocation4 + $0x180] sm:$0xff] %vm4489, %v4473
        %4539 = vst.msk [vmem:[#allocation4 + $0x188] sm:$0xff] %vm4489, %v4474
        %4540 = vst.msk [vmem:[#allocation4 + $0x190] sm:$0xff] %vm4489, %v4475
        %4541 = vst.msk [vmem:[#allocation4 + $0x198] sm:$0xff] %vm4489, %v4476
        %4542 = vst.msk [vmem:[#allocation4 + $0x1a0] sm:$0xff] %vm4489, %v4477
        %4543 = vst.msk [vmem:[#allocation4 + $0x1a8] sm:$0xff] %vm4489, %v4478
        %4544 = vst.msk [vmem:[#allocation4 + $0x1b0] sm:$0xff] %vm4489, %v4479
        %4545 = vst.msk [vmem:[#allocation4 + $0x1b8] sm:$0xff] %vm4489, %v4480
        %4546 = vst.msk [vmem:[#allocation4 + $0x1c0] sm:$0xff] %vm4489, %v4481
        %4547 = vst.msk [vmem:[#allocation4 + $0x1c8] sm:$0xff] %vm4489, %v4482
        %4548 = vst.msk [vmem:[#allocation4 + $0x1d0] sm:$0xff] %vm4489, %v4483
        %4549 = vst.msk [vmem:[#allocation4 + $0x1d8] sm:$0xff] %vm4489, %v4484
        %4550 = vst.msk [vmem:[#allocation4 + $0x1e0] sm:$0xff] %vm4489, %v4485
        %4551 = vst.msk [vmem:[#allocation4 + $0x1e8] sm:$0xff] %vm4489, %v4486
        %4552 = vst.msk [vmem:[#allocation4 + $0x1f0] sm:$0xff] %vm4489, %v4487
        %4553 = vst.msk [vmem:[#allocation4 + $0x1f8] sm:$0xff] %vm4489, %v4488
        %vm4554 = vcmask 7168
        %4555 = vst.msk [vmem:[#allocation3] sm:$0xff] %vm4554, %v2725
        %4556 = vst.msk [vmem:[#allocation3 + $0x8] sm:$0xff] %vm4554, %v2726
        %4557 = vst.msk [vmem:[#allocation3 + $0x10] sm:$0xff] %vm4554, %v2727
        %4558 = vst.msk [vmem:[#allocation3 + $0x18] sm:$0xff] %vm4554, %v2728
        %4559 = vst.msk [vmem:[#allocation3 + $0x20] sm:$0xff] %vm4554, %v2729
        %4560 = vst.msk [vmem:[#allocation3 + $0x28] sm:$0xff] %vm4554, %v2730
        %4561 = vst.msk [vmem:[#allocation3 + $0x30] sm:$0xff] %vm4554, %v2731
        %4562 = vst.msk [vmem:[#allocation3 + $0x38] sm:$0xff] %vm4554, %v2732
        %4563 = vst.msk [vmem:[#allocation3 + $0x40] sm:$0xff] %vm4554, %v2733
        %4564 = vst.msk [vmem:[#allocation3 + $0x48] sm:$0xff] %vm4554, %v2734
        %4565 = vst.msk [vmem:[#allocation3 + $0x50] sm:$0xff] %vm4554, %v2735
        %4566 = vst.msk [vmem:[#allocation3 + $0x58] sm:$0xff] %vm4554, %v2736
        %4567 = vst.msk [vmem:[#allocation3 + $0x60] sm:$0xff] %vm4554, %v2737
        %4568 = vst.msk [vmem:[#allocation3 + $0x68] sm:$0xff] %vm4554, %v2738
        %4569 = vst.msk [vmem:[#allocation3 + $0x70] sm:$0xff] %vm4554, %v2739
        %4570 = vst.msk [vmem:[#allocation3 + $0x78] sm:$0xff] %vm4554, %v2740
        %4571 = vst.msk [vmem:[#allocation3 + $0x80] sm:$0xff] %vm4554, %v2741
        %4572 = vst.msk [vmem:[#allocation3 + $0x88] sm:$0xff] %vm4554, %v2742
        %4573 = vst.msk [vmem:[#allocation3 + $0x90] sm:$0xff] %vm4554, %v2743
        %4574 = vst.msk [vmem:[#allocation3 + $0x98] sm:$0xff] %vm4554, %v2744
        %4575 = vst.msk [vmem:[#allocation3 + $0xa0] sm:$0xff] %vm4554, %v2745
        %4576 = vst.msk [vmem:[#allocation3 + $0xa8] sm:$0xff] %vm4554, %v2746
        %4577 = vst.msk [vmem:[#allocation3 + $0xb0] sm:$0xff] %vm4554, %v2747
        %4578 = vst.msk [vmem:[#allocation3 + $0xb8] sm:$0xff] %vm4554, %v2748
        %4579 = vst.msk [vmem:[#allocation3 + $0xc0] sm:$0xff] %vm4554, %v2749
        %4580 = vst.msk [vmem:[#allocation3 + $0xc8] sm:$0xff] %vm4554, %v2750
        %4581 = vst.msk [vmem:[#allocation3 + $0xd0] sm:$0xff] %vm4554, %v2751
        %4582 = vst.msk [vmem:[#allocation3 + $0xd8] sm:$0xff] %vm4554, %v2752
        %4583 = vst.msk [vmem:[#allocation3 + $0xe0] sm:$0xff] %vm4554, %v2753
        %4584 = vst.msk [vmem:[#allocation3 + $0xe8] sm:$0xff] %vm4554, %v2754
        %4585 = vst.msk [vmem:[#allocation3 + $0xf0] sm:$0xff] %vm4554, %v2755
        %4586 = vst.msk [vmem:[#allocation3 + $0xf8] sm:$0xff] %vm4554, %v2756
        %4587 = vst.msk [vmem:[#allocation3 + $0x100] sm:$0xff] %vm4554, %v2757
        %4588 = vst.msk [vmem:[#allocation3 + $0x108] sm:$0xff] %vm4554, %v2758
        %4589 = vst.msk [vmem:[#allocation3 + $0x110] sm:$0xff] %vm4554, %v2759
        %4590 = vst.msk [vmem:[#allocation3 + $0x118] sm:$0xff] %vm4554, %v2760
        %4591 = vst.msk [vmem:[#allocation3 + $0x120] sm:$0xff] %vm4554, %v2761
        %4592 = vst.msk [vmem:[#allocation3 + $0x128] sm:$0xff] %vm4554, %v2762
        %4593 = vst.msk [vmem:[#allocation3 + $0x130] sm:$0xff] %vm4554, %v2763
        %4594 = vst.msk [vmem:[#allocation3 + $0x138] sm:$0xff] %vm4554, %v2764
        %4595 = vst.msk [vmem:[#allocation3 + $0x140] sm:$0xff] %vm4554, %v2765
        %4596 = vst.msk [vmem:[#allocation3 + $0x148] sm:$0xff] %vm4554, %v2766
        %4597 = vst.msk [vmem:[#allocation3 + $0x150] sm:$0xff] %vm4554, %v2767
        %4598 = vst.msk [vmem:[#allocation3 + $0x158] sm:$0xff] %vm4554, %v2768
        %4599 = vst.msk [vmem:[#allocation3 + $0x160] sm:$0xff] %vm4554, %v2769
        %4600 = vst.msk [vmem:[#allocation3 + $0x168] sm:$0xff] %vm4554, %v2770
        %4601 = vst.msk [vmem:[#allocation3 + $0x170] sm:$0xff] %vm4554, %v2771
        %4602 = vst.msk [vmem:[#allocation3 + $0x178] sm:$0xff] %vm4554, %v2772
        %4603 = vst.msk [vmem:[#allocation3 + $0x180] sm:$0xff] %vm4554, %v2773
        %4604 = vst.msk [vmem:[#allocation3 + $0x188] sm:$0xff] %vm4554, %v2774
        %4605 = vst.msk [vmem:[#allocation3 + $0x190] sm:$0xff] %vm4554, %v2775
        %4606 = vst.msk [vmem:[#allocation3 + $0x198] sm:$0xff] %vm4554, %v2776
        %4607 = vst.msk [vmem:[#allocation3 + $0x1a0] sm:$0xff] %vm4554, %v2777
        %4608 = vst.msk [vmem:[#allocation3 + $0x1a8] sm:$0xff] %vm4554, %v2778
        %4609 = vst.msk [vmem:[#allocation3 + $0x1b0] sm:$0xff] %vm4554, %v2779
        %4610 = vst.msk [vmem:[#allocation3 + $0x1b8] sm:$0xff] %vm4554, %v2780
        %4611 = vst.msk [vmem:[#allocation3 + $0x1c0] sm:$0xff] %vm4554, %v2781
        %4612 = vst.msk [vmem:[#allocation3 + $0x1c8] sm:$0xff] %vm4554, %v2782
        %4613 = vst.msk [vmem:[#allocation3 + $0x1d0] sm:$0xff] %vm4554, %v2783
        %4614 = vst.msk [vmem:[#allocation3 + $0x1d8] sm:$0xff] %vm4554, %v2784
        %4615 = vst.msk [vmem:[#allocation3 + $0x1e0] sm:$0xff] %vm4554, %v2785
        %4616 = vst.msk [vmem:[#allocation3 + $0x1e8] sm:$0xff] %vm4554, %v2786
        %4617 = vst.msk [vmem:[#allocation3 + $0x1f0] sm:$0xff] %vm4554, %v2787
        %4618 = vst.msk [vmem:[#allocation3 + $0x1f8] sm:$0xff] %vm4554, %v2788
        %p4619 = scmp.eq.s32.totalorder %s25, 1
        // Predicated region
        $region199: #{tpu_custom_call.1} parent=177 // pred_check
          %p4620 = pneg %p4619
        $region200: #{tpu_custom_call.1} parent=177 // pred_check_branch
          %4622 = sbr.rel (%p4620) target = $region202
        $region201: #{tpu_custom_call.1} parent=177 // pred_region
          %v4623 = vld [vmem:[#allocation4] sm:$0xff]
          %v4624 = vld [vmem:[#allocation4 + $0x8] sm:$0xff]
          %v4625 = vld [vmem:[#allocation4 + $0x10] sm:$0xff]
          %v4626 = vld [vmem:[#allocation4 + $0x18] sm:$0xff]
          %v4627 = vld [vmem:[#allocation4 + $0x20] sm:$0xff]
          %v4628 = vld [vmem:[#allocation4 + $0x28] sm:$0xff]
          %v4629 = vld [vmem:[#allocation4 + $0x30] sm:$0xff]
          %v4630 = vld [vmem:[#allocation4 + $0x38] sm:$0xff]
          %v4631 = vld [vmem:[#allocation4 + $0x40] sm:$0xff]
          %v4632 = vld [vmem:[#allocation4 + $0x48] sm:$0xff]
          %v4633 = vld [vmem:[#allocation4 + $0x50] sm:$0xff]
          %v4634 = vld [vmem:[#allocation4 + $0x58] sm:$0xff]
          %v4635 = vld [vmem:[#allocation4 + $0x60] sm:$0xff]
          %v4636 = vld [vmem:[#allocation4 + $0x68] sm:$0xff]
          %v4637 = vld [vmem:[#allocation4 + $0x70] sm:$0xff]
          %v4638 = vld [vmem:[#allocation4 + $0x78] sm:$0xff]
          %v4639 = vld [vmem:[#allocation4 + $0x80] sm:$0xff]
          %v4640 = vld [vmem:[#allocation4 + $0x88] sm:$0xff]
          %v4641 = vld [vmem:[#allocation4 + $0x90] sm:$0xff]
          %v4642 = vld [vmem:[#allocation4 + $0x98] sm:$0xff]
          %v4643 = vld [vmem:[#allocation4 + $0xa0] sm:$0xff]
          %v4644 = vld [vmem:[#allocation4 + $0xa8] sm:$0xff]
          %v4645 = vld [vmem:[#allocation4 + $0xb0] sm:$0xff]
          %v4646 = vld [vmem:[#allocation4 + $0xb8] sm:$0xff]
          %v4647 = vld [vmem:[#allocation4 + $0xc0] sm:$0xff]
          %v4648 = vld [vmem:[#allocation4 + $0xc8] sm:$0xff]
          %v4649 = vld [vmem:[#allocation4 + $0xd0] sm:$0xff]
          %v4650 = vld [vmem:[#allocation4 + $0xd8] sm:$0xff]
          %v4651 = vld [vmem:[#allocation4 + $0xe0] sm:$0xff]
          %v4652 = vld [vmem:[#allocation4 + $0xe8] sm:$0xff]
          %v4653 = vld [vmem:[#allocation4 + $0xf0] sm:$0xff]
          %v4654 = vld [vmem:[#allocation4 + $0xf8] sm:$0xff]
          %v4655 = vld [vmem:[#allocation4 + $0x100] sm:$0xff]
          %v4656 = vld [vmem:[#allocation4 + $0x108] sm:$0xff]
          %v4657 = vld [vmem:[#allocation4 + $0x110] sm:$0xff]
          %v4658 = vld [vmem:[#allocation4 + $0x118] sm:$0xff]
          %v4659 = vld [vmem:[#allocation4 + $0x120] sm:$0xff]
          %v4660 = vld [vmem:[#allocation4 + $0x128] sm:$0xff]
          %v4661 = vld [vmem:[#allocation4 + $0x130] sm:$0xff]
          %v4662 = vld [vmem:[#allocation4 + $0x138] sm:$0xff]
          %v4663 = vld [vmem:[#allocation4 + $0x140] sm:$0xff]
          %v4664 = vld [vmem:[#allocation4 + $0x148] sm:$0xff]
          %v4665 = vld [vmem:[#allocation4 + $0x150] sm:$0xff]
          %v4666 = vld [vmem:[#allocation4 + $0x158] sm:$0xff]
          %v4667 = vld [vmem:[#allocation4 + $0x160] sm:$0xff]
          %v4668 = vld [vmem:[#allocation4 + $0x168] sm:$0xff]
          %v4669 = vld [vmem:[#allocation4 + $0x170] sm:$0xff]
          %v4670 = vld [vmem:[#allocation4 + $0x178] sm:$0xff]
          %v4671 = vld [vmem:[#allocation4 + $0x180] sm:$0xff]
          %v4672 = vld [vmem:[#allocation4 + $0x188] sm:$0xff]
          %v4673 = vld [vmem:[#allocation4 + $0x190] sm:$0xff]
          %v4674 = vld [vmem:[#allocation4 + $0x198] sm:$0xff]
          %v4675 = vld [vmem:[#allocation4 + $0x1a0] sm:$0xff]
          %v4676 = vld [vmem:[#allocation4 + $0x1a8] sm:$0xff]
          %v4677 = vld [vmem:[#allocation4 + $0x1b0] sm:$0xff]
          %v4678 = vld [vmem:[#allocation4 + $0x1b8] sm:$0xff]
          %v4679 = vld [vmem:[#allocation4 + $0x1c0] sm:$0xff]
          %v4680 = vld [vmem:[#allocation4 + $0x1c8] sm:$0xff]
          %v4681 = vld [vmem:[#allocation4 + $0x1d0] sm:$0xff]
          %v4682 = vld [vmem:[#allocation4 + $0x1d8] sm:$0xff]
          %v4683 = vld [vmem:[#allocation4 + $0x1e0] sm:$0xff]
          %v4684 = vld [vmem:[#allocation4 + $0x1e8] sm:$0xff]
          %v4685 = vld [vmem:[#allocation4 + $0x1f0] sm:$0xff]
          %v4686 = vld [vmem:[#allocation4 + $0x1f8] sm:$0xff]
          %v4687 = vrcp.pop %v4623
          %v4688 = vrcp.pop %v4624
          %v4689 = vrcp.pop %v4625
          %v4690 = vrcp.pop %v4626
          %v4691 = vrcp.pop %v4627
          %v4692 = vrcp.pop %v4628
          %v4693 = vrcp.pop %v4629
          %v4694 = vrcp.pop %v4630
          %v4695 = vrcp.pop %v4631
          %v4696 = vrcp.pop %v4632
          %v4697 = vrcp.pop %v4633
          %v4698 = vrcp.pop %v4634
          %v4699 = vrcp.pop %v4635
          %v4700 = vrcp.pop %v4636
          %v4701 = vrcp.pop %v4637
          %v4702 = vrcp.pop %v4638
          %v4703 = vrcp.pop %v4639
          %v4704 = vrcp.pop %v4640
          %v4705 = vrcp.pop %v4641
          %v4706 = vrcp.pop %v4642
          %v4707 = vrcp.pop %v4643
          %v4708 = vrcp.pop %v4644
          %v4709 = vrcp.pop %v4645
          %v4710 = vrcp.pop %v4646
          %v4711 = vrcp.pop %v4647
          %v4712 = vrcp.pop %v4648
          %v4713 = vrcp.pop %v4649
          %v4714 = vrcp.pop %v4650
          %v4715 = vrcp.pop %v4651
          %v4716 = vrcp.pop %v4652
          %v4717 = vrcp.pop %v4653
          %v4718 = vrcp.pop %v4654
          %v4719 = vrcp.pop %v4655
          %v4720 = vrcp.pop %v4656
          %v4721 = vrcp.pop %v4657
          %v4722 = vrcp.pop %v4658
          %v4723 = vrcp.pop %v4659
          %v4724 = vrcp.pop %v4660
          %v4725 = vrcp.pop %v4661
          %v4726 = vrcp.pop %v4662
          %v4727 = vrcp.pop %v4663
          %v4728 = vrcp.pop %v4664
          %v4729 = vrcp.pop %v4665
          %v4730 = vrcp.pop %v4666
          %v4731 = vrcp.pop %v4667
          %v4732 = vrcp.pop %v4668
          %v4733 = vrcp.pop %v4669
          %v4734 = vrcp.pop %v4670
          %v4735 = vrcp.pop %v4671
          %v4736 = vrcp.pop %v4672
          %v4737 = vrcp.pop %v4673
          %v4738 = vrcp.pop %v4674
          %v4739 = vrcp.pop %v4675
          %v4740 = vrcp.pop %v4676
          %v4741 = vrcp.pop %v4677
          %v4742 = vrcp.pop %v4678
          %v4743 = vrcp.pop %v4679
          %v4744 = vrcp.pop %v4680
          %v4745 = vrcp.pop %v4681
          %v4746 = vrcp.pop %v4682
          %v4747 = vrcp.pop %v4683
          %v4748 = vrcp.pop %v4684
          %v4749 = vrcp.pop %v4685
          %v4750 = vrcp.pop %v4686
          %v4751 = vmul.f32 %v4623, %v4687
          %v4752 = vmul.f32 %v4624, %v4688
          %v4753 = vmul.f32 %v4625, %v4689
          %v4754 = vmul.f32 %v4626, %v4690
          %v4755 = vmul.f32 %v4627, %v4691
          %v4756 = vmul.f32 %v4628, %v4692
          %v4757 = vmul.f32 %v4629, %v4693
          %v4758 = vmul.f32 %v4630, %v4694
          %v4759 = vmul.f32 %v4631, %v4695
          %v4760 = vmul.f32 %v4632, %v4696
          %v4761 = vmul.f32 %v4633, %v4697
          %v4762 = vmul.f32 %v4634, %v4698
          %v4763 = vmul.f32 %v4635, %v4699
          %v4764 = vmul.f32 %v4636, %v4700
          %v4765 = vmul.f32 %v4637, %v4701
          %v4766 = vmul.f32 %v4638, %v4702
          %v4767 = vmul.f32 %v4639, %v4703
          %v4768 = vmul.f32 %v4640, %v4704
          %v4769 = vmul.f32 %v4641, %v4705
          %v4770 = vmul.f32 %v4642, %v4706
          %v4771 = vmul.f32 %v4643, %v4707
          %v4772 = vmul.f32 %v4644, %v4708
          %v4773 = vmul.f32 %v4645, %v4709
          %v4774 = vmul.f32 %v4646, %v4710
          %v4775 = vmul.f32 %v4647, %v4711
          %v4776 = vmul.f32 %v4648, %v4712
          %v4777 = vmul.f32 %v4649, %v4713
          %v4778 = vmul.f32 %v4650, %v4714
          %v4779 = vmul.f32 %v4651, %v4715
          %v4780 = vmul.f32 %v4652, %v4716
          %v4781 = vmul.f32 %v4653, %v4717
          %v4782 = vmul.f32 %v4654, %v4718
          %v4783 = vmul.f32 %v4655, %v4719
          %v4784 = vmul.f32 %v4656, %v4720
          %v4785 = vmul.f32 %v4657, %v4721
          %v4786 = vmul.f32 %v4658, %v4722
          %v4787 = vmul.f32 %v4659, %v4723
          %v4788 = vmul.f32 %v4660, %v4724
          %v4789 = vmul.f32 %v4661, %v4725
          %v4790 = vmul.f32 %v4662, %v4726
          %v4791 = vmul.f32 %v4663, %v4727
          %v4792 = vmul.f32 %v4664, %v4728
          %v4793 = vmul.f32 %v4665, %v4729
          %v4794 = vmul.f32 %v4666, %v4730
          %v4795 = vmul.f32 %v4667, %v4731
          %v4796 = vmul.f32 %v4668, %v4732
          %v4797 = vmul.f32 %v4669, %v4733
          %v4798 = vmul.f32 %v4670, %v4734
          %v4799 = vmul.f32 %v4671, %v4735
          %v4800 = vmul.f32 %v4672, %v4736
          %v4801 = vmul.f32 %v4673, %v4737
          %v4802 = vmul.f32 %v4674, %v4738
          %v4803 = vmul.f32 %v4675, %v4739
          %v4804 = vmul.f32 %v4676, %v4740
          %v4805 = vmul.f32 %v4677, %v4741
          %v4806 = vmul.f32 %v4678, %v4742
          %v4807 = vmul.f32 %v4679, %v4743
          %v4808 = vmul.f32 %v4680, %v4744
          %v4809 = vmul.f32 %v4681, %v4745
          %v4810 = vmul.f32 %v4682, %v4746
          %v4811 = vmul.f32 %v4683, %v4747
          %v4812 = vmul.f32 %v4684, %v4748
          %v4813 = vmul.f32 %v4685, %v4749
          %v4814 = vmul.f32 %v4686, %v4750
          %v4815 = vsub.f32 2.0, %v4751
          %v4816 = vsub.f32 2.0, %v4752
          %v4817 = vsub.f32 2.0, %v4753
          %v4818 = vsub.f32 2.0, %v4754
          %v4819 = vsub.f32 2.0, %v4755
          %v4820 = vsub.f32 2.0, %v4756
          %v4821 = vsub.f32 2.0, %v4757
          %v4822 = vsub.f32 2.0, %v4758
          %v4823 = vsub.f32 2.0, %v4759
          %v4824 = vsub.f32 2.0, %v4760
          %v4825 = vsub.f32 2.0, %v4761
          %v4826 = vsub.f32 2.0, %v4762
          %v4827 = vsub.f32 2.0, %v4763
          %v4828 = vsub.f32 2.0, %v4764
          %v4829 = vsub.f32 2.0, %v4765
          %v4830 = vsub.f32 2.0, %v4766
          %v4831 = vsub.f32 2.0, %v4767
          %v4832 = vsub.f32 2.0, %v4768
          %v4833 = vsub.f32 2.0, %v4769
          %v4834 = vsub.f32 2.0, %v4770
          %v4835 = vsub.f32 2.0, %v4771
          %v4836 = vsub.f32 2.0, %v4772
          %v4837 = vsub.f32 2.0, %v4773
          %v4838 = vsub.f32 2.0, %v4774
          %v4839 = vsub.f32 2.0, %v4775
          %v4840 = vsub.f32 2.0, %v4776
          %v4841 = vsub.f32 2.0, %v4777
          %v4842 = vsub.f32 2.0, %v4778
          %v4843 = vsub.f32 2.0, %v4779
          %v4844 = vsub.f32 2.0, %v4780
          %v4845 = vsub.f32 2.0, %v4781
          %v4846 = vsub.f32 2.0, %v4782
          %v4847 = vsub.f32 2.0, %v4783
          %v4848 = vsub.f32 2.0, %v4784
          %v4849 = vsub.f32 2.0, %v4785
          %v4850 = vsub.f32 2.0, %v4786
          %v4851 = vsub.f32 2.0, %v4787
          %v4852 = vsub.f32 2.0, %v4788
          %v4853 = vsub.f32 2.0, %v4789
          %v4854 = vsub.f32 2.0, %v4790
          %v4855 = vsub.f32 2.0, %v4791
          %v4856 = vsub.f32 2.0, %v4792
          %v4857 = vsub.f32 2.0, %v4793
          %v4858 = vsub.f32 2.0, %v4794
          %v4859 = vsub.f32 2.0, %v4795
          %v4860 = vsub.f32 2.0, %v4796
          %v4861 = vsub.f32 2.0, %v4797
          %v4862 = vsub.f32 2.0, %v4798
          %v4863 = vsub.f32 2.0, %v4799
          %v4864 = vsub.f32 2.0, %v4800
          %v4865 = vsub.f32 2.0, %v4801
          %v4866 = vsub.f32 2.0, %v4802
          %v4867 = vsub.f32 2.0, %v4803
          %v4868 = vsub.f32 2.0, %v4804
          %v4869 = vsub.f32 2.0, %v4805
          %v4870 = vsub.f32 2.0, %v4806
          %v4871 = vsub.f32 2.0, %v4807
          %v4872 = vsub.f32 2.0, %v4808
          %v4873 = vsub.f32 2.0, %v4809
          %v4874 = vsub.f32 2.0, %v4810
          %v4875 = vsub.f32 2.0, %v4811
          %v4876 = vsub.f32 2.0, %v4812
          %v4877 = vsub.f32 2.0, %v4813
          %v4878 = vsub.f32 2.0, %v4814
          %v4879 = vmul.f32 %v4687, %v4815
          %v4880 = vmul.f32 %v4688, %v4816
          %v4881 = vmul.f32 %v4689, %v4817
          %v4882 = vmul.f32 %v4690, %v4818
          %v4883 = vmul.f32 %v4691, %v4819
          %v4884 = vmul.f32 %v4692, %v4820
          %v4885 = vmul.f32 %v4693, %v4821
          %v4886 = vmul.f32 %v4694, %v4822
          %v4887 = vmul.f32 %v4695, %v4823
          %v4888 = vmul.f32 %v4696, %v4824
          %v4889 = vmul.f32 %v4697, %v4825
          %v4890 = vmul.f32 %v4698, %v4826
          %v4891 = vmul.f32 %v4699, %v4827
          %v4892 = vmul.f32 %v4700, %v4828
          %v4893 = vmul.f32 %v4701, %v4829
          %v4894 = vmul.f32 %v4702, %v4830
          %v4895 = vmul.f32 %v4703, %v4831
          %v4896 = vmul.f32 %v4704, %v4832
          %v4897 = vmul.f32 %v4705, %v4833
          %v4898 = vmul.f32 %v4706, %v4834
          %v4899 = vmul.f32 %v4707, %v4835
          %v4900 = vmul.f32 %v4708, %v4836
          %v4901 = vmul.f32 %v4709, %v4837
          %v4902 = vmul.f32 %v4710, %v4838
          %v4903 = vmul.f32 %v4711, %v4839
          %v4904 = vmul.f32 %v4712, %v4840
          %v4905 = vmul.f32 %v4713, %v4841
          %v4906 = vmul.f32 %v4714, %v4842
          %v4907 = vmul.f32 %v4715, %v4843
          %v4908 = vmul.f32 %v4716, %v4844
          %v4909 = vmul.f32 %v4717, %v4845
          %v4910 = vmul.f32 %v4718, %v4846
          %v4911 = vmul.f32 %v4719, %v4847
          %v4912 = vmul.f32 %v4720, %v4848
          %v4913 = vmul.f32 %v4721, %v4849
          %v4914 = vmul.f32 %v4722, %v4850
          %v4915 = vmul.f32 %v4723, %v4851
          %v4916 = vmul.f32 %v4724, %v4852
          %v4917 = vmul.f32 %v4725, %v4853
          %v4918 = vmul.f32 %v4726, %v4854
          %v4919 = vmul.f32 %v4727, %v4855
          %v4920 = vmul.f32 %v4728, %v4856
          %v4921 = vmul.f32 %v4729, %v4857
          %v4922 = vmul.f32 %v4730, %v4858
          %v4923 = vmul.f32 %v4731, %v4859
          %v4924 = vmul.f32 %v4732, %v4860
          %v4925 = vmul.f32 %v4733, %v4861
          %v4926 = vmul.f32 %v4734, %v4862
          %v4927 = vmul.f32 %v4735, %v4863
          %v4928 = vmul.f32 %v4736, %v4864
          %v4929 = vmul.f32 %v4737, %v4865
          %v4930 = vmul.f32 %v4738, %v4866
          %v4931 = vmul.f32 %v4739, %v4867
          %v4932 = vmul.f32 %v4740, %v4868
          %v4933 = vmul.f32 %v4741, %v4869
          %v4934 = vmul.f32 %v4742, %v4870
          %v4935 = vmul.f32 %v4743, %v4871
          %v4936 = vmul.f32 %v4744, %v4872
          %v4937 = vmul.f32 %v4745, %v4873
          %v4938 = vmul.f32 %v4746, %v4874
          %v4939 = vmul.f32 %v4747, %v4875
          %v4940 = vmul.f32 %v4748, %v4876
          %v4941 = vmul.f32 %v4749, %v4877
          %v4942 = vmul.f32 %v4750, %v4878
          %4944 = vset.pattern.permute.xlu0 32
          %4945 = vperm.xlu0 %4944, %v4879
          %v4946 = vpop.permute.xlu0 %4945
          %4949 = vset.pattern.permute.xlu0 32
          %4950 = vperm.xlu0 %4949, %v4880
          %v4951 = vpop.permute.xlu0 %4950
          %4954 = vset.pattern.permute.xlu0 32
          %4955 = vperm.xlu0 %4954, %v4881
          %v4956 = vpop.permute.xlu0 %4955
          %4959 = vset.pattern.permute.xlu0 32
          %4960 = vperm.xlu0 %4959, %v4882
          %v4961 = vpop.permute.xlu0 %4960
          %4964 = vset.pattern.permute.xlu0 32
          %4965 = vperm.xlu0 %4964, %v4883
          %v4966 = vpop.permute.xlu0 %4965
          %4969 = vset.pattern.permute.xlu0 32
          %4970 = vperm.xlu0 %4969, %v4884
          %v4971 = vpop.permute.xlu0 %4970
          %4974 = vset.pattern.permute.xlu0 32
          %4975 = vperm.xlu0 %4974, %v4885
          %v4976 = vpop.permute.xlu0 %4975
          %4979 = vset.pattern.permute.xlu0 32
          %4980 = vperm.xlu0 %4979, %v4886
          %v4981 = vpop.permute.xlu0 %4980
          %4984 = vset.pattern.permute.xlu0 32
          %4985 = vperm.xlu0 %4984, %v4887
          %v4986 = vpop.permute.xlu0 %4985
          %4989 = vset.pattern.permute.xlu0 32
          %4990 = vperm.xlu0 %4989, %v4888
          %v4991 = vpop.permute.xlu0 %4990
          %4994 = vset.pattern.permute.xlu0 32
          %4995 = vperm.xlu0 %4994, %v4889
          %v4996 = vpop.permute.xlu0 %4995
          %4999 = vset.pattern.permute.xlu0 32
          %5000 = vperm.xlu0 %4999, %v4890
          %v5001 = vpop.permute.xlu0 %5000
          %5004 = vset.pattern.permute.xlu0 32
          %5005 = vperm.xlu0 %5004, %v4891
          %v5006 = vpop.permute.xlu0 %5005
          %5009 = vset.pattern.permute.xlu0 32
          %5010 = vperm.xlu0 %5009, %v4892
          %v5011 = vpop.permute.xlu0 %5010
          %5014 = vset.pattern.permute.xlu0 32
          %5015 = vperm.xlu0 %5014, %v4893
          %v5016 = vpop.permute.xlu0 %5015
          %5019 = vset.pattern.permute.xlu0 32
          %5020 = vperm.xlu0 %5019, %v4894
          %v5021 = vpop.permute.xlu0 %5020
          %5024 = vset.pattern.permute.xlu0 32
          %5025 = vperm.xlu0 %5024, %v4895
          %v5026 = vpop.permute.xlu0 %5025
          %5029 = vset.pattern.permute.xlu0 32
          %5030 = vperm.xlu0 %5029, %v4896
          %v5031 = vpop.permute.xlu0 %5030
          %5034 = vset.pattern.permute.xlu0 32
          %5035 = vperm.xlu0 %5034, %v4897
          %v5036 = vpop.permute.xlu0 %5035
          %5039 = vset.pattern.permute.xlu0 32
          %5040 = vperm.xlu0 %5039, %v4898
          %v5041 = vpop.permute.xlu0 %5040
          %5044 = vset.pattern.permute.xlu0 32
          %5045 = vperm.xlu0 %5044, %v4899
          %v5046 = vpop.permute.xlu0 %5045
          %5049 = vset.pattern.permute.xlu0 32
          %5050 = vperm.xlu0 %5049, %v4900
          %v5051 = vpop.permute.xlu0 %5050
          %5054 = vset.pattern.permute.xlu0 32
          %5055 = vperm.xlu0 %5054, %v4901
          %v5056 = vpop.permute.xlu0 %5055
          %5059 = vset.pattern.permute.xlu0 32
          %5060 = vperm.xlu0 %5059, %v4902
          %v5061 = vpop.permute.xlu0 %5060
          %5064 = vset.pattern.permute.xlu0 32
          %5065 = vperm.xlu0 %5064, %v4903
          %v5066 = vpop.permute.xlu0 %5065
          %5069 = vset.pattern.permute.xlu0 32
          %5070 = vperm.xlu0 %5069, %v4904
          %v5071 = vpop.permute.xlu0 %5070
          %5074 = vset.pattern.permute.xlu0 32
          %5075 = vperm.xlu0 %5074, %v4905
          %v5076 = vpop.permute.xlu0 %5075
          %5079 = vset.pattern.permute.xlu0 32
          %5080 = vperm.xlu0 %5079, %v4906
          %v5081 = vpop.permute.xlu0 %5080
          %5084 = vset.pattern.permute.xlu0 32
          %5085 = vperm.xlu0 %5084, %v4907
          %v5086 = vpop.permute.xlu0 %5085
          %5089 = vset.pattern.permute.xlu0 32
          %5090 = vperm.xlu0 %5089, %v4908
          %v5091 = vpop.permute.xlu0 %5090
          %5094 = vset.pattern.permute.xlu0 32
          %5095 = vperm.xlu0 %5094, %v4909
          %v5096 = vpop.permute.xlu0 %5095
          %5099 = vset.pattern.permute.xlu0 32
          %5100 = vperm.xlu0 %5099, %v4910
          %v5101 = vpop.permute.xlu0 %5100
          %5104 = vset.pattern.permute.xlu0 32
          %5105 = vperm.xlu0 %5104, %v4911
          %v5106 = vpop.permute.xlu0 %5105
          %5109 = vset.pattern.permute.xlu0 32
          %5110 = vperm.xlu0 %5109, %v4912
          %v5111 = vpop.permute.xlu0 %5110
          %5114 = vset.pattern.permute.xlu0 32
          %5115 = vperm.xlu0 %5114, %v4913
          %v5116 = vpop.permute.xlu0 %5115
          %5119 = vset.pattern.permute.xlu0 32
          %5120 = vperm.xlu0 %5119, %v4914
          %v5121 = vpop.permute.xlu0 %5120
          %5124 = vset.pattern.permute.xlu0 32
          %5125 = vperm.xlu0 %5124, %v4915
          %v5126 = vpop.permute.xlu0 %5125
          %5129 = vset.pattern.permute.xlu0 32
          %5130 = vperm.xlu0 %5129, %v4916
          %v5131 = vpop.permute.xlu0 %5130
          %5134 = vset.pattern.permute.xlu0 32
          %5135 = vperm.xlu0 %5134, %v4917
          %v5136 = vpop.permute.xlu0 %5135
          %5139 = vset.pattern.permute.xlu0 32
          %5140 = vperm.xlu0 %5139, %v4918
          %v5141 = vpop.permute.xlu0 %5140
          %5144 = vset.pattern.permute.xlu0 32
          %5145 = vperm.xlu0 %5144, %v4919
          %v5146 = vpop.permute.xlu0 %5145
          %5149 = vset.pattern.permute.xlu0 32
          %5150 = vperm.xlu0 %5149, %v4920
          %v5151 = vpop.permute.xlu0 %5150
          %5154 = vset.pattern.permute.xlu0 32
          %5155 = vperm.xlu0 %5154, %v4921
          %v5156 = vpop.permute.xlu0 %5155
          %5159 = vset.pattern.permute.xlu0 32
          %5160 = vperm.xlu0 %5159, %v4922
          %v5161 = vpop.permute.xlu0 %5160
          %5164 = vset.pattern.permute.xlu0 32
          %5165 = vperm.xlu0 %5164, %v4923
          %v5166 = vpop.permute.xlu0 %5165
          %5169 = vset.pattern.permute.xlu0 32
          %5170 = vperm.xlu0 %5169, %v4924
          %v5171 = vpop.permute.xlu0 %5170
          %5174 = vset.pattern.permute.xlu0 32
          %5175 = vperm.xlu0 %5174, %v4925
          %v5176 = vpop.permute.xlu0 %5175
          %5179 = vset.pattern.permute.xlu0 32
          %5180 = vperm.xlu0 %5179, %v4926
          %v5181 = vpop.permute.xlu0 %5180
          %5184 = vset.pattern.permute.xlu0 32
          %5185 = vperm.xlu0 %5184, %v4927
          %v5186 = vpop.permute.xlu0 %5185
          %5189 = vset.pattern.permute.xlu0 32
          %5190 = vperm.xlu0 %5189, %v4928
          %v5191 = vpop.permute.xlu0 %5190
          %5194 = vset.pattern.permute.xlu0 32
          %5195 = vperm.xlu0 %5194, %v4929
          %v5196 = vpop.permute.xlu0 %5195
          %5199 = vset.pattern.permute.xlu0 32
          %5200 = vperm.xlu0 %5199, %v4930
          %v5201 = vpop.permute.xlu0 %5200
          %5204 = vset.pattern.permute.xlu0 32
          %5205 = vperm.xlu0 %5204, %v4931
          %v5206 = vpop.permute.xlu0 %5205
          %5209 = vset.pattern.permute.xlu0 32
          %5210 = vperm.xlu0 %5209, %v4932
          %v5211 = vpop.permute.xlu0 %5210
          %5214 = vset.pattern.permute.xlu0 32
          %5215 = vperm.xlu0 %5214, %v4933
          %v5216 = vpop.permute.xlu0 %5215
          %5219 = vset.pattern.permute.xlu0 32
          %5220 = vperm.xlu0 %5219, %v4934
          %v5221 = vpop.permute.xlu0 %5220
          %5224 = vset.pattern.permute.xlu0 32
          %5225 = vperm.xlu0 %5224, %v4935
          %v5226 = vpop.permute.xlu0 %5225
          %5229 = vset.pattern.permute.xlu0 32
          %5230 = vperm.xlu0 %5229, %v4936
          %v5231 = vpop.permute.xlu0 %5230
          %5234 = vset.pattern.permute.xlu0 32
          %5235 = vperm.xlu0 %5234, %v4937
          %v5236 = vpop.permute.xlu0 %5235
          %5239 = vset.pattern.permute.xlu0 32
          %5240 = vperm.xlu0 %5239, %v4938
          %v5241 = vpop.permute.xlu0 %5240
          %5244 = vset.pattern.permute.xlu0 32
          %5245 = vperm.xlu0 %5244, %v4939
          %v5246 = vpop.permute.xlu0 %5245
          %5249 = vset.pattern.permute.xlu0 32
          %5250 = vperm.xlu0 %5249, %v4940
          %v5251 = vpop.permute.xlu0 %5250
          %5254 = vset.pattern.permute.xlu0 32
          %5255 = vperm.xlu0 %5254, %v4941
          %v5256 = vpop.permute.xlu0 %5255
          %5259 = vset.pattern.permute.xlu0 32
          %5260 = vperm.xlu0 %5259, %v4942
          %v5261 = vpop.permute.xlu0 %5260
          %v5263 = vmul.f32 %v4623, %v4946
          %v5264 = vmul.f32 %v4624, %v4951
          %v5265 = vmul.f32 %v4625, %v4956
          %v5266 = vmul.f32 %v4626, %v4961
          %v5267 = vmul.f32 %v4627, %v4966
          %v5268 = vmul.f32 %v4628, %v4971
          %v5269 = vmul.f32 %v4629, %v4976
          %v5270 = vmul.f32 %v4630, %v4981
          %v5271 = vmul.f32 %v4631, %v4986
          %v5272 = vmul.f32 %v4632, %v4991
          %v5273 = vmul.f32 %v4633, %v4996
          %v5274 = vmul.f32 %v4634, %v5001
          %v5275 = vmul.f32 %v4635, %v5006
          %v5276 = vmul.f32 %v4636, %v5011
          %v5277 = vmul.f32 %v4637, %v5016
          %v5278 = vmul.f32 %v4638, %v5021
          %v5279 = vmul.f32 %v4639, %v5026
          %v5280 = vmul.f32 %v4640, %v5031
          %v5281 = vmul.f32 %v4641, %v5036
          %v5282 = vmul.f32 %v4642, %v5041
          %v5283 = vmul.f32 %v4643, %v5046
          %v5284 = vmul.f32 %v4644, %v5051
          %v5285 = vmul.f32 %v4645, %v5056
          %v5286 = vmul.f32 %v4646, %v5061
          %v5287 = vmul.f32 %v4647, %v5066
          %v5288 = vmul.f32 %v4648, %v5071
          %v5289 = vmul.f32 %v4649, %v5076
          %v5290 = vmul.f32 %v4650, %v5081
          %v5291 = vmul.f32 %v4651, %v5086
          %v5292 = vmul.f32 %v4652, %v5091
          %v5293 = vmul.f32 %v4653, %v5096
          %v5294 = vmul.f32 %v4654, %v5101
          %v5295 = vmul.f32 %v4655, %v5106
          %v5296 = vmul.f32 %v4656, %v5111
          %v5297 = vmul.f32 %v4657, %v5116
          %v5298 = vmul.f32 %v4658, %v5121
          %v5299 = vmul.f32 %v4659, %v5126
          %v5300 = vmul.f32 %v4660, %v5131
          %v5301 = vmul.f32 %v4661, %v5136
          %v5302 = vmul.f32 %v4662, %v5141
          %v5303 = vmul.f32 %v4663, %v5146
          %v5304 = vmul.f32 %v4664, %v5151
          %v5305 = vmul.f32 %v4665, %v5156
          %v5306 = vmul.f32 %v4666, %v5161
          %v5307 = vmul.f32 %v4667, %v5166
          %v5308 = vmul.f32 %v4668, %v5171
          %v5309 = vmul.f32 %v4669, %v5176
          %v5310 = vmul.f32 %v4670, %v5181
          %v5311 = vmul.f32 %v4671, %v5186
          %v5312 = vmul.f32 %v4672, %v5191
          %v5313 = vmul.f32 %v4673, %v5196
          %v5314 = vmul.f32 %v4674, %v5201
          %v5315 = vmul.f32 %v4675, %v5206
          %v5316 = vmul.f32 %v4676, %v5211
          %v5317 = vmul.f32 %v4677, %v5216
          %v5318 = vmul.f32 %v4678, %v5221
          %v5319 = vmul.f32 %v4679, %v5226
          %v5320 = vmul.f32 %v4680, %v5231
          %v5321 = vmul.f32 %v4681, %v5236
          %v5322 = vmul.f32 %v4682, %v5241
          %v5323 = vmul.f32 %v4683, %v5246
          %v5324 = vmul.f32 %v4684, %v5251
          %v5325 = vmul.f32 %v4685, %v5256
          %v5326 = vmul.f32 %v4686, %v5261
          %5343 = vrot.lane.b32.xlu0 %v5279, 32
          %v5344 = vpop.permute.xlu0 %5343
          %5345 = vrot.lane.b32.xlu0 %v5280, 32
          %v5346 = vpop.permute.xlu0 %5345
          %5347 = vrot.lane.b32.xlu0 %v5281, 32
          %v5348 = vpop.permute.xlu0 %5347
          %5349 = vrot.lane.b32.xlu0 %v5282, 32
          %v5350 = vpop.permute.xlu0 %5349
          %5351 = vrot.lane.b32.xlu0 %v5283, 32
          %v5352 = vpop.permute.xlu0 %5351
          %5353 = vrot.lane.b32.xlu0 %v5284, 32
          %v5354 = vpop.permute.xlu0 %5353
          %5355 = vrot.lane.b32.xlu0 %v5285, 32
          %v5356 = vpop.permute.xlu0 %5355
          %5357 = vrot.lane.b32.xlu0 %v5286, 32
          %v5358 = vpop.permute.xlu0 %5357
          %5359 = vrot.lane.b32.xlu0 %v5287, 32
          %v5360 = vpop.permute.xlu0 %5359
          %5361 = vrot.lane.b32.xlu0 %v5288, 32
          %v5362 = vpop.permute.xlu0 %5361
          %5363 = vrot.lane.b32.xlu0 %v5289, 32
          %v5364 = vpop.permute.xlu0 %5363
          %5365 = vrot.lane.b32.xlu0 %v5290, 32
          %v5366 = vpop.permute.xlu0 %5365
          %5367 = vrot.lane.b32.xlu0 %v5291, 32
          %v5368 = vpop.permute.xlu0 %5367
          %5369 = vrot.lane.b32.xlu0 %v5292, 32
          %v5370 = vpop.permute.xlu0 %5369
          %5371 = vrot.lane.b32.xlu0 %v5293, 32
          %v5372 = vpop.permute.xlu0 %5371
          %5373 = vrot.lane.b32.xlu0 %v5294, 32
          %v5374 = vpop.permute.xlu0 %5373
          %5407 = vrot.lane.b32.xlu0 %v5295, 64
          %v5408 = vpop.permute.xlu0 %5407
          %5409 = vrot.lane.b32.xlu0 %v5296, 64
          %v5410 = vpop.permute.xlu0 %5409
          %5411 = vrot.lane.b32.xlu0 %v5297, 64
          %v5412 = vpop.permute.xlu0 %5411
          %5413 = vrot.lane.b32.xlu0 %v5298, 64
          %v5414 = vpop.permute.xlu0 %5413
          %5415 = vrot.lane.b32.xlu0 %v5299, 64
          %v5416 = vpop.permute.xlu0 %5415
          %5417 = vrot.lane.b32.xlu0 %v5300, 64
          %v5418 = vpop.permute.xlu0 %5417
          %5419 = vrot.lane.b32.xlu0 %v5301, 64
          %v5420 = vpop.permute.xlu0 %5419
          %5421 = vrot.lane.b32.xlu0 %v5302, 64
          %v5422 = vpop.permute.xlu0 %5421
          %5423 = vrot.lane.b32.xlu0 %v5303, 64
          %v5424 = vpop.permute.xlu0 %5423
          %5425 = vrot.lane.b32.xlu0 %v5304, 64
          %v5426 = vpop.permute.xlu0 %5425
          %5427 = vrot.lane.b32.xlu0 %v5305, 64
          %v5428 = vpop.permute.xlu0 %5427
          %5429 = vrot.lane.b32.xlu0 %v5306, 64
          %v5430 = vpop.permute.xlu0 %5429
          %5431 = vrot.lane.b32.xlu0 %v5307, 64
          %v5432 = vpop.permute.xlu0 %5431
          %5433 = vrot.lane.b32.xlu0 %v5308, 64
          %v5434 = vpop.permute.xlu0 %5433
          %5435 = vrot.lane.b32.xlu0 %v5309, 64
          %v5436 = vpop.permute.xlu0 %5435
          %5437 = vrot.lane.b32.xlu0 %v5310, 64
          %v5438 = vpop.permute.xlu0 %5437
          %5471 = vrot.lane.b32.xlu0 %v5311, 96
          %v5472 = vpop.permute.xlu0 %5471
          %5473 = vrot.lane.b32.xlu0 %v5312, 96
          %v5474 = vpop.permute.xlu0 %5473
          %5475 = vrot.lane.b32.xlu0 %v5313, 96
          %v5476 = vpop.permute.xlu0 %5475
          %5477 = vrot.lane.b32.xlu0 %v5314, 96
          %v5478 = vpop.permute.xlu0 %5477
          %5479 = vrot.lane.b32.xlu0 %v5315, 96
          %v5480 = vpop.permute.xlu0 %5479
          %5481 = vrot.lane.b32.xlu0 %v5316, 96
          %v5482 = vpop.permute.xlu0 %5481
          %5483 = vrot.lane.b32.xlu0 %v5317, 96
          %v5484 = vpop.permute.xlu0 %5483
          %5485 = vrot.lane.b32.xlu0 %v5318, 96
          %v5486 = vpop.permute.xlu0 %5485
          %5487 = vrot.lane.b32.xlu0 %v5319, 96
          %v5488 = vpop.permute.xlu0 %5487
          %5489 = vrot.lane.b32.xlu0 %v5320, 96
          %v5490 = vpop.permute.xlu0 %5489
          %5491 = vrot.lane.b32.xlu0 %v5321, 96
          %v5492 = vpop.permute.xlu0 %5491
          %5493 = vrot.lane.b32.xlu0 %v5322, 96
          %v5494 = vpop.permute.xlu0 %5493
          %5495 = vrot.lane.b32.xlu0 %v5323, 96
          %v5496 = vpop.permute.xlu0 %5495
          %5497 = vrot.lane.b32.xlu0 %v5324, 96
          %v5498 = vpop.permute.xlu0 %5497
          %5499 = vrot.lane.b32.xlu0 %v5325, 96
          %v5500 = vpop.permute.xlu0 %5499
          %5501 = vrot.lane.b32.xlu0 %v5326, 96
          %v5502 = vpop.permute.xlu0 %5501
          %v5519 = vsel %vm1832, %v5263, %v5344
          %v5520 = vsel %vm1832, %v5264, %v5346
          %v5521 = vsel %vm1832, %v5265, %v5348
          %v5522 = vsel %vm1832, %v5266, %v5350
          %v5523 = vsel %vm1832, %v5267, %v5352
          %v5524 = vsel %vm1832, %v5268, %v5354
          %v5525 = vsel %vm1832, %v5269, %v5356
          %v5526 = vsel %vm1832, %v5270, %v5358
          %v5527 = vsel %vm1832, %v5271, %v5360
          %v5528 = vsel %vm1832, %v5272, %v5362
          %v5529 = vsel %vm1832, %v5273, %v5364
          %v5530 = vsel %vm1832, %v5274, %v5366
          %v5531 = vsel %vm1832, %v5275, %v5368
          %v5532 = vsel %vm1832, %v5276, %v5370
          %v5533 = vsel %vm1832, %v5277, %v5372
          %v5534 = vsel %vm1832, %v5278, %v5374
          %vm5535 = vcmask 523264
          %v5536 = vsel %vm5535, %v5519, %v5408
          %v5537 = vsel %vm5535, %v5520, %v5410
          %v5538 = vsel %vm5535, %v5521, %v5412
          %v5539 = vsel %vm5535, %v5522, %v5414
          %v5540 = vsel %vm5535, %v5523, %v5416
          %v5541 = vsel %vm5535, %v5524, %v5418
          %v5542 = vsel %vm5535, %v5525, %v5420
          %v5543 = vsel %vm5535, %v5526, %v5422
          %v5544 = vsel %vm5535, %v5527, %v5424
          %v5545 = vsel %vm5535, %v5528, %v5426
          %v5546 = vsel %vm5535, %v5529, %v5428
          %v5547 = vsel %vm5535, %v5530, %v5430
          %v5548 = vsel %vm5535, %v5531, %v5432
          %v5549 = vsel %vm5535, %v5532, %v5434
          %v5550 = vsel %vm5535, %v5533, %v5436
          %v5551 = vsel %vm5535, %v5534, %v5438
          %vm5552 = vcmask 785408
          %v5553 = vsel %vm5552, %v5536, %v5472
          %v5554 = vsel %vm5552, %v5537, %v5474
          %v5555 = vsel %vm5552, %v5538, %v5476
          %v5556 = vsel %vm5552, %v5539, %v5478
          %v5557 = vsel %vm5552, %v5540, %v5480
          %v5558 = vsel %vm5552, %v5541, %v5482
          %v5559 = vsel %vm5552, %v5542, %v5484
          %v5560 = vsel %vm5552, %v5543, %v5486
          %v5561 = vsel %vm5552, %v5544, %v5488
          %v5562 = vsel %vm5552, %v5545, %v5490
          %v5563 = vsel %vm5552, %v5546, %v5492
          %v5564 = vsel %vm5552, %v5547, %v5494
          %v5565 = vsel %vm5552, %v5548, %v5496
          %v5566 = vsel %vm5552, %v5549, %v5498
          %v5567 = vsel %vm5552, %v5550, %v5500
          %v5568 = vsel %vm5552, %v5551, %v5502
          %5569 = vst [vmem:[%s1266] sm:$0xff] %v5553
          %5570 = vst [vmem:[%s1266 + $0x8] sm:$0xff] %v5554
          %5571 = vst [vmem:[%s1266 + $0x10] sm:$0xff] %v5555
          %5572 = vst [vmem:[%s1266 + $0x18] sm:$0xff] %v5556
          %5573 = vst [vmem:[%s1266 + $0x20] sm:$0xff] %v5557
          %5574 = vst [vmem:[%s1266 + $0x28] sm:$0xff] %v5558
          %5575 = vst [vmem:[%s1266 + $0x30] sm:$0xff] %v5559
          %5576 = vst [vmem:[%s1266 + $0x38] sm:$0xff] %v5560
          %5577 = vst [vmem:[%s1266 + $0x40] sm:$0xff] %v5561
          %5578 = vst [vmem:[%s1266 + $0x48] sm:$0xff] %v5562
          %5579 = vst [vmem:[%s1266 + $0x50] sm:$0xff] %v5563
          %5580 = vst [vmem:[%s1266 + $0x58] sm:$0xff] %v5564
          %5581 = vst [vmem:[%s1266 + $0x60] sm:$0xff] %v5565
          %5582 = vst [vmem:[%s1266 + $0x68] sm:$0xff] %v5566
          %5583 = vst [vmem:[%s1266 + $0x70] sm:$0xff] %v5567
          %5584 = vst [vmem:[%s1266 + $0x78] sm:$0xff] %v5568
        $region202: #{tpu_custom_call.1} parent=177 // pred_fallthru
          _
        %s5585 = sand.u32 %s161, 1
        %s5586 = scalar_lea.sflag [#allocation10], %s5585
        %s5587 = sand.u32 %s161, 1
        %s5588 = smul.addr %s5587, 128
        %s5589 = scalar_lea.vmem [#allocation9], %s5588
        // Predicated region
        $region203: #{tpu_custom_call.1} parent=177 // pred_check
          %p5590 = pneg %p171
        $region204: #{tpu_custom_call.1} parent=177 // pred_check_branch
          %5592 = sbr.rel (%p5590) target = $region206
        $region205: #{tpu_custom_call.1} parent=177 // pred_region
          %s5593 = smul.u32 16, %s24
          %s5595 = ssub.s32 2048, 2048
          %5596 = vsyncadd %s5586, %s5595
          %s5597 = smul.addr %s23, 32
          %s5598 = sadd.s32 %s5593, %s5597
          %s5599 = smul.addr %s5598, 128
          %s5600 = scalar_lea.hbm %s4, %s5599
          %s5601 = sshll.u32 %s5589, 4
          %s5602 = int_to_ptr.vmem [resolvable:$true] %s5601
          %5607 = dma.vmem_to_hbm [thread:$0]  %s5602, 2048, %s5600, %s5586, 128, 128, 8
        $region206: #{tpu_custom_call.1} parent=177 // pred_fallthru
          _
      $region178: #{tpu_custom_call.1} parent=5 // pred_fallthru
        _
      %p5608 = scmp.le.s32.totalorder 2, %s13
      // Predicated region
      $region207: #{tpu_custom_call.1} parent=5 // pred_check
        %p5609 = pneg %p5608
      $region208: #{tpu_custom_call.1} parent=5 // pred_check_branch
        %5611 = sbr.rel (%p5609) target = $region210
      $region209: #{tpu_custom_call.1} parent=5 // pred_region
        %s5612 = ssub.s32 %s13, 2
        // Predicated region
        $region211: #{tpu_custom_call.1} parent=209 // pred_check
          %p5613 = pneg %p177
        $region212: #{tpu_custom_call.1} parent=209 // pred_check_branch
          %5615 = sbr.rel (%p5613) target = $region214
        $region213: #{tpu_custom_call.1} parent=209 // pred_region
          %s5616 = sand.u32 %s162, 1
          %s5617 = scalar_lea.sflag [#allocation10], %s5616
          %s5618 = sand.u32 %s162, 1
          %s5619 = smul.addr %s5618, 128
          %s5620 = scalar_lea.vmem [#allocation9], %s5619
          %5621 = dma.done %s5617, 2048
        $region214: #{tpu_custom_call.1} parent=209 // pred_fallthru
          _
      $region210: #{tpu_custom_call.1} parent=5 // pred_fallthru
        _
    $region6: #{tpu_custom_call.1} parent=1 // loop_footer
      %s17 = sadd.s32 1, %s13
    $region7: #{tpu_custom_call.1} parent=1 // loop_footer_branch
      %12 = sbr.rel target = $region3
    $region8: #{tpu_custom_call.1} parent=1 // loop_exit
      _
    %5622 = vsyncpa [#allocation10], 1
    %s5623 = scalar_lea.sflag [#allocation10], 1
    %5624 = vsyncpa %s5623, 1

</llo_original>
